<compile_context>
chip_gen: v5e
topology: v5e:2x2
jax: 0.10.0
libtpu: 0.0.40
codegen_flags: <defaults>
</compile_context>

<pallas_src>
import jax
import jax.numpy as jnp
import numpy as np
from jax import lax
from jax.experimental import pallas as pl
from jax.experimental.pallas import tpu as pltpu

MXU_DTYPE = jnp.float32     # flip to jnp.bfloat16 on v6e/v7x for ~2x MXU throughput
BN_EPS = 1e-5
NEG_BIG = -3.0e38           # finite "-inf" used for the maxpool halo


# ----------------------------------------------------------------------------
# Weight packing / VMEM sizing helpers (wrapper side).
# ----------------------------------------------------------------------------
def _pack_w9(w_oihw):
    # (Cout, Cin, 3, 3) -> (9*Cin, Cout); K ordered as (dy, dx, cin) to match im2col.
    cout, cin = w_oihw.shape[0], w_oihw.shape[1]
    return jnp.transpose(w_oihw, (2, 3, 1, 0)).reshape(9 * cin, cout).astype(MXU_DTYPE)


def _pad_bytes(shape, elt_bytes=4):
    # VMEM footprint with (8, 128) tiling of the last two dims.
    *lead, s, l = shape
    n = 1
    for d in lead:
        n *= int(d)
    return n * (-(-int(s) // 8) * 8) * (-(-int(l) // 128) * 128) * elt_bytes


def _k2_vmem_per_sample(H, W, Cin, C, Ho, Wo):
    mxu_b = jnp.dtype(MXU_DTYPE).itemsize
    scratch = (_pad_bytes((1, H + 2, W + 2, Cin)) +          # conv-from-x zero halo
               _pad_bytes((1, H + 2, W + 2, C)) +            # BN output + -inf pool halo
               _pad_bytes((1, Ho + 2, Wo + 2, C)) +          # residual conv zero halo
               _pad_bytes((H * W, 9 * Cin), mxu_b) +         # im2col patch (full res)
               _pad_bytes((Ho * Wo, 9 * C), mxu_b))          # im2col patch (half res)
    blocks = 2 * (_pad_bytes((1, H, W, Cin)) + _pad_bytes((1, Ho, Wo, C)))  # dbl-buffered
    return scratch + blocks


def _pick_bt(N, per_sample_bytes, budget_bytes, cap):
    best = 1
    for d in range(1, min(N, cap) + 1):
        if N % d == 0 and d * per_sample_bytes <= budget_bytes:
            best = d
    return best


# ----------------------------------------------------------------------------
# In-kernel helpers.
# ----------------------------------------------------------------------------
def _fill_border(ref, value):
    # Fill only the 1-pixel spatial border of a (Bt, Hp, Wp, C) halo scratch.
    # The interior is fully overwritten by every conv, so this runs once per grid step.
    Bt, Hp, Wp, C = ref.shape
    ref[:, 0:1, :, :] = jnp.full((Bt, 1, Wp, C), value, dtype=ref.dtype)
    ref[:, Hp - 1:Hp, :, :] = jnp.full((Bt, 1, Wp, C), value, dtype=ref.dtype)
    ref[:, :, 0:1, :] = jnp.full((Bt, Hp, 1, C), value, dtype=ref.dtype)
    ref[:, :, Wp - 1:Wp, :] = jnp.full((Bt, Hp, 1, C), value, dtype=ref.dtype)


def _conv3x3_im2col(x, w9_ref, b_ref, xpad_ref, patch_ref):
    # 3x3 / stride-1 / pad-1 conv of a (Bt, Hh, Ww, Cin) f32 value as ONE im2col MXU
    # matmul with M = Bt*Hh*Ww and K = 9*Cin.  xpad_ref's border must already be zero;
    # only the interior is (re)written here.  Returns (Bt*Hh*Ww, Cout) f32.
    Bt, Hh, Ww, Cin = x.shape
    xpad_ref[:, 1:Hh + 1, 1:Ww + 1, :] = x
    for dy in range(3):
        for dx in range(3):
            k0 = (dy * 3 + dx) * Cin
            win = xpad_ref[:, dy:dy + Hh, dx:dx + Ww, :]            # (Bt, Hh, Ww, Cin)
            patch_ref[:, k0:k0 + Cin] = (
                win.reshape(Bt * Hh * Ww, Cin).astype(patch_ref.dtype))
    acc = jnp.dot(patch_ref[...], w9_ref[...], preferred_element_type=jnp.float32)
    return acc + b_ref[...]                                          # (M, Cout) f32


# ----------------------------------------------------------------------------
# K1: conv3x3 + bias, per-batch-tile partial BatchNorm statistics (parallel grid).
# ----------------------------------------------------------------------------
def _conv_stats_kernel(x_ref, w9_ref, b_ref, sum_ref, sq_ref, xpad_ref, patch_ref):
    _fill_border(xpad_ref, 0.0)
    acc = _conv3x3_im2col(x_ref[...].astype(jnp.float32), w9_ref, b_ref,
                          xpad_ref, patch_ref)                       # (Bt*H*W, Cout) f32
    sum_ref[...] = jnp.sum(acc, axis=0).reshape(sum_ref.shape)
    sq_ref[...] = jnp.sum(acc * acc, axis=0).reshape(sq_ref.shape)


def conv_bn_stats(x_nhwc, w9, b2, *, bt, vmem_limit):
    N, H, W, Cin = x_nhwc.shape
    Cout = w9.shape[1]
    T = N // bt
    const2 = lambda t: (0, 0)
    psum, psq = pl.pallas_call(
        _conv_stats_kernel,
        out_shape=(jax.ShapeDtypeStruct((T, 1, Cout), jnp.float32),
                   jax.ShapeDtypeStruct((T, 1, Cout), jnp.float32)),
        grid=(T,),
        in_specs=[
            pl.BlockSpec((bt, H, W, Cin), lambda t: (t, 0, 0, 0)),
            pl.BlockSpec((9 * Cin, Cout), const2),
            pl.BlockSpec((1, Cout), const2),
        ],
        out_specs=(
            pl.BlockSpec((1, 1, Cout), lambda t: (t, 0, 0)),
            pl.BlockSpec((1, 1, Cout), lambda t: (t, 0, 0)),
        ),
        scratch_shapes=[pltpu.VMEM((bt, H + 2, W + 2, Cin), jnp.float32),
                        pltpu.VMEM((bt * H * W, 9 * Cin), MXU_DTYPE)],
        compiler_params=pltpu.CompilerParams(
            dimension_semantics=("parallel",),       # per-tile partials -> v7x megacore
            vmem_limit_bytes=vmem_limit),
    )(x_nhwc, w9, b2)
    return jnp.sum(psum, axis=(0, 1)), jnp.sum(psq, axis=(0, 1))     # (Cout,), (Cout,)


# ----------------------------------------------------------------------------
# K2: conv (recomputed) + BN-apply + MaxPool(3,2,1) + ResidualBlock1 + ResidualBlock2.
# ----------------------------------------------------------------------------
def _fused_kernel(x_ref, w9_ref, b_ref, scale_ref, shift_ref,
                  w11_ref, b11_ref, w12_ref, b12_ref,
                  w21_ref, b21_ref, w22_ref, b22_ref,
                  o_ref,
                  xpad_ref, ypad_ref, rpad_ref, patch0_ref, patch_ref):
    Bt, H, W, Cin = x_ref.shape
    _, Ho, Wo, C = o_ref.shape

    # Halo borders: filled once per grid step (stay constant across all 5 convs / pool).
    _fill_border(xpad_ref, 0.0)
    _fill_border(ypad_ref, NEG_BIG)
    _fill_border(rpad_ref, 0.0)

    # ---- conv3x3 (recomputed, avoids the HBM round trip of y) + BN apply -----
    acc = _conv3x3_im2col(x_ref[...].astype(jnp.float32), w9_ref, b_ref,
                          xpad_ref, patch0_ref)                      # (Bt*H*W, C) f32
    yn = acc * scale_ref[...] + shift_ref[...]
    ypad_ref[:, 1:H + 1, 1:W + 1, :] = yn.reshape(Bt, H, W, C)

    # ---- MaxPool2d(kernel=3, stride=2, padding=1), fused in VMEM --------------
    pooled = None
    for dy in range(3):
        for dx in range(3):
            tap = ypad_ref[:, pl.ds(dy, Ho, 2), pl.ds(dx, Wo, 2), :]
            pooled = tap if pooled is None else jnp.maximum(pooled, tap)
    # pooled: (Bt, Ho, Wo, C) f32

    # ---- ResidualBlock 1: conv2(relu(conv1(relu(x)))) + x ---------------------
    h = _conv3x3_im2col(jnp.maximum(pooled, 0.0), w11_ref, b11_ref, rpad_ref, patch_ref)
    h = jnp.maximum(h, 0.0).reshape(Bt, Ho, Wo, C)
    r = _conv3x3_im2col(h, w12_ref, b12_ref, rpad_ref, patch_ref)
    x1 = r.reshape(Bt, Ho, Wo, C) + pooled

    # ---- ResidualBlock 2 ------------------------------------------------------
    h = _conv3x3_im2col(jnp.maximum(x1, 0.0), w21_ref, b21_ref, rpad_ref, patch_ref)
    h = jnp.maximum(h, 0.0).reshape(Bt, Ho, Wo, C)
    r = _conv3x3_im2col(h, w22_ref, b22_ref, rpad_ref, patch_ref)
    o_ref[...] = (r.reshape(Bt, Ho, Wo, C) + x1).astype(o_ref.dtype)


def bn_pool_res(x_nhwc, w9, b2, scale, shift, res_w9s, res_b2s, *,
                bt, out_dtype, vmem_limit):
    N, H, W, Cin = x_nhwc.shape
    C = w9.shape[1]
    Ho = (H - 1) // 2 + 1
    Wo = (W - 1) // 2 + 1
    T = N // bt
    const2 = lambda t: (0, 0)

    args = [x_nhwc, w9, b2, scale, shift]
    w_specs = []
    for w, b in zip(res_w9s, res_b2s):
        args += [w, b]
        w_specs += [pl.BlockSpec((9 * C, C), const2), pl.BlockSpec((1, C), const2)]

    return pl.pallas_call(
        _fused_kernel,
        out_shape=jax.ShapeDtypeStruct((N, Ho, Wo, C), out_dtype),
        grid=(T,),
        in_specs=[pl.BlockSpec((bt, H, W, Cin), lambda t: (t, 0, 0, 0)),
                  pl.BlockSpec((9 * Cin, C), const2),
                  pl.BlockSpec((1, C), const2),
                  pl.BlockSpec((1, C), const2),
                  pl.BlockSpec((1, C), const2)] + w_specs,
        out_specs=pl.BlockSpec((bt, Ho, Wo, C), lambda t: (t, 0, 0, 0)),
        scratch_shapes=[
            pltpu.VMEM((bt, H + 2, W + 2, Cin), jnp.float32),   # conv-from-x zero halo
            pltpu.VMEM((bt, H + 2, W + 2, C), jnp.float32),     # BN output + -inf halo
            pltpu.VMEM((bt, Ho + 2, Wo + 2, C), jnp.float32),   # residual conv zero halo
            pltpu.VMEM((bt * H * W, 9 * Cin), MXU_DTYPE),       # im2col patch (full res)
            pltpu.VMEM((bt * Ho * Wo, 9 * C), MXU_DTYPE),       # im2col patch (half res)
        ],
        compiler_params=pltpu.CompilerParams(
            dimension_semantics=("parallel",),      # per-sample-tile independent
            vmem_limit_bytes=vmem_limit),
    )(*args)


# ----------------------------------------------------------------------------
# ImpalaBlock forward (NCHW in / NCHW out, matching PyTorch).
# ----------------------------------------------------------------------------
def impala_block_forward(x_nchw, p, *, bt_cap=16, scratch_budget_bytes=20 << 20):
    x = jnp.transpose(x_nchw, (0, 2, 3, 1))        # NCHW -> NHWC (layout plumbing only)
    N, H, W, Cin = x.shape
    Cout = p['conv_w'].shape[0]
    Ho = (H - 1) // 2 + 1
    Wo = (W - 1) // 2 + 1

    per_sample = _k2_vmem_per_sample(H, W, Cin, Cout, Ho, Wo)
    bt = _pick_bt(N, per_sample, scratch_budget_bytes, bt_cap)
    vmem_limit = int(min(48 << 20, max(16 << 20, 2 * bt * per_sample)))

    w9 = _pack_w9(p['conv_w'])
    b2 = p['conv_b'].reshape(1, Cout).astype(jnp.float32)

    # K1: per-tile partial stats, reduced here (tiny per-channel math stays in the wrapper).
    ssum, ssq = conv_bn_stats(x, w9, b2, bt=bt, vmem_limit=vmem_limit)
    count = float(N * H * W)
    mean = ssum / count
    var = jnp.maximum(ssq / count - mean * mean, 0.0)   # clamp guards E[x^2]-E[x]^2 cancellation
    scale_v = p['bn_g'].astype(jnp.float32) * lax.rsqrt(var + BN_EPS)
    shift_v = p['bn_b'].astype(jnp.float32) - mean * scale_v
    scale = scale_v.reshape(1, Cout)
    shift = shift_v.reshape(1, Cout)

    res_w9s = [_pack_w9(p['res1_w1']), _pack_w9(p['res1_w2']),
               _pack_w9(p['res2_w1']), _pack_w9(p['res2_w2'])]
    res_b2s = [p['res1_b1'].reshape(1, Cout).astype(jnp.float32),
               p['res1_b2'].reshape(1, Cout).astype(jnp.float32),
               p['res2_b1'].reshape(1, Cout).astype(jnp.float32),
               p['res2_b2'].reshape(1, Cout).astype(jnp.float32)]

    out = bn_pool_res(x, w9, b2, scale, shift, res_w9s, res_b2s,
                      bt=bt, out_dtype=x.dtype, vmem_limit=vmem_limit)
    # TODO(synk): running_mean/running_var buffer updates (training-mode BN side effect)
    # are not modeled.
    return jnp.transpose(out, (0, 3, 1, 2))        # NHWC -> NCHW


# ----------------------------------------------------------------------------
# Pure-JAX reference (for correctness checking only).
# ----------------------------------------------------------------------------
def impala_block_reference(x, p):
    dn = ('NCHW', 'OIHW', 'NCHW')

    def conv(x, w, b):
        y = jax.lax.conv_general_dilated(x, w, (1, 1), ((1, 1), (1, 1)),
                                         dimension_numbers=dn)
        return y + b.reshape(1, -1, 1, 1)

    x = conv(x, p['conv_w'], p['conv_b'])
    mean = jnp.mean(x, axis=(0, 2, 3), keepdims=True)
    var = jnp.mean((x - mean) ** 2, axis=(0, 2, 3), keepdims=True)
    x = (x - mean) * jax.lax.rsqrt(var + 1e-5) * p['bn_g'].reshape(1, -1, 1, 1) \
        + p['bn_b'].reshape(1, -1, 1, 1)
    x = jax.lax.reduce_window(x, -jnp.inf, jax.lax.max,
                              (1, 1, 3, 3), (1, 1, 2, 2),
                              ((0, 0), (0, 0), (1, 1), (1, 1)))

    def resblock(x, w1, b1, w2, b2):
        o = jax.nn.relu(x)
        o = conv(o, w1, b1)
        o = jax.nn.relu(o)
        o = conv(o, w2, b2)
        return o + x

    x = resblock(x, p['res1_w1'], p['res1_b1'], p['res1_w2'], p['res1_b2'])
    x = resblock(x, p['res2_w1'], p['res2_b1'], p['res2_w2'], p['res2_b2'])
    return x


def init_params(key, in_ch, out_ch):
    ks = jax.random.split(key, 12)

    def w(k, co, ci):
        return 0.1 * jax.random.normal(k, (co, ci, 3, 3), jnp.float32)

    def b(k, co):
        return 0.1 * jax.random.normal(k, (co,), jnp.float32)

    return {
        'conv_w': w(ks[0], out_ch, in_ch), 'conv_b': b(ks[1], out_ch),
        'bn_g': 1.0 + 0.1 * jax.random.normal(ks[2], (out_ch,), jnp.float32),
        'bn_b': 0.1 * jax.random.normal(ks[3], (out_ch,), jnp.float32),
        'res1_w1': w(ks[4], out_ch, out_ch), 'res1_b1': b(ks[5], out_ch),
        'res1_w2': w(ks[6], out_ch, out_ch), 'res1_b2': b(ks[7], out_ch),
        'res2_w1': w(ks[8], out_ch, out_ch), 'res2_b1': b(ks[9], out_ch),
        'res2_w2': w(ks[10], out_ch, out_ch), 'res2_b2': b(ks[11], out_ch),
    }


if __name__ == "__main__":
    key = jax.random.PRNGKey(0)
    kx, kp = jax.random.split(key)
    in_ch, out_ch = 4, 8
    x = jax.random.normal(kx, (2, in_ch, 16, 16), jnp.float32)     # NCHW like PyTorch
    params = init_params(kp, in_ch, out_ch)

    out = jax.block_until_ready(impala_block_forward(x, params))
    ref = jax.block_until_ready(impala_block_reference(x, params))

    assert out.shape == (2, out_ch, 8, 8), out.shape
    np.testing.assert_allclose(np.asarray(out), np.asarray(ref), rtol=1e-3, atol=1e-3)
    print("KERNEL_OK")
</pallas_src>

<mosaic_0001>
module attributes {stable_mosaic.version = 11 : i64} {
  func.func @_conv_stats_kernel(%arg0: i32, %arg1: memref<2x16x16x4xf32, #tpu.memory_space<vmem>>, %arg2: memref<36x8xf32, #tpu.memory_space<vmem>>, %arg3: memref<1x8xf32, #tpu.memory_space<vmem>>, %arg4: memref<1x1x8xf32, #tpu.memory_space<vmem>>, %arg5: memref<1x1x8xf32, #tpu.memory_space<vmem>>, %arg6: memref<2x18x18x4xf32, #tpu.memory_space<vmem>>, %arg7: memref<512x36xf32, #tpu.memory_space<vmem>>) attributes {dimension_semantics = [#tpu.dimension_semantics<parallel>], iteration_bounds = array<i64: 1>, scalar_prefetch = 0 : i64, scratch_operands = 2 : i64, tpu.core_type = #tpu.core_type<tc>, window_params = [{transform_indices = @transform_0, window_bounds = array<i64: 2, 16, 16, 4>}, {pipeline_mode = #tpu.pipeline_mode<synchronous>, transform_indices = @transform_1, window_bounds = array<i64: 36, 8>}, {pipeline_mode = #tpu.pipeline_mode<synchronous>, transform_indices = @transform_2, window_bounds = array<i64: 1, 8>}, {transform_indices = @transform_3, window_bounds = array<i64: 1, 1, 8>}, {transform_indices = @transform_4, window_bounds = array<i64: 1, 1, 8>}]} {
    %cst = arith.constant 0.000000e+00 : f32
    %0 = vector.broadcast %cst : f32 to vector<2x1x18x4xf32>
    %c0 = arith.constant 0 : index
    %c0_0 = arith.constant 0 : index
    %c0_1 = arith.constant 0 : index
    %c0_2 = arith.constant 0 : index
    %1 = vector.load %arg6[%c0, %c0_0, %c0_1, %c0_2] : memref<2x18x18x4xf32, #tpu.memory_space<vmem>>, vector<2x1x18x4xf32>
    tpu.vector_store %arg6[%c0, %c0_0, %c0_1, %c0_2], %0 {strides = array<i32>} : memref<2x18x18x4xf32, #tpu.memory_space<vmem>>, vector<2x1x18x4xf32>,
    %cst_3 = arith.constant 0.000000e+00 : f32
    %2 = vector.broadcast %cst_3 : f32 to vector<2x1x18x4xf32>
    %c0_4 = arith.constant 0 : index
    %c17 = arith.constant 17 : index
    %c0_5 = arith.constant 0 : index
    %c0_6 = arith.constant 0 : index
    %3 = vector.load %arg6[%c0_4, %c17, %c0_5, %c0_6] : memref<2x18x18x4xf32, #tpu.memory_space<vmem>>, vector<2x1x18x4xf32>
    tpu.vector_store %arg6[%c0_4, %c17, %c0_5, %c0_6], %2 {strides = array<i32>} : memref<2x18x18x4xf32, #tpu.memory_space<vmem>>, vector<2x1x18x4xf32>,
    %cst_7 = arith.constant 0.000000e+00 : f32
    %4 = vector.broadcast %cst_7 : f32 to vector<2x18x1x4xf32>
    %c0_8 = arith.constant 0 : index
    %c0_9 = arith.constant 0 : index
    %c0_10 = arith.constant 0 : index
    %c0_11 = arith.constant 0 : index
    %5 = vector.load %arg6[%c0_8, %c0_9, %c0_10, %c0_11] : memref<2x18x18x4xf32, #tpu.memory_space<vmem>>, vector<2x18x1x4xf32>
    tpu.vector_store %arg6[%c0_8, %c0_9, %c0_10, %c0_11], %4 {strides = array<i32>} : memref<2x18x18x4xf32, #tpu.memory_space<vmem>>, vector<2x18x1x4xf32>,
    %cst_12 = arith.constant 0.000000e+00 : f32
    %6 = vector.broadcast %cst_12 : f32 to vector<2x18x1x4xf32>
    %c0_13 = arith.constant 0 : index
    %c0_14 = arith.constant 0 : index
    %c17_15 = arith.constant 17 : index
    %c0_16 = arith.constant 0 : index
    %7 = vector.load %arg6[%c0_13, %c0_14, %c17_15, %c0_16] : memref<2x18x18x4xf32, #tpu.memory_space<vmem>>, vector<2x18x1x4xf32>
    tpu.vector_store %arg6[%c0_13, %c0_14, %c17_15, %c0_16], %6 {strides = array<i32>} : memref<2x18x18x4xf32, #tpu.memory_space<vmem>>, vector<2x18x1x4xf32>,
    %c0_17 = arith.constant 0 : index
    %c0_18 = arith.constant 0 : index
    %c0_19 = arith.constant 0 : index
    %c0_20 = arith.constant 0 : index
    %8 = vector.load %arg1[%c0_17, %c0_18, %c0_19, %c0_20] : memref<2x16x16x4xf32, #tpu.memory_space<vmem>>, vector<2x16x16x4xf32>
    %c0_21 = arith.constant 0 : index
    %c1 = arith.constant 1 : index
    %c1_22 = arith.constant 1 : index
    %c0_23 = arith.constant 0 : index
    %9 = vector.load %arg6[%c0_21, %c1, %c1_22, %c0_23] : memref<2x18x18x4xf32, #tpu.memory_space<vmem>>, vector<2x16x16x4xf32>
    tpu.vector_store %arg6[%c0_21, %c1, %c1_22, %c0_23], %8 {strides = array<i32>} : memref<2x18x18x4xf32, #tpu.memory_space<vmem>>, vector<2x16x16x4xf32>,
    %c0_24 = arith.constant 0 : index
    %c0_25 = arith.constant 0 : index
    %c0_26 = arith.constant 0 : index
    %c0_27 = arith.constant 0 : index
    %10 = vector.load %arg6[%c0_24, %c0_25, %c0_26, %c0_27] : memref<2x18x18x4xf32, #tpu.memory_space<vmem>>, vector<2x16x16x4xf32>
    %11 = vector.shape_cast %10 : vector<2x16x16x4xf32> to vector<512x4xf32>
    %c0_28 = arith.constant 0 : index
    %c0_29 = arith.constant 0 : index
    %12 = vector.load %arg7[%c0_28, %c0_29] : memref<512x36xf32, #tpu.memory_space<vmem>>, vector<512x4xf32>
    tpu.vector_store %arg7[%c0_28, %c0_29], %11 {strides = array<i32>} : memref<512x36xf32, #tpu.memory_space<vmem>>, vector<512x4xf32>,
    %c0_30 = arith.constant 0 : index
    %c0_31 = arith.constant 0 : index
    %c1_32 = arith.constant 1 : index
    %c0_33 = arith.constant 0 : index
    %13 = vector.load %arg6[%c0_30, %c0_31, %c1_32, %c0_33] : memref<2x18x18x4xf32, #tpu.memory_space<vmem>>, vector<2x16x16x4xf32>
    %14 = vector.shape_cast %13 : vector<2x16x16x4xf32> to vector<512x4xf32>
    %c0_34 = arith.constant 0 : index
    %c4 = arith.constant 4 : index
    %15 = vector.load %arg7[%c0_34, %c4] : memref<512x36xf32, #tpu.memory_space<vmem>>, vector<512x4xf32>
    tpu.vector_store %arg7[%c0_34, %c4], %14 {strides = array<i32>} : memref<512x36xf32, #tpu.memory_space<vmem>>, vector<512x4xf32>,
    %c0_35 = arith.constant 0 : index
    %c0_36 = arith.constant 0 : index
    %c2 = arith.constant 2 : index
    %c0_37 = arith.constant 0 : index
    %16 = vector.load %arg6[%c0_35, %c0_36, %c2, %c0_37] : memref<2x18x18x4xf32, #tpu.memory_space<vmem>>, vector<2x16x16x4xf32>
    %17 = vector.shape_cast %16 : vector<2x16x16x4xf32> to vector<512x4xf32>
    %c0_38 = arith.constant 0 : index
    %c8 = arith.constant 8 : index
    %18 = vector.load %arg7[%c0_38, %c8] : memref<512x36xf32, #tpu.memory_space<vmem>>, vector<512x4xf32>
    tpu.vector_store %arg7[%c0_38, %c8], %17 {strides = array<i32>} : memref<512x36xf32, #tpu.memory_space<vmem>>, vector<512x4xf32>,
    %c0_39 = arith.constant 0 : index
    %c1_40 = arith.constant 1 : index
    %c0_41 = arith.constant 0 : index
    %c0_42 = arith.constant 0 : index
    %19 = vector.load %arg6[%c0_39, %c1_40, %c0_41, %c0_42] : memref<2x18x18x4xf32, #tpu.memory_space<vmem>>, vector<2x16x16x4xf32>
    %20 = vector.shape_cast %19 : vector<2x16x16x4xf32> to vector<512x4xf32>
    %c0_43 = arith.constant 0 : index
    %c12 = arith.constant 12 : index
    %21 = vector.load %arg7[%c0_43, %c12] : memref<512x36xf32, #tpu.memory_space<vmem>>, vector<512x4xf32>
    tpu.vector_store %arg7[%c0_43, %c12], %20 {strides = array<i32>} : memref<512x36xf32, #tpu.memory_space<vmem>>, vector<512x4xf32>,
    %c0_44 = arith.constant 0 : index
    %c1_45 = arith.constant 1 : index
    %c1_46 = arith.constant 1 : index
    %c0_47 = arith.constant 0 : index
    %22 = vector.load %arg6[%c0_44, %c1_45, %c1_46, %c0_47] : memref<2x18x18x4xf32, #tpu.memory_space<vmem>>, vector<2x16x16x4xf32>
    %23 = vector.shape_cast %22 : vector<2x16x16x4xf32> to vector<512x4xf32>
    %c0_48 = arith.constant 0 : index
    %c16 = arith.constant 16 : index
    %24 = vector.load %arg7[%c0_48, %c16] : memref<512x36xf32, #tpu.memory_space<vmem>>, vector<512x4xf32>
    tpu.vector_store %arg7[%c0_48, %c16], %23 {strides = array<i32>} : memref<512x36xf32, #tpu.memory_space<vmem>>, vector<512x4xf32>,
    %c0_49 = arith.constant 0 : index
    %c1_50 = arith.constant 1 : index
    %c2_51 = arith.constant 2 : index
    %c0_52 = arith.constant 0 : index
    %25 = vector.load %arg6[%c0_49, %c1_50, %c2_51, %c0_52] : memref<2x18x18x4xf32, #tpu.memory_space<vmem>>, vector<2x16x16x4xf32>
    %26 = vector.shape_cast %25 : vector<2x16x16x4xf32> to vector<512x4xf32>
    %c0_53 = arith.constant 0 : index
    %c20 = arith.constant 20 : index
    %27 = vector.load %arg7[%c0_53, %c20] : memref<512x36xf32, #tpu.memory_space<vmem>>, vector<512x4xf32>
    tpu.vector_store %arg7[%c0_53, %c20], %26 {strides = array<i32>} : memref<512x36xf32, #tpu.memory_space<vmem>>, vector<512x4xf32>,
    %c0_54 = arith.constant 0 : index
    %c2_55 = arith.constant 2 : index
    %c0_56 = arith.constant 0 : index
    %c0_57 = arith.constant 0 : index
    %28 = vector.load %arg6[%c0_54, %c2_55, %c0_56, %c0_57] : memref<2x18x18x4xf32, #tpu.memory_space<vmem>>, vector<2x16x16x4xf32>
    %29 = vector.shape_cast %28 : vector<2x16x16x4xf32> to vector<512x4xf32>
    %c0_58 = arith.constant 0 : index
    %c24 = arith.constant 24 : index
    %30 = vector.load %arg7[%c0_58, %c24] : memref<512x36xf32, #tpu.memory_space<vmem>>, vector<512x4xf32>
    tpu.vector_store %arg7[%c0_58, %c24], %29 {strides = array<i32>} : memref<512x36xf32, #tpu.memory_space<vmem>>, vector<512x4xf32>,
    %c0_59 = arith.constant 0 : index
    %c2_60 = arith.constant 2 : index
    %c1_61 = arith.constant 1 : index
    %c0_62 = arith.constant 0 : index
    %31 = vector.load %arg6[%c0_59, %c2_60, %c1_61, %c0_62] : memref<2x18x18x4xf32, #tpu.memory_space<vmem>>, vector<2x16x16x4xf32>
    %32 = vector.shape_cast %31 : vector<2x16x16x4xf32> to vector<512x4xf32>
    %c0_63 = arith.constant 0 : index
    %c28 = arith.constant 28 : index
    %33 = vector.load %arg7[%c0_63, %c28] : memref<512x36xf32, #tpu.memory_space<vmem>>, vector<512x4xf32>
    tpu.vector_store %arg7[%c0_63, %c28], %32 {strides = array<i32>} : memref<512x36xf32, #tpu.memory_space<vmem>>, vector<512x4xf32>,
    %c0_64 = arith.constant 0 : index
    %c2_65 = arith.constant 2 : index
    %c2_66 = arith.constant 2 : index
    %c0_67 = arith.constant 0 : index
    %34 = vector.load %arg6[%c0_64, %c2_65, %c2_66, %c0_67] : memref<2x18x18x4xf32, #tpu.memory_space<vmem>>, vector<2x16x16x4xf32>
    %35 = vector.shape_cast %34 : vector<2x16x16x4xf32> to vector<512x4xf32>
    %c0_68 = arith.constant 0 : index
    %c32 = arith.constant 32 : index
    %36 = vector.load %arg7[%c0_68, %c32] : memref<512x36xf32, #tpu.memory_space<vmem>>, vector<512x4xf32>
    tpu.vector_store %arg7[%c0_68, %c32], %35 {strides = array<i32>} : memref<512x36xf32, #tpu.memory_space<vmem>>, vector<512x4xf32>,
    %c0_69 = arith.constant 0 : index
    %c0_70 = arith.constant 0 : index
    %37 = vector.load %arg7[%c0_69, %c0_70] : memref<512x36xf32, #tpu.memory_space<vmem>>, vector<512x36xf32>
    %c0_71 = arith.constant 0 : index
    %c0_72 = arith.constant 0 : index
    %38 = vector.load %arg2[%c0_71, %c0_72] : memref<36x8xf32, #tpu.memory_space<vmem>>, vector<36x8xf32>
    %cst_73 = arith.constant dense<0.000000e+00> : vector<512x8xf32>
    %39 = tpu.matmul %37, %38, %cst_73 {dimension_numbers = #tpu.dot_dimension_numbers<[1], [0], [0], [1], [0, 0, 1, 1], [], []>} : vector<512x36xf32>, vector<36x8xf32>, vector<512x8xf32> -> vector<512x8xf32>
    %c0_74 = arith.constant 0 : index
    %c0_75 = arith.constant 0 : index
    %40 = vector.load %arg3[%c0_74, %c0_75] : memref<1x8xf32, #tpu.memory_space<vmem>>, vector<1x8xf32>
    %41 = vector.broadcast %40 : vector<1x8xf32> to vector<512x8xf32>
    %42 = arith.addf %39, %41 : vector<512x8xf32>
    %cst_76 = arith.constant dense<0.000000e+00> : vector<8xf32>
    %43 = vector.multi_reduction <add>, %42, %cst_76 [0] : vector<512x8xf32> to vector<8xf32>
    %44 = vector.shape_cast %43 : vector<8xf32> to vector<1x1x8xf32>
    %c0_77 = arith.constant 0 : index
    %c0_78 = arith.constant 0 : index
    %c0_79 = arith.constant 0 : index
    %45 = vector.load %arg4[%c0_77, %c0_78, %c0_79] : memref<1x1x8xf32, #tpu.memory_space<vmem>>, vector<1x1x8xf32>
    tpu.vector_store %arg4[%c0_77, %c0_78, %c0_79], %44 {strides = array<i32>} : memref<1x1x8xf32, #tpu.memory_space<vmem>>, vector<1x1x8xf32>,
    %46 = arith.mulf %42, %42 : vector<512x8xf32>
    %cst_80 = arith.constant dense<0.000000e+00> : vector<8xf32>
    %47 = vector.multi_reduction <add>, %46, %cst_80 [0] : vector<512x8xf32> to vector<8xf32>
    %48 = vector.shape_cast %47 : vector<8xf32> to vector<1x1x8xf32>
    %c0_81 = arith.constant 0 : index
    %c0_82 = arith.constant 0 : index
    %c0_83 = arith.constant 0 : index
    %49 = vector.load %arg5[%c0_81, %c0_82, %c0_83] : memref<1x1x8xf32, #tpu.memory_space<vmem>>, vector<1x1x8xf32>
    tpu.vector_store %arg5[%c0_81, %c0_82, %c0_83], %48 {strides = array<i32>} : memref<1x1x8xf32, #tpu.memory_space<vmem>>, vector<1x1x8xf32>,
    return
  }
  func.func @transform_0(%arg0: i32) -> (i32, i32, i32, i32) {
    %c0_i32 = arith.constant 0 : i32
    %c0_i32_0 = arith.constant 0 : i32
    %c0_i32_1 = arith.constant 0 : i32
    %c0_i32_2 = arith.constant 0 : i32
    return %arg0, %c0_i32, %c0_i32_0, %c0_i32_1 : i32, i32, i32, i32
  }
  func.func @transform_1(%arg0: i32) -> (i32, i32) {
    %c0_i32 = arith.constant 0 : i32
    %c0_i32_0 = arith.constant 0 : i32
    %c0_i32_1 = arith.constant 0 : i32
    return %c0_i32, %c0_i32_0 : i32, i32
  }
  func.func @transform_2(%arg0: i32) -> (i32, i32) {
    %c0_i32 = arith.constant 0 : i32
    %c0_i32_0 = arith.constant 0 : i32
    %c0_i32_1 = arith.constant 0 : i32
    return %c0_i32, %c0_i32_0 : i32, i32
  }
  func.func @transform_3(%arg0: i32) -> (i32, i32, i32) {
    %c0_i32 = arith.constant 0 : i32
    %c0_i32_0 = arith.constant 0 : i32
    %c0_i32_1 = arith.constant 0 : i32
    return %arg0, %c0_i32, %c0_i32_0 : i32, i32, i32
  }
  func.func @transform_4(%arg0: i32) -> (i32, i32, i32) {
    %c0_i32 = arith.constant 0 : i32
    %c0_i32_0 = arith.constant 0 : i32
    %c0_i32_1 = arith.constant 0 : i32
    return %arg0, %c0_i32, %c0_i32_0 : i32, i32, i32
  }
}

</mosaic_0001>

<llo_original>
// kernel: tpu_custom_call.1
$region0: #{tpu_custom_call.1}
  #allocation0 [shape = 'u32[]', space=smem, size = 0x4, offset = 0x4, fixed_abs, tag = 'smem constant byte address 0x4 - core index']
  #allocation1 [shape = 'u32[72,128]{1,0:T(1,128)}', space=vmem, size = 0x9000, scoped, tag = 'internal scratch']
  #allocation2 [shape = 'f32[2,18,18,4]{3,2,1,0:T(8,128)}', space=vmem, size = 0x6c000, scoped, tag = 'scratch operand']
  #allocation3 [shape = 'f32[512,36]{1,0:T(8,128)}', space=vmem, size = 0x40000, scoped, tag = 'scratch operand']
  %s0 = inlined_call_operand.vmem [shape: f32[2,16,16,4], index: 0, kind: input, shape index: {}]
  %s1 = inlined_call_operand.vmem [shape: f32[36,8], index: 1, kind: input, shape index: {}]
  %s2 = inlined_call_operand.vmem [shape: f32[1,8], index: 2, kind: input, shape index: {}]
  %s3 = inlined_call_operand.hbm [shape: f32[1,1,8], index: 3, kind: output, shape index: {0}]
  %s4 = inlined_call_operand.hbm [shape: f32[1,1,8], index: 4, kind: output, shape index: {1}]
  %5 = xla_tuple %s3, %s4
  %s6 = sld [smem:[#allocation0]]
  $region30: #{tpu_custom_call.1} parent=0
    _
  %s8 = ssub.s32 1, %s6
  %s9 = scalar_select 0, %s8, %s6
  $region1: #{tpu_custom_call.1} parent=0
    #allocation4 [shape = 'u8[512]{0}', space=vmem, size = 0x400, scoped, tag = 'output window, operand 0, single buffered']
    #allocation5 [shape = 's32[1]{0}', space=sflag, size = 0x4, scoped, tag = 'scoped memory for tpu_custom_call.1']
    #allocation6 [shape = 'u8[512]{0}', space=vmem, size = 0x400, scoped, tag = 'output window, operand 1, single buffered']
    #allocation7 [shape = 's32[1]{0}', space=sflag, size = 0x4, scoped, tag = 'scoped memory for tpu_custom_call.1']
    %10 = vsyncpa [#allocation5], 0
    %11 = vsyncpa [#allocation7], 0
    // Predicated region
    $region2: #{tpu_custom_call.1} parent=1 // pred_check
      _
    $region3: #{tpu_custom_call.1} parent=1 // pred_check_branch
      %13 = sbr.rel (0) target = $region5
    $region4: #{tpu_custom_call.1} parent=1 // pred_region
      _
    $region5: #{tpu_custom_call.1} parent=1 // pred_fallthru
      _
    // Predicated region
    $region6: #{tpu_custom_call.1} parent=1 // pred_check
      _
    $region7: #{tpu_custom_call.1} parent=1 // pred_check_branch
      %15 = sbr.rel (0) target = $region9
    $region8: #{tpu_custom_call.1} parent=1 // pred_region
      _
    $region9: #{tpu_custom_call.1} parent=1 // pred_fallthru
      _
    // Predicated region
    $region10: #{tpu_custom_call.1} parent=1 // pred_check
      _
    $region11: #{tpu_custom_call.1} parent=1 // pred_check_branch
      %17 = sbr.rel (0) target = $region13
    $region12: #{tpu_custom_call.1} parent=1 // pred_region
      _
    $region13: #{tpu_custom_call.1} parent=1 // pred_fallthru
      _
    %vm18 = vcmask 31744
    %19 = vst.msk [vmem:[#allocation2] sm:$0xff] %vm18, 0.0
    %20 = vst.msk [vmem:[#allocation2 + $0x8] sm:$0xff] %vm18, 0.0
    %vm21 = vcmask 25600
    %22 = vst.msk [vmem:[#allocation2 + $0x10] sm:$0x3] %vm21, 0.0
    %23 = vst.msk [vmem:[#allocation2 + $0x1b0] sm:$0xff] %vm18, 0.0
    %24 = vst.msk [vmem:[#allocation2 + $0x1b8] sm:$0xff] %vm18, 0.0
    %25 = vst.msk [vmem:[#allocation2 + $0x1c0] sm:$0x3] %vm21, 0.0
    %s26 = scalar_lea.vmem [#allocation2], 408
    %27 = vst.msk [vmem:[%s26] sm:$0xff] %vm18, 0.0
    %28 = vst.msk [vmem:[%s26 + $0x8] sm:$0xff] %vm18, 0.0
    %29 = vst.msk [vmem:[%s26 + $0x10] sm:$0x3] %vm21, 0.0
    %30 = vst.msk [vmem:[%s26 + $0x1b0] sm:$0xff] %vm18, 0.0
    %31 = vst.msk [vmem:[%s26 + $0x1b8] sm:$0xff] %vm18, 0.0
    %32 = vst.msk [vmem:[%s26 + $0x1c0] sm:$0x3] %vm21, 0.0
    %vm33 = vcmask 24576
    %34 = vst.msk [vmem:[#allocation2] sm:$0x1] %vm33, 0.0
    %35 = vst.msk [vmem:[#allocation2 + $0x18] sm:$0x1] %vm33, 0.0
    %36 = vst.msk [vmem:[#allocation2 + $0x30] sm:$0x1] %vm33, 0.0
    %37 = vst.msk [vmem:[#allocation2 + $0x48] sm:$0x1] %vm33, 0.0
    %38 = vst.msk [vmem:[#allocation2 + $0x60] sm:$0x1] %vm33, 0.0
    %39 = vst.msk [vmem:[#allocation2 + $0x78] sm:$0x1] %vm33, 0.0
    %40 = vst.msk [vmem:[#allocation2 + $0x90] sm:$0x1] %vm33, 0.0
    %41 = vst.msk [vmem:[#allocation2 + $0xa8] sm:$0x1] %vm33, 0.0
    %42 = vst.msk [vmem:[#allocation2 + $0xc0] sm:$0x1] %vm33, 0.0
    %43 = vst.msk [vmem:[#allocation2 + $0xd8] sm:$0x1] %vm33, 0.0
    %44 = vst.msk [vmem:[#allocation2 + $0xf0] sm:$0x1] %vm33, 0.0
    %45 = vst.msk [vmem:[#allocation2 + $0x108] sm:$0x1] %vm33, 0.0
    %46 = vst.msk [vmem:[#allocation2 + $0x120] sm:$0x1] %vm33, 0.0
    %47 = vst.msk [vmem:[#allocation2 + $0x138] sm:$0x1] %vm33, 0.0
    %48 = vst.msk [vmem:[#allocation2 + $0x150] sm:$0x1] %vm33, 0.0
    %49 = vst.msk [vmem:[#allocation2 + $0x168] sm:$0x1] %vm33, 0.0
    %50 = vst.msk [vmem:[#allocation2 + $0x180] sm:$0x1] %vm33, 0.0
    %51 = vst.msk [vmem:[#allocation2 + $0x198] sm:$0x1] %vm33, 0.0
    %52 = vst.msk [vmem:[#allocation2 + $0x1b0] sm:$0x1] %vm33, 0.0
    %53 = vst.msk [vmem:[#allocation2 + $0x1c8] sm:$0x1] %vm33, 0.0
    %54 = vst.msk [vmem:[#allocation2 + $0x1e0] sm:$0x1] %vm33, 0.0
    %55 = vst.msk [vmem:[#allocation2 + $0x1f8] sm:$0x1] %vm33, 0.0
    %56 = vst.msk [vmem:[#allocation2 + $0x210] sm:$0x1] %vm33, 0.0
    %57 = vst.msk [vmem:[#allocation2 + $0x228] sm:$0x1] %vm33, 0.0
    %58 = vst.msk [vmem:[#allocation2 + $0x240] sm:$0x1] %vm33, 0.0
    %59 = vst.msk [vmem:[#allocation2 + $0x258] sm:$0x1] %vm33, 0.0
    %60 = vst.msk [vmem:[#allocation2 + $0x270] sm:$0x1] %vm33, 0.0
    %61 = vst.msk [vmem:[#allocation2 + $0x288] sm:$0x1] %vm33, 0.0
    %62 = vst.msk [vmem:[#allocation2 + $0x2a0] sm:$0x1] %vm33, 0.0
    %63 = vst.msk [vmem:[#allocation2 + $0x2b8] sm:$0x1] %vm33, 0.0
    %64 = vst.msk [vmem:[#allocation2 + $0x2d0] sm:$0x1] %vm33, 0.0
    %65 = vst.msk [vmem:[#allocation2 + $0x2e8] sm:$0x1] %vm33, 0.0
    %66 = vst.msk [vmem:[#allocation2 + $0x300] sm:$0x1] %vm33, 0.0
    %67 = vst.msk [vmem:[#allocation2 + $0x318] sm:$0x1] %vm33, 0.0
    %68 = vst.msk [vmem:[#allocation2 + $0x330] sm:$0x1] %vm33, 0.0
    %69 = vst.msk [vmem:[#allocation2 + $0x348] sm:$0x1] %vm33, 0.0
    %70 = vst.msk [vmem:[#allocation2 + $0x11] sm:$0x1] %vm33, 0.0
    %71 = vst.msk [vmem:[#allocation2 + $0x29] sm:$0x1] %vm33, 0.0
    %72 = vst.msk [vmem:[#allocation2 + $0x41] sm:$0x1] %vm33, 0.0
    %73 = vst.msk [vmem:[#allocation2 + $0x59] sm:$0x1] %vm33, 0.0
    %74 = vst.msk [vmem:[#allocation2 + $0x71] sm:$0x1] %vm33, 0.0
    %75 = vst.msk [vmem:[#allocation2 + $0x89] sm:$0x1] %vm33, 0.0
    %76 = vst.msk [vmem:[#allocation2 + $0xa1] sm:$0x1] %vm33, 0.0
    %77 = vst.msk [vmem:[#allocation2 + $0xb9] sm:$0x1] %vm33, 0.0
    %78 = vst.msk [vmem:[#allocation2 + $0xd1] sm:$0x1] %vm33, 0.0
    %79 = vst.msk [vmem:[#allocation2 + $0xe9] sm:$0x1] %vm33, 0.0
    %80 = vst.msk [vmem:[#allocation2 + $0x101] sm:$0x1] %vm33, 0.0
    %81 = vst.msk [vmem:[#allocation2 + $0x119] sm:$0x1] %vm33, 0.0
    %82 = vst.msk [vmem:[#allocation2 + $0x131] sm:$0x1] %vm33, 0.0
    %83 = vst.msk [vmem:[#allocation2 + $0x149] sm:$0x1] %vm33, 0.0
    %84 = vst.msk [vmem:[#allocation2 + $0x161] sm:$0x1] %vm33, 0.0
    %85 = vst.msk [vmem:[#allocation2 + $0x179] sm:$0x1] %vm33, 0.0
    %86 = vst.msk [vmem:[#allocation2 + $0x191] sm:$0x1] %vm33, 0.0
    %87 = vst.msk [vmem:[#allocation2 + $0x1a9] sm:$0x1] %vm33, 0.0
    %88 = vst.msk [vmem:[#allocation2 + $0x1c1] sm:$0x1] %vm33, 0.0
    %89 = vst.msk [vmem:[#allocation2 + $0x1d9] sm:$0x1] %vm33, 0.0
    %90 = vst.msk [vmem:[#allocation2 + $0x1f1] sm:$0x1] %vm33, 0.0
    %91 = vst.msk [vmem:[#allocation2 + $0x209] sm:$0x1] %vm33, 0.0
    %92 = vst.msk [vmem:[#allocation2 + $0x221] sm:$0x1] %vm33, 0.0
    %93 = vst.msk [vmem:[#allocation2 + $0x239] sm:$0x1] %vm33, 0.0
    %94 = vst.msk [vmem:[#allocation2 + $0x251] sm:$0x1] %vm33, 0.0
    %95 = vst.msk [vmem:[#allocation2 + $0x269] sm:$0x1] %vm33, 0.0
    %96 = vst.msk [vmem:[#allocation2 + $0x281] sm:$0x1] %vm33, 0.0
    %97 = vst.msk [vmem:[#allocation2 + $0x299] sm:$0x1] %vm33, 0.0
    %98 = vst.msk [vmem:[#allocation2 + $0x2b1] sm:$0x1] %vm33, 0.0
    %99 = vst.msk [vmem:[#allocation2 + $0x2c9] sm:$0x1] %vm33, 0.0
    %100 = vst.msk [vmem:[#allocation2 + $0x2e1] sm:$0x1] %vm33, 0.0
    %101 = vst.msk [vmem:[#allocation2 + $0x2f9] sm:$0x1] %vm33, 0.0
    %102 = vst.msk [vmem:[#allocation2 + $0x311] sm:$0x1] %vm33, 0.0
    %103 = vst.msk [vmem:[#allocation2 + $0x329] sm:$0x1] %vm33, 0.0
    %104 = vst.msk [vmem:[#allocation2 + $0x341] sm:$0x1] %vm33, 0.0
    %105 = vst.msk [vmem:[#allocation2 + $0x359] sm:$0x1] %vm33, 0.0
    %v106 = vld [vmem:[%s0] sm:$0xff]
    %v107 = vld [vmem:[%s0 + $0x8] sm:$0xff]
    %v108 = vld [vmem:[%s0 + $0x10] sm:$0xff]
    %v109 = vld [vmem:[%s0 + $0x18] sm:$0xff]
    %v110 = vld [vmem:[%s0 + $0x20] sm:$0xff]
    %v111 = vld [vmem:[%s0 + $0x28] sm:$0xff]
    %v112 = vld [vmem:[%s0 + $0x30] sm:$0xff]
    %v113 = vld [vmem:[%s0 + $0x38] sm:$0xff]
    %v114 = vld [vmem:[%s0 + $0x40] sm:$0xff]
    %v115 = vld [vmem:[%s0 + $0x48] sm:$0xff]
    %v116 = vld [vmem:[%s0 + $0x50] sm:$0xff]
    %v117 = vld [vmem:[%s0 + $0x58] sm:$0xff]
    %v118 = vld [vmem:[%s0 + $0x60] sm:$0xff]
    %v119 = vld [vmem:[%s0 + $0x68] sm:$0xff]
    %v120 = vld [vmem:[%s0 + $0x70] sm:$0xff]
    %v121 = vld [vmem:[%s0 + $0x78] sm:$0xff]
    %v122 = vld [vmem:[%s0 + $0x80] sm:$0xff]
    %v123 = vld [vmem:[%s0 + $0x88] sm:$0xff]
    %v124 = vld [vmem:[%s0 + $0x90] sm:$0xff]
    %v125 = vld [vmem:[%s0 + $0x98] sm:$0xff]
    %v126 = vld [vmem:[%s0 + $0xa0] sm:$0xff]
    %v127 = vld [vmem:[%s0 + $0xa8] sm:$0xff]
    %v128 = vld [vmem:[%s0 + $0xb0] sm:$0xff]
    %v129 = vld [vmem:[%s0 + $0xb8] sm:$0xff]
    %v130 = vld [vmem:[%s0 + $0xc0] sm:$0xff]
    %v131 = vld [vmem:[%s0 + $0xc8] sm:$0xff]
    %v132 = vld [vmem:[%s0 + $0xd0] sm:$0xff]
    %v133 = vld [vmem:[%s0 + $0xd8] sm:$0xff]
    %v134 = vld [vmem:[%s0 + $0xe0] sm:$0xff]
    %v135 = vld [vmem:[%s0 + $0xe8] sm:$0xff]
    %v136 = vld [vmem:[%s0 + $0xf0] sm:$0xff]
    %v137 = vld [vmem:[%s0 + $0xf8] sm:$0xff]
    %v138 = vld [vmem:[%s0 + $0x100] sm:$0xff]
    %v139 = vld [vmem:[%s0 + $0x108] sm:$0xff]
    %v140 = vld [vmem:[%s0 + $0x110] sm:$0xff]
    %v141 = vld [vmem:[%s0 + $0x118] sm:$0xff]
    %v142 = vld [vmem:[%s0 + $0x120] sm:$0xff]
    %v143 = vld [vmem:[%s0 + $0x128] sm:$0xff]
    %v144 = vld [vmem:[%s0 + $0x130] sm:$0xff]
    %v145 = vld [vmem:[%s0 + $0x138] sm:$0xff]
    %v146 = vld [vmem:[%s0 + $0x140] sm:$0xff]
    %v147 = vld [vmem:[%s0 + $0x148] sm:$0xff]
    %v148 = vld [vmem:[%s0 + $0x150] sm:$0xff]
    %v149 = vld [vmem:[%s0 + $0x158] sm:$0xff]
    %v150 = vld [vmem:[%s0 + $0x160] sm:$0xff]
    %v151 = vld [vmem:[%s0 + $0x168] sm:$0xff]
    %v152 = vld [vmem:[%s0 + $0x170] sm:$0xff]
    %v153 = vld [vmem:[%s0 + $0x178] sm:$0xff]
    %v154 = vld [vmem:[%s0 + $0x180] sm:$0xff]
    %v155 = vld [vmem:[%s0 + $0x188] sm:$0xff]
    %v156 = vld [vmem:[%s0 + $0x190] sm:$0xff]
    %v157 = vld [vmem:[%s0 + $0x198] sm:$0xff]
    %v158 = vld [vmem:[%s0 + $0x1a0] sm:$0xff]
    %v159 = vld [vmem:[%s0 + $0x1a8] sm:$0xff]
    %v160 = vld [vmem:[%s0 + $0x1b0] sm:$0xff]
    %v161 = vld [vmem:[%s0 + $0x1b8] sm:$0xff]
    %v162 = vld [vmem:[%s0 + $0x1c0] sm:$0xff]
    %v163 = vld [vmem:[%s0 + $0x1c8] sm:$0xff]
    %v164 = vld [vmem:[%s0 + $0x1d0] sm:$0xff]
    %v165 = vld [vmem:[%s0 + $0x1d8] sm:$0xff]
    %v166 = vld [vmem:[%s0 + $0x1e0] sm:$0xff]
    %v167 = vld [vmem:[%s0 + $0x1e8] sm:$0xff]
    %v168 = vld [vmem:[%s0 + $0x1f0] sm:$0xff]
    %v169 = vld [vmem:[%s0 + $0x1f8] sm:$0xff]
    %s170 = scalar_lea.vmem [#allocation2], 24
    %171 = vst.msk [vmem:[%s170 + $0x1] sm:$0xff] %vm18, %v106
    %172 = vst.msk [vmem:[%s170 + $0x9] sm:$0xff] %vm18, %v107
    %173 = vst.msk [vmem:[%s170 + $0x19] sm:$0xff] %vm18, %v108
    %174 = vst.msk [vmem:[%s170 + $0x21] sm:$0xff] %vm18, %v109
    %175 = vst.msk [vmem:[%s170 + $0x31] sm:$0xff] %vm18, %v110
    %176 = vst.msk [vmem:[%s170 + $0x39] sm:$0xff] %vm18, %v111
    %177 = vst.msk [vmem:[%s170 + $0x49] sm:$0xff] %vm18, %v112
    %178 = vst.msk [vmem:[%s170 + $0x51] sm:$0xff] %vm18, %v113
    %179 = vst.msk [vmem:[%s170 + $0x61] sm:$0xff] %vm18, %v114
    %180 = vst.msk [vmem:[%s170 + $0x69] sm:$0xff] %vm18, %v115
    %181 = vst.msk [vmem:[%s170 + $0x79] sm:$0xff] %vm18, %v116
    %182 = vst.msk [vmem:[%s170 + $0x81] sm:$0xff] %vm18, %v117
    %183 = vst.msk [vmem:[%s170 + $0x91] sm:$0xff] %vm18, %v118
    %184 = vst.msk [vmem:[%s170 + $0x99] sm:$0xff] %vm18, %v119
    %185 = vst.msk [vmem:[%s170 + $0xa9] sm:$0xff] %vm18, %v120
    %186 = vst.msk [vmem:[%s170 + $0xb1] sm:$0xff] %vm18, %v121
    %187 = vst.msk [vmem:[%s170 + $0xc1] sm:$0xff] %vm18, %v122
    %188 = vst.msk [vmem:[%s170 + $0xc9] sm:$0xff] %vm18, %v123
    %189 = vst.msk [vmem:[%s170 + $0xd9] sm:$0xff] %vm18, %v124
    %190 = vst.msk [vmem:[%s170 + $0xe1] sm:$0xff] %vm18, %v125
    %191 = vst.msk [vmem:[%s170 + $0xf1] sm:$0xff] %vm18, %v126
    %192 = vst.msk [vmem:[%s170 + $0xf9] sm:$0xff] %vm18, %v127
    %193 = vst.msk [vmem:[%s170 + $0x109] sm:$0xff] %vm18, %v128
    %194 = vst.msk [vmem:[%s170 + $0x111] sm:$0xff] %vm18, %v129
    %195 = vst.msk [vmem:[%s170 + $0x121] sm:$0xff] %vm18, %v130
    %196 = vst.msk [vmem:[%s170 + $0x129] sm:$0xff] %vm18, %v131
    %197 = vst.msk [vmem:[%s170 + $0x139] sm:$0xff] %vm18, %v132
    %198 = vst.msk [vmem:[%s170 + $0x141] sm:$0xff] %vm18, %v133
    %199 = vst.msk [vmem:[%s170 + $0x151] sm:$0xff] %vm18, %v134
    %200 = vst.msk [vmem:[%s170 + $0x159] sm:$0xff] %vm18, %v135
    %201 = vst.msk [vmem:[%s170 + $0x169] sm:$0xff] %vm18, %v136
    %202 = vst.msk [vmem:[%s170 + $0x171] sm:$0xff] %vm18, %v137
    %203 = vst.msk [vmem:[%s170 + $0x1b1] sm:$0xff] %vm18, %v138
    %204 = vst.msk [vmem:[%s170 + $0x1b9] sm:$0xff] %vm18, %v139
    %205 = vst.msk [vmem:[%s170 + $0x1c9] sm:$0xff] %vm18, %v140
    %206 = vst.msk [vmem:[%s170 + $0x1d1] sm:$0xff] %vm18, %v141
    %207 = vst.msk [vmem:[%s170 + $0x1e1] sm:$0xff] %vm18, %v142
    %208 = vst.msk [vmem:[%s170 + $0x1e9] sm:$0xff] %vm18, %v143
    %209 = vst.msk [vmem:[%s170 + $0x1f9] sm:$0xff] %vm18, %v144
    %210 = vst.msk [vmem:[%s170 + $0x201] sm:$0xff] %vm18, %v145
    %211 = vst.msk [vmem:[%s170 + $0x211] sm:$0xff] %vm18, %v146
    %212 = vst.msk [vmem:[%s170 + $0x219] sm:$0xff] %vm18, %v147
    %213 = vst.msk [vmem:[%s170 + $0x229] sm:$0xff] %vm18, %v148
    %214 = vst.msk [vmem:[%s170 + $0x231] sm:$0xff] %vm18, %v149
    %215 = vst.msk [vmem:[%s170 + $0x241] sm:$0xff] %vm18, %v150
    %216 = vst.msk [vmem:[%s170 + $0x249] sm:$0xff] %vm18, %v151
    %217 = vst.msk [vmem:[%s170 + $0x259] sm:$0xff] %vm18, %v152
    %218 = vst.msk [vmem:[%s170 + $0x261] sm:$0xff] %vm18, %v153
    %219 = vst.msk [vmem:[%s170 + $0x271] sm:$0xff] %vm18, %v154
    %220 = vst.msk [vmem:[%s170 + $0x279] sm:$0xff] %vm18, %v155
    %221 = vst.msk [vmem:[%s170 + $0x289] sm:$0xff] %vm18, %v156
    %222 = vst.msk [vmem:[%s170 + $0x291] sm:$0xff] %vm18, %v157
    %223 = vst.msk [vmem:[%s170 + $0x2a1] sm:$0xff] %vm18, %v158
    %224 = vst.msk [vmem:[%s170 + $0x2a9] sm:$0xff] %vm18, %v159
    %225 = vst.msk [vmem:[%s170 + $0x2b9] sm:$0xff] %vm18, %v160
    %226 = vst.msk [vmem:[%s170 + $0x2c1] sm:$0xff] %vm18, %v161
    %227 = vst.msk [vmem:[%s170 + $0x2d1] sm:$0xff] %vm18, %v162
    %228 = vst.msk [vmem:[%s170 + $0x2d9] sm:$0xff] %vm18, %v163
    %229 = vst.msk [vmem:[%s170 + $0x2e9] sm:$0xff] %vm18, %v164
    %230 = vst.msk [vmem:[%s170 + $0x2f1] sm:$0xff] %vm18, %v165
    %231 = vst.msk [vmem:[%s170 + $0x301] sm:$0xff] %vm18, %v166
    %232 = vst.msk [vmem:[%s170 + $0x309] sm:$0xff] %vm18, %v167
    %233 = vst.msk [vmem:[%s170 + $0x319] sm:$0xff] %vm18, %v168
    %234 = vst.msk [vmem:[%s170 + $0x321] sm:$0xff] %vm18, %v169
    %v235 = vld [vmem:[#allocation2] sm:$0xff]
    %v236 = vld [vmem:[#allocation2 + $0x8] sm:$0xff]
    %v237 = vld [vmem:[#allocation2 + $0x18] sm:$0xff]
    %v238 = vld [vmem:[#allocation2 + $0x20] sm:$0xff]
    %v239 = vld [vmem:[#allocation2 + $0x30] sm:$0xff]
    %v240 = vld [vmem:[#allocation2 + $0x38] sm:$0xff]
    %v241 = vld [vmem:[#allocation2 + $0x48] sm:$0xff]
    %v242 = vld [vmem:[#allocation2 + $0x50] sm:$0xff]
    %v243 = vld [vmem:[#allocation2 + $0x60] sm:$0xff]
    %v244 = vld [vmem:[#allocation2 + $0x68] sm:$0xff]
    %v245 = vld [vmem:[#allocation2 + $0x78] sm:$0xff]
    %v246 = vld [vmem:[#allocation2 + $0x80] sm:$0xff]
    %v247 = vld [vmem:[#allocation2 + $0x90] sm:$0xff]
    %v248 = vld [vmem:[#allocation2 + $0x98] sm:$0xff]
    %v249 = vld [vmem:[#allocation2 + $0xa8] sm:$0xff]
    %v250 = vld [vmem:[#allocation2 + $0xb0] sm:$0xff]
    %v251 = vld [vmem:[#allocation2 + $0xc0] sm:$0xff]
    %v252 = vld [vmem:[#allocation2 + $0xc8] sm:$0xff]
    %v253 = vld [vmem:[#allocation2 + $0xd8] sm:$0xff]
    %v254 = vld [vmem:[#allocation2 + $0xe0] sm:$0xff]
    %v255 = vld [vmem:[#allocation2 + $0xf0] sm:$0xff]
    %v256 = vld [vmem:[#allocation2 + $0xf8] sm:$0xff]
    %v257 = vld [vmem:[#allocation2 + $0x108] sm:$0xff]
    %v258 = vld [vmem:[#allocation2 + $0x110] sm:$0xff]
    %v259 = vld [vmem:[#allocation2 + $0x120] sm:$0xff]
    %v260 = vld [vmem:[#allocation2 + $0x128] sm:$0xff]
    %v261 = vld [vmem:[#allocation2 + $0x138] sm:$0xff]
    %v262 = vld [vmem:[#allocation2 + $0x140] sm:$0xff]
    %v263 = vld [vmem:[#allocation2 + $0x150] sm:$0xff]
    %v264 = vld [vmem:[#allocation2 + $0x158] sm:$0xff]
    %v265 = vld [vmem:[#allocation2 + $0x168] sm:$0xff]
    %v266 = vld [vmem:[#allocation2 + $0x170] sm:$0xff]
    %v267 = vld [vmem:[#allocation2 + $0x1b0] sm:$0xff]
    %v268 = vld [vmem:[#allocation2 + $0x1b8] sm:$0xff]
    %v269 = vld [vmem:[#allocation2 + $0x1c8] sm:$0xff]
    %v270 = vld [vmem:[#allocation2 + $0x1d0] sm:$0xff]
    %v271 = vld [vmem:[#allocation2 + $0x1e0] sm:$0xff]
    %v272 = vld [vmem:[#allocation2 + $0x1e8] sm:$0xff]
    %v273 = vld [vmem:[#allocation2 + $0x1f8] sm:$0xff]
    %v274 = vld [vmem:[#allocation2 + $0x200] sm:$0xff]
    %v275 = vld [vmem:[#allocation2 + $0x210] sm:$0xff]
    %v276 = vld [vmem:[#allocation2 + $0x218] sm:$0xff]
    %v277 = vld [vmem:[#allocation2 + $0x228] sm:$0xff]
    %v278 = vld [vmem:[#allocation2 + $0x230] sm:$0xff]
    %v279 = vld [vmem:[#allocation2 + $0x240] sm:$0xff]
    %v280 = vld [vmem:[#allocation2 + $0x248] sm:$0xff]
    %v281 = vld [vmem:[#allocation2 + $0x258] sm:$0xff]
    %v282 = vld [vmem:[#allocation2 + $0x260] sm:$0xff]
    %v283 = vld [vmem:[#allocation2 + $0x270] sm:$0xff]
    %v284 = vld [vmem:[#allocation2 + $0x278] sm:$0xff]
    %v285 = vld [vmem:[#allocation2 + $0x288] sm:$0xff]
    %v286 = vld [vmem:[#allocation2 + $0x290] sm:$0xff]
    %v287 = vld [vmem:[#allocation2 + $0x2a0] sm:$0xff]
    %v288 = vld [vmem:[#allocation2 + $0x2a8] sm:$0xff]
    %v289 = vld [vmem:[#allocation2 + $0x2b8] sm:$0xff]
    %v290 = vld [vmem:[#allocation2 + $0x2c0] sm:$0xff]
    %v291 = vld [vmem:[#allocation2 + $0x2d0] sm:$0xff]
    %v292 = vld [vmem:[#allocation2 + $0x2d8] sm:$0xff]
    %v293 = vld [vmem:[#allocation2 + $0x2e8] sm:$0xff]
    %v294 = vld [vmem:[#allocation2 + $0x2f0] sm:$0xff]
    %v295 = vld [vmem:[#allocation2 + $0x300] sm:$0xff]
    %v296 = vld [vmem:[#allocation2 + $0x308] sm:$0xff]
    %v297 = vld [vmem:[#allocation2 + $0x318] sm:$0xff]
    %v298 = vld [vmem:[#allocation2 + $0x320] sm:$0xff]
    %299 = vst.msk [vmem:[#allocation3] sm:$0xff] %vm18, %v235
    %300 = vst.msk [vmem:[#allocation3 + $0x8] sm:$0xff] %vm18, %v236
    %301 = vst.msk [vmem:[#allocation3 + $0x10] sm:$0xff] %vm18, %v237
    %302 = vst.msk [vmem:[#allocation3 + $0x18] sm:$0xff] %vm18, %v238
    %303 = vst.msk [vmem:[#allocation3 + $0x20] sm:$0xff] %vm18, %v239
    %304 = vst.msk [vmem:[#allocation3 + $0x28] sm:$0xff] %vm18, %v240
    %305 = vst.msk [vmem:[#allocation3 + $0x30] sm:$0xff] %vm18, %v241
    %306 = vst.msk [vmem:[#allocation3 + $0x38] sm:$0xff] %vm18, %v242
    %307 = vst.msk [vmem:[#allocation3 + $0x40] sm:$0xff] %vm18, %v243
    %308 = vst.msk [vmem:[#allocation3 + $0x48] sm:$0xff] %vm18, %v244
    %309 = vst.msk [vmem:[#allocation3 + $0x50] sm:$0xff] %vm18, %v245
    %310 = vst.msk [vmem:[#allocation3 + $0x58] sm:$0xff] %vm18, %v246
    %311 = vst.msk [vmem:[#allocation3 + $0x60] sm:$0xff] %vm18, %v247
    %312 = vst.msk [vmem:[#allocation3 + $0x68] sm:$0xff] %vm18, %v248
    %313 = vst.msk [vmem:[#allocation3 + $0x70] sm:$0xff] %vm18, %v249
    %314 = vst.msk [vmem:[#allocation3 + $0x78] sm:$0xff] %vm18, %v250
    %315 = vst.msk [vmem:[#allocation3 + $0x80] sm:$0xff] %vm18, %v251
    %316 = vst.msk [vmem:[#allocation3 + $0x88] sm:$0xff] %vm18, %v252
    %317 = vst.msk [vmem:[#allocation3 + $0x90] sm:$0xff] %vm18, %v253
    %318 = vst.msk [vmem:[#allocation3 + $0x98] sm:$0xff] %vm18, %v254
    %319 = vst.msk [vmem:[#allocation3 + $0xa0] sm:$0xff] %vm18, %v255
    %320 = vst.msk [vmem:[#allocation3 + $0xa8] sm:$0xff] %vm18, %v256
    %321 = vst.msk [vmem:[#allocation3 + $0xb0] sm:$0xff] %vm18, %v257
    %322 = vst.msk [vmem:[#allocation3 + $0xb8] sm:$0xff] %vm18, %v258
    %323 = vst.msk [vmem:[#allocation3 + $0xc0] sm:$0xff] %vm18, %v259
    %324 = vst.msk [vmem:[#allocation3 + $0xc8] sm:$0xff] %vm18, %v260
    %325 = vst.msk [vmem:[#allocation3 + $0xd0] sm:$0xff] %vm18, %v261
    %326 = vst.msk [vmem:[#allocation3 + $0xd8] sm:$0xff] %vm18, %v262
    %327 = vst.msk [vmem:[#allocation3 + $0xe0] sm:$0xff] %vm18, %v263
    %328 = vst.msk [vmem:[#allocation3 + $0xe8] sm:$0xff] %vm18, %v264
    %329 = vst.msk [vmem:[#allocation3 + $0xf0] sm:$0xff] %vm18, %v265
    %330 = vst.msk [vmem:[#allocation3 + $0xf8] sm:$0xff] %vm18, %v266
    %331 = vst.msk [vmem:[#allocation3 + $0x100] sm:$0xff] %vm18, %v267
    %332 = vst.msk [vmem:[#allocation3 + $0x108] sm:$0xff] %vm18, %v268
    %333 = vst.msk [vmem:[#allocation3 + $0x110] sm:$0xff] %vm18, %v269
    %334 = vst.msk [vmem:[#allocation3 + $0x118] sm:$0xff] %vm18, %v270
    %335 = vst.msk [vmem:[#allocation3 + $0x120] sm:$0xff] %vm18, %v271
    %336 = vst.msk [vmem:[#allocation3 + $0x128] sm:$0xff] %vm18, %v272
    %337 = vst.msk [vmem:[#allocation3 + $0x130] sm:$0xff] %vm18, %v273
    %338 = vst.msk [vmem:[#allocation3 + $0x138] sm:$0xff] %vm18, %v274
    %339 = vst.msk [vmem:[#allocation3 + $0x140] sm:$0xff] %vm18, %v275
    %340 = vst.msk [vmem:[#allocation3 + $0x148] sm:$0xff] %vm18, %v276
    %341 = vst.msk [vmem:[#allocation3 + $0x150] sm:$0xff] %vm18, %v277
    %342 = vst.msk [vmem:[#allocation3 + $0x158] sm:$0xff] %vm18, %v278
    %343 = vst.msk [vmem:[#allocation3 + $0x160] sm:$0xff] %vm18, %v279
    %344 = vst.msk [vmem:[#allocation3 + $0x168] sm:$0xff] %vm18, %v280
    %345 = vst.msk [vmem:[#allocation3 + $0x170] sm:$0xff] %vm18, %v281
    %346 = vst.msk [vmem:[#allocation3 + $0x178] sm:$0xff] %vm18, %v282
    %347 = vst.msk [vmem:[#allocation3 + $0x180] sm:$0xff] %vm18, %v283
    %348 = vst.msk [vmem:[#allocation3 + $0x188] sm:$0xff] %vm18, %v284
    %349 = vst.msk [vmem:[#allocation3 + $0x190] sm:$0xff] %vm18, %v285
    %350 = vst.msk [vmem:[#allocation3 + $0x198] sm:$0xff] %vm18, %v286
    %351 = vst.msk [vmem:[#allocation3 + $0x1a0] sm:$0xff] %vm18, %v287
    %352 = vst.msk [vmem:[#allocation3 + $0x1a8] sm:$0xff] %vm18, %v288
    %353 = vst.msk [vmem:[#allocation3 + $0x1b0] sm:$0xff] %vm18, %v289
    %354 = vst.msk [vmem:[#allocation3 + $0x1b8] sm:$0xff] %vm18, %v290
    %355 = vst.msk [vmem:[#allocation3 + $0x1c0] sm:$0xff] %vm18, %v291
    %356 = vst.msk [vmem:[#allocation3 + $0x1c8] sm:$0xff] %vm18, %v292
    %357 = vst.msk [vmem:[#allocation3 + $0x1d0] sm:$0xff] %vm18, %v293
    %358 = vst.msk [vmem:[#allocation3 + $0x1d8] sm:$0xff] %vm18, %v294
    %359 = vst.msk [vmem:[#allocation3 + $0x1e0] sm:$0xff] %vm18, %v295
    %360 = vst.msk [vmem:[#allocation3 + $0x1e8] sm:$0xff] %vm18, %v296
    %361 = vst.msk [vmem:[#allocation3 + $0x1f0] sm:$0xff] %vm18, %v297
    %362 = vst.msk [vmem:[#allocation3 + $0x1f8] sm:$0xff] %vm18, %v298
    %v363 = vld [vmem:[#allocation2 + $0x1] sm:$0xff]
    %v364 = vld [vmem:[#allocation2 + $0x9] sm:$0xff]
    %v365 = vld [vmem:[#allocation2 + $0x19] sm:$0xff]
    %v366 = vld [vmem:[#allocation2 + $0x21] sm:$0xff]
    %v367 = vld [vmem:[#allocation2 + $0x31] sm:$0xff]
    %v368 = vld [vmem:[#allocation2 + $0x39] sm:$0xff]
    %v369 = vld [vmem:[#allocation2 + $0x49] sm:$0xff]
    %v370 = vld [vmem:[#allocation2 + $0x51] sm:$0xff]
    %v371 = vld [vmem:[#allocation2 + $0x61] sm:$0xff]
    %v372 = vld [vmem:[#allocation2 + $0x69] sm:$0xff]
    %v373 = vld [vmem:[#allocation2 + $0x79] sm:$0xff]
    %v374 = vld [vmem:[#allocation2 + $0x81] sm:$0xff]
    %v375 = vld [vmem:[#allocation2 + $0x91] sm:$0xff]
    %v376 = vld [vmem:[#allocation2 + $0x99] sm:$0xff]
    %v377 = vld [vmem:[#allocation2 + $0xa9] sm:$0xff]
    %v378 = vld [vmem:[#allocation2 + $0xb1] sm:$0xff]
    %v379 = vld [vmem:[#allocation2 + $0xc1] sm:$0xff]
    %v380 = vld [vmem:[#allocation2 + $0xc9] sm:$0xff]
    %v381 = vld [vmem:[#allocation2 + $0xd9] sm:$0xff]
    %v382 = vld [vmem:[#allocation2 + $0xe1] sm:$0xff]
    %v383 = vld [vmem:[#allocation2 + $0xf1] sm:$0xff]
    %v384 = vld [vmem:[#allocation2 + $0xf9] sm:$0xff]
    %v385 = vld [vmem:[#allocation2 + $0x109] sm:$0xff]
    %v386 = vld [vmem:[#allocation2 + $0x111] sm:$0xff]
    %v387 = vld [vmem:[#allocation2 + $0x121] sm:$0xff]
    %v388 = vld [vmem:[#allocation2 + $0x129] sm:$0xff]
    %v389 = vld [vmem:[#allocation2 + $0x139] sm:$0xff]
    %v390 = vld [vmem:[#allocation2 + $0x141] sm:$0xff]
    %v391 = vld [vmem:[#allocation2 + $0x151] sm:$0xff]
    %v392 = vld [vmem:[#allocation2 + $0x159] sm:$0xff]
    %v393 = vld [vmem:[#allocation2 + $0x169] sm:$0xff]
    %v394 = vld [vmem:[#allocation2 + $0x171] sm:$0xff]
    %v395 = vld [vmem:[#allocation2 + $0x1b1] sm:$0xff]
    %v396 = vld [vmem:[#allocation2 + $0x1b9] sm:$0xff]
    %v397 = vld [vmem:[#allocation2 + $0x1c9] sm:$0xff]
    %v398 = vld [vmem:[#allocation2 + $0x1d1] sm:$0xff]
    %v399 = vld [vmem:[#allocation2 + $0x1e1] sm:$0xff]
    %v400 = vld [vmem:[#allocation2 + $0x1e9] sm:$0xff]
    %v401 = vld [vmem:[#allocation2 + $0x1f9] sm:$0xff]
    %v402 = vld [vmem:[#allocation2 + $0x201] sm:$0xff]
    %v403 = vld [vmem:[#allocation2 + $0x211] sm:$0xff]
    %v404 = vld [vmem:[#allocation2 + $0x219] sm:$0xff]
    %v405 = vld [vmem:[#allocation2 + $0x229] sm:$0xff]
    %v406 = vld [vmem:[#allocation2 + $0x231] sm:$0xff]
    %v407 = vld [vmem:[#allocation2 + $0x241] sm:$0xff]
    %v408 = vld [vmem:[#allocation2 + $0x249] sm:$0xff]
    %v409 = vld [vmem:[#allocation2 + $0x259] sm:$0xff]
    %v410 = vld [vmem:[#allocation2 + $0x261] sm:$0xff]
    %v411 = vld [vmem:[#allocation2 + $0x271] sm:$0xff]
    %v412 = vld [vmem:[#allocation2 + $0x279] sm:$0xff]
    %v413 = vld [vmem:[#allocation2 + $0x289] sm:$0xff]
    %v414 = vld [vmem:[#allocation2 + $0x291] sm:$0xff]
    %v415 = vld [vmem:[#allocation2 + $0x2a1] sm:$0xff]
    %v416 = vld [vmem:[#allocation2 + $0x2a9] sm:$0xff]
    %v417 = vld [vmem:[#allocation2 + $0x2b9] sm:$0xff]
    %v418 = vld [vmem:[#allocation2 + $0x2c1] sm:$0xff]
    %v419 = vld [vmem:[#allocation2 + $0x2d1] sm:$0xff]
    %v420 = vld [vmem:[#allocation2 + $0x2d9] sm:$0xff]
    %v421 = vld [vmem:[#allocation2 + $0x2e9] sm:$0xff]
    %v422 = vld [vmem:[#allocation2 + $0x2f1] sm:$0xff]
    %v423 = vld [vmem:[#allocation2 + $0x301] sm:$0xff]
    %v424 = vld [vmem:[#allocation2 + $0x309] sm:$0xff]
    %v425 = vld [vmem:[#allocation2 + $0x319] sm:$0xff]
    %v426 = vld [vmem:[#allocation2 + $0x321] sm:$0xff]
    %491 = vrot.lane.b32.xlu0 %v363, 4
    %v492 = vpop.permute.xlu0 %491
    %493 = vrot.lane.b32.xlu0 %v364, 4
    %v494 = vpop.permute.xlu0 %493
    %495 = vrot.lane.b32.xlu0 %v365, 4
    %v496 = vpop.permute.xlu0 %495
    %497 = vrot.lane.b32.xlu0 %v366, 4
    %v498 = vpop.permute.xlu0 %497
    %499 = vrot.lane.b32.xlu0 %v367, 4
    %v500 = vpop.permute.xlu0 %499
    %501 = vrot.lane.b32.xlu0 %v368, 4
    %v502 = vpop.permute.xlu0 %501
    %503 = vrot.lane.b32.xlu0 %v369, 4
    %v504 = vpop.permute.xlu0 %503
    %505 = vrot.lane.b32.xlu0 %v370, 4
    %v506 = vpop.permute.xlu0 %505
    %507 = vrot.lane.b32.xlu0 %v371, 4
    %v508 = vpop.permute.xlu0 %507
    %509 = vrot.lane.b32.xlu0 %v372, 4
    %v510 = vpop.permute.xlu0 %509
    %511 = vrot.lane.b32.xlu0 %v373, 4
    %v512 = vpop.permute.xlu0 %511
    %513 = vrot.lane.b32.xlu0 %v374, 4
    %v514 = vpop.permute.xlu0 %513
    %515 = vrot.lane.b32.xlu0 %v375, 4
    %v516 = vpop.permute.xlu0 %515
    %517 = vrot.lane.b32.xlu0 %v376, 4
    %v518 = vpop.permute.xlu0 %517
    %519 = vrot.lane.b32.xlu0 %v377, 4
    %v520 = vpop.permute.xlu0 %519
    %521 = vrot.lane.b32.xlu0 %v378, 4
    %v522 = vpop.permute.xlu0 %521
    %523 = vrot.lane.b32.xlu0 %v379, 4
    %v524 = vpop.permute.xlu0 %523
    %525 = vrot.lane.b32.xlu0 %v380, 4
    %v526 = vpop.permute.xlu0 %525
    %527 = vrot.lane.b32.xlu0 %v381, 4
    %v528 = vpop.permute.xlu0 %527
    %529 = vrot.lane.b32.xlu0 %v382, 4
    %v530 = vpop.permute.xlu0 %529
    %531 = vrot.lane.b32.xlu0 %v383, 4
    %v532 = vpop.permute.xlu0 %531
    %533 = vrot.lane.b32.xlu0 %v384, 4
    %v534 = vpop.permute.xlu0 %533
    %535 = vrot.lane.b32.xlu0 %v385, 4
    %v536 = vpop.permute.xlu0 %535
    %537 = vrot.lane.b32.xlu0 %v386, 4
    %v538 = vpop.permute.xlu0 %537
    %539 = vrot.lane.b32.xlu0 %v387, 4
    %v540 = vpop.permute.xlu0 %539
    %541 = vrot.lane.b32.xlu0 %v388, 4
    %v542 = vpop.permute.xlu0 %541
    %543 = vrot.lane.b32.xlu0 %v389, 4
    %v544 = vpop.permute.xlu0 %543
    %545 = vrot.lane.b32.xlu0 %v390, 4
    %v546 = vpop.permute.xlu0 %545
    %547 = vrot.lane.b32.xlu0 %v391, 4
    %v548 = vpop.permute.xlu0 %547
    %549 = vrot.lane.b32.xlu0 %v392, 4
    %v550 = vpop.permute.xlu0 %549
    %551 = vrot.lane.b32.xlu0 %v393, 4
    %v552 = vpop.permute.xlu0 %551
    %553 = vrot.lane.b32.xlu0 %v394, 4
    %v554 = vpop.permute.xlu0 %553
    %555 = vrot.lane.b32.xlu0 %v395, 4
    %v556 = vpop.permute.xlu0 %555
    %557 = vrot.lane.b32.xlu0 %v396, 4
    %v558 = vpop.permute.xlu0 %557
    %559 = vrot.lane.b32.xlu0 %v397, 4
    %v560 = vpop.permute.xlu0 %559
    %561 = vrot.lane.b32.xlu0 %v398, 4
    %v562 = vpop.permute.xlu0 %561
    %563 = vrot.lane.b32.xlu0 %v399, 4
    %v564 = vpop.permute.xlu0 %563
    %565 = vrot.lane.b32.xlu0 %v400, 4
    %v566 = vpop.permute.xlu0 %565
    %567 = vrot.lane.b32.xlu0 %v401, 4
    %v568 = vpop.permute.xlu0 %567
    %569 = vrot.lane.b32.xlu0 %v402, 4
    %v570 = vpop.permute.xlu0 %569
    %571 = vrot.lane.b32.xlu0 %v403, 4
    %v572 = vpop.permute.xlu0 %571
    %573 = vrot.lane.b32.xlu0 %v404, 4
    %v574 = vpop.permute.xlu0 %573
    %575 = vrot.lane.b32.xlu0 %v405, 4
    %v576 = vpop.permute.xlu0 %575
    %577 = vrot.lane.b32.xlu0 %v406, 4
    %v578 = vpop.permute.xlu0 %577
    %579 = vrot.lane.b32.xlu0 %v407, 4
    %v580 = vpop.permute.xlu0 %579
    %581 = vrot.lane.b32.xlu0 %v408, 4
    %v582 = vpop.permute.xlu0 %581
    %583 = vrot.lane.b32.xlu0 %v409, 4
    %v584 = vpop.permute.xlu0 %583
    %585 = vrot.lane.b32.xlu0 %v410, 4
    %v586 = vpop.permute.xlu0 %585
    %587 = vrot.lane.b32.xlu0 %v411, 4
    %v588 = vpop.permute.xlu0 %587
    %589 = vrot.lane.b32.xlu0 %v412, 4
    %v590 = vpop.permute.xlu0 %589
    %591 = vrot.lane.b32.xlu0 %v413, 4
    %v592 = vpop.permute.xlu0 %591
    %593 = vrot.lane.b32.xlu0 %v414, 4
    %v594 = vpop.permute.xlu0 %593
    %595 = vrot.lane.b32.xlu0 %v415, 4
    %v596 = vpop.permute.xlu0 %595
    %597 = vrot.lane.b32.xlu0 %v416, 4
    %v598 = vpop.permute.xlu0 %597
    %599 = vrot.lane.b32.xlu0 %v417, 4
    %v600 = vpop.permute.xlu0 %599
    %601 = vrot.lane.b32.xlu0 %v418, 4
    %v602 = vpop.permute.xlu0 %601
    %603 = vrot.lane.b32.xlu0 %v419, 4
    %v604 = vpop.permute.xlu0 %603
    %605 = vrot.lane.b32.xlu0 %v420, 4
    %v606 = vpop.permute.xlu0 %605
    %607 = vrot.lane.b32.xlu0 %v421, 4
    %v608 = vpop.permute.xlu0 %607
    %609 = vrot.lane.b32.xlu0 %v422, 4
    %v610 = vpop.permute.xlu0 %609
    %611 = vrot.lane.b32.xlu0 %v423, 4
    %v612 = vpop.permute.xlu0 %611
    %613 = vrot.lane.b32.xlu0 %v424, 4
    %v614 = vpop.permute.xlu0 %613
    %615 = vrot.lane.b32.xlu0 %v425, 4
    %v616 = vpop.permute.xlu0 %615
    %617 = vrot.lane.b32.xlu0 %v426, 4
    %v618 = vpop.permute.xlu0 %617
    %vm683 = vcmask 64544
    %684 = vst.msk [vmem:[#allocation3] sm:$0xff] %vm683, %v492
    %685 = vst.msk [vmem:[#allocation3 + $0x8] sm:$0xff] %vm683, %v494
    %686 = vst.msk [vmem:[#allocation3 + $0x10] sm:$0xff] %vm683, %v496
    %687 = vst.msk [vmem:[#allocation3 + $0x18] sm:$0xff] %vm683, %v498
    %688 = vst.msk [vmem:[#allocation3 + $0x20] sm:$0xff] %vm683, %v500
    %689 = vst.msk [vmem:[#allocation3 + $0x28] sm:$0xff] %vm683, %v502
    %690 = vst.msk [vmem:[#allocation3 + $0x30] sm:$0xff] %vm683, %v504
    %691 = vst.msk [vmem:[#allocation3 + $0x38] sm:$0xff] %vm683, %v506
    %692 = vst.msk [vmem:[#allocation3 + $0x40] sm:$0xff] %vm683, %v508
    %693 = vst.msk [vmem:[#allocation3 + $0x48] sm:$0xff] %vm683, %v510
    %694 = vst.msk [vmem:[#allocation3 + $0x50] sm:$0xff] %vm683, %v512
    %695 = vst.msk [vmem:[#allocation3 + $0x58] sm:$0xff] %vm683, %v514
    %696 = vst.msk [vmem:[#allocation3 + $0x60] sm:$0xff] %vm683, %v516
    %697 = vst.msk [vmem:[#allocation3 + $0x68] sm:$0xff] %vm683, %v518
    %698 = vst.msk [vmem:[#allocation3 + $0x70] sm:$0xff] %vm683, %v520
    %699 = vst.msk [vmem:[#allocation3 + $0x78] sm:$0xff] %vm683, %v522
    %700 = vst.msk [vmem:[#allocation3 + $0x80] sm:$0xff] %vm683, %v524
    %701 = vst.msk [vmem:[#allocation3 + $0x88] sm:$0xff] %vm683, %v526
    %702 = vst.msk [vmem:[#allocation3 + $0x90] sm:$0xff] %vm683, %v528
    %703 = vst.msk [vmem:[#allocation3 + $0x98] sm:$0xff] %vm683, %v530
    %704 = vst.msk [vmem:[#allocation3 + $0xa0] sm:$0xff] %vm683, %v532
    %705 = vst.msk [vmem:[#allocation3 + $0xa8] sm:$0xff] %vm683, %v534
    %706 = vst.msk [vmem:[#allocation3 + $0xb0] sm:$0xff] %vm683, %v536
    %707 = vst.msk [vmem:[#allocation3 + $0xb8] sm:$0xff] %vm683, %v538
    %708 = vst.msk [vmem:[#allocation3 + $0xc0] sm:$0xff] %vm683, %v540
    %709 = vst.msk [vmem:[#allocation3 + $0xc8] sm:$0xff] %vm683, %v542
    %710 = vst.msk [vmem:[#allocation3 + $0xd0] sm:$0xff] %vm683, %v544
    %711 = vst.msk [vmem:[#allocation3 + $0xd8] sm:$0xff] %vm683, %v546
    %712 = vst.msk [vmem:[#allocation3 + $0xe0] sm:$0xff] %vm683, %v548
    %713 = vst.msk [vmem:[#allocation3 + $0xe8] sm:$0xff] %vm683, %v550
    %714 = vst.msk [vmem:[#allocation3 + $0xf0] sm:$0xff] %vm683, %v552
    %715 = vst.msk [vmem:[#allocation3 + $0xf8] sm:$0xff] %vm683, %v554
    %716 = vst.msk [vmem:[#allocation3 + $0x100] sm:$0xff] %vm683, %v556
    %717 = vst.msk [vmem:[#allocation3 + $0x108] sm:$0xff] %vm683, %v558
    %718 = vst.msk [vmem:[#allocation3 + $0x110] sm:$0xff] %vm683, %v560
    %719 = vst.msk [vmem:[#allocation3 + $0x118] sm:$0xff] %vm683, %v562
    %720 = vst.msk [vmem:[#allocation3 + $0x120] sm:$0xff] %vm683, %v564
    %721 = vst.msk [vmem:[#allocation3 + $0x128] sm:$0xff] %vm683, %v566
    %722 = vst.msk [vmem:[#allocation3 + $0x130] sm:$0xff] %vm683, %v568
    %723 = vst.msk [vmem:[#allocation3 + $0x138] sm:$0xff] %vm683, %v570
    %724 = vst.msk [vmem:[#allocation3 + $0x140] sm:$0xff] %vm683, %v572
    %725 = vst.msk [vmem:[#allocation3 + $0x148] sm:$0xff] %vm683, %v574
    %726 = vst.msk [vmem:[#allocation3 + $0x150] sm:$0xff] %vm683, %v576
    %727 = vst.msk [vmem:[#allocation3 + $0x158] sm:$0xff] %vm683, %v578
    %728 = vst.msk [vmem:[#allocation3 + $0x160] sm:$0xff] %vm683, %v580
    %729 = vst.msk [vmem:[#allocation3 + $0x168] sm:$0xff] %vm683, %v582
    %730 = vst.msk [vmem:[#allocation3 + $0x170] sm:$0xff] %vm683, %v584
    %731 = vst.msk [vmem:[#allocation3 + $0x178] sm:$0xff] %vm683, %v586
    %732 = vst.msk [vmem:[#allocation3 + $0x180] sm:$0xff] %vm683, %v588
    %733 = vst.msk [vmem:[#allocation3 + $0x188] sm:$0xff] %vm683, %v590
    %734 = vst.msk [vmem:[#allocation3 + $0x190] sm:$0xff] %vm683, %v592
    %735 = vst.msk [vmem:[#allocation3 + $0x198] sm:$0xff] %vm683, %v594
    %736 = vst.msk [vmem:[#allocation3 + $0x1a0] sm:$0xff] %vm683, %v596
    %737 = vst.msk [vmem:[#allocation3 + $0x1a8] sm:$0xff] %vm683, %v598
    %738 = vst.msk [vmem:[#allocation3 + $0x1b0] sm:$0xff] %vm683, %v600
    %739 = vst.msk [vmem:[#allocation3 + $0x1b8] sm:$0xff] %vm683, %v602
    %740 = vst.msk [vmem:[#allocation3 + $0x1c0] sm:$0xff] %vm683, %v604
    %741 = vst.msk [vmem:[#allocation3 + $0x1c8] sm:$0xff] %vm683, %v606
    %742 = vst.msk [vmem:[#allocation3 + $0x1d0] sm:$0xff] %vm683, %v608
    %743 = vst.msk [vmem:[#allocation3 + $0x1d8] sm:$0xff] %vm683, %v610
    %744 = vst.msk [vmem:[#allocation3 + $0x1e0] sm:$0xff] %vm683, %v612
    %745 = vst.msk [vmem:[#allocation3 + $0x1e8] sm:$0xff] %vm683, %v614
    %746 = vst.msk [vmem:[#allocation3 + $0x1f0] sm:$0xff] %vm683, %v616
    %747 = vst.msk [vmem:[#allocation3 + $0x1f8] sm:$0xff] %vm683, %v618
    %v748 = vld [vmem:[#allocation2 + $0x2] sm:$0xff]
    %v749 = vld [vmem:[#allocation2 + $0xa] sm:$0xff]
    %v750 = vld [vmem:[#allocation2 + $0x1a] sm:$0xff]
    %v751 = vld [vmem:[#allocation2 + $0x22] sm:$0xff]
    %v752 = vld [vmem:[#allocation2 + $0x32] sm:$0xff]
    %v753 = vld [vmem:[#allocation2 + $0x3a] sm:$0xff]
    %v754 = vld [vmem:[#allocation2 + $0x4a] sm:$0xff]
    %v755 = vld [vmem:[#allocation2 + $0x52] sm:$0xff]
    %v756 = vld [vmem:[#allocation2 + $0x62] sm:$0xff]
    %v757 = vld [vmem:[#allocation2 + $0x6a] sm:$0xff]
    %v758 = vld [vmem:[#allocation2 + $0x7a] sm:$0xff]
    %v759 = vld [vmem:[#allocation2 + $0x82] sm:$0xff]
    %v760 = vld [vmem:[#allocation2 + $0x92] sm:$0xff]
    %v761 = vld [vmem:[#allocation2 + $0x9a] sm:$0xff]
    %v762 = vld [vmem:[#allocation2 + $0xaa] sm:$0xff]
    %v763 = vld [vmem:[#allocation2 + $0xb2] sm:$0xff]
    %v764 = vld [vmem:[#allocation2 + $0xc2] sm:$0xff]
    %v765 = vld [vmem:[#allocation2 + $0xca] sm:$0xff]
    %v766 = vld [vmem:[#allocation2 + $0xda] sm:$0xff]
    %v767 = vld [vmem:[#allocation2 + $0xe2] sm:$0xff]
    %v768 = vld [vmem:[#allocation2 + $0xf2] sm:$0xff]
    %v769 = vld [vmem:[#allocation2 + $0xfa] sm:$0xff]
    %v770 = vld [vmem:[#allocation2 + $0x10a] sm:$0xff]
    %v771 = vld [vmem:[#allocation2 + $0x112] sm:$0xff]
    %v772 = vld [vmem:[#allocation2 + $0x122] sm:$0xff]
    %v773 = vld [vmem:[#allocation2 + $0x12a] sm:$0xff]
    %v774 = vld [vmem:[#allocation2 + $0x13a] sm:$0xff]
    %v775 = vld [vmem:[#allocation2 + $0x142] sm:$0xff]
    %v776 = vld [vmem:[#allocation2 + $0x152] sm:$0xff]
    %v777 = vld [vmem:[#allocation2 + $0x15a] sm:$0xff]
    %v778 = vld [vmem:[#allocation2 + $0x16a] sm:$0xff]
    %v779 = vld [vmem:[#allocation2 + $0x172] sm:$0xff]
    %v780 = vld [vmem:[#allocation2 + $0x1b2] sm:$0xff]
    %v781 = vld [vmem:[#allocation2 + $0x1ba] sm:$0xff]
    %v782 = vld [vmem:[#allocation2 + $0x1ca] sm:$0xff]
    %v783 = vld [vmem:[#allocation2 + $0x1d2] sm:$0xff]
    %v784 = vld [vmem:[#allocation2 + $0x1e2] sm:$0xff]
    %v785 = vld [vmem:[#allocation2 + $0x1ea] sm:$0xff]
    %v786 = vld [vmem:[#allocation2 + $0x1fa] sm:$0xff]
    %v787 = vld [vmem:[#allocation2 + $0x202] sm:$0xff]
    %v788 = vld [vmem:[#allocation2 + $0x212] sm:$0xff]
    %v789 = vld [vmem:[#allocation2 + $0x21a] sm:$0xff]
    %v790 = vld [vmem:[#allocation2 + $0x22a] sm:$0xff]
    %v791 = vld [vmem:[#allocation2 + $0x232] sm:$0xff]
    %v792 = vld [vmem:[#allocation2 + $0x242] sm:$0xff]
    %v793 = vld [vmem:[#allocation2 + $0x24a] sm:$0xff]
    %v794 = vld [vmem:[#allocation2 + $0x25a] sm:$0xff]
    %v795 = vld [vmem:[#allocation2 + $0x262] sm:$0xff]
    %v796 = vld [vmem:[#allocation2 + $0x272] sm:$0xff]
    %v797 = vld [vmem:[#allocation2 + $0x27a] sm:$0xff]
    %v798 = vld [vmem:[#allocation2 + $0x28a] sm:$0xff]
    %v799 = vld [vmem:[#allocation2 + $0x292] sm:$0xff]
    %v800 = vld [vmem:[#allocation2 + $0x2a2] sm:$0xff]
    %v801 = vld [vmem:[#allocation2 + $0x2aa] sm:$0xff]
    %v802 = vld [vmem:[#allocation2 + $0x2ba] sm:$0xff]
    %v803 = vld [vmem:[#allocation2 + $0x2c2] sm:$0xff]
    %v804 = vld [vmem:[#allocation2 + $0x2d2] sm:$0xff]
    %v805 = vld [vmem:[#allocation2 + $0x2da] sm:$0xff]
    %v806 = vld [vmem:[#allocation2 + $0x2ea] sm:$0xff]
    %v807 = vld [vmem:[#allocation2 + $0x2f2] sm:$0xff]
    %v808 = vld [vmem:[#allocation2 + $0x302] sm:$0xff]
    %v809 = vld [vmem:[#allocation2 + $0x30a] sm:$0xff]
    %v810 = vld [vmem:[#allocation2 + $0x31a] sm:$0xff]
    %v811 = vld [vmem:[#allocation2 + $0x322] sm:$0xff]
    %876 = vrot.lane.b32.xlu0 %v748, 8
    %v877 = vpop.permute.xlu0 %876
    %878 = vrot.lane.b32.xlu0 %v749, 8
    %v879 = vpop.permute.xlu0 %878
    %880 = vrot.lane.b32.xlu0 %v750, 8
    %v881 = vpop.permute.xlu0 %880
    %882 = vrot.lane.b32.xlu0 %v751, 8
    %v883 = vpop.permute.xlu0 %882
    %884 = vrot.lane.b32.xlu0 %v752, 8
    %v885 = vpop.permute.xlu0 %884
    %886 = vrot.lane.b32.xlu0 %v753, 8
    %v887 = vpop.permute.xlu0 %886
    %888 = vrot.lane.b32.xlu0 %v754, 8
    %v889 = vpop.permute.xlu0 %888
    %890 = vrot.lane.b32.xlu0 %v755, 8
    %v891 = vpop.permute.xlu0 %890
    %892 = vrot.lane.b32.xlu0 %v756, 8
    %v893 = vpop.permute.xlu0 %892
    %894 = vrot.lane.b32.xlu0 %v757, 8
    %v895 = vpop.permute.xlu0 %894
    %896 = vrot.lane.b32.xlu0 %v758, 8
    %v897 = vpop.permute.xlu0 %896
    %898 = vrot.lane.b32.xlu0 %v759, 8
    %v899 = vpop.permute.xlu0 %898
    %900 = vrot.lane.b32.xlu0 %v760, 8
    %v901 = vpop.permute.xlu0 %900
    %902 = vrot.lane.b32.xlu0 %v761, 8
    %v903 = vpop.permute.xlu0 %902
    %904 = vrot.lane.b32.xlu0 %v762, 8
    %v905 = vpop.permute.xlu0 %904
    %906 = vrot.lane.b32.xlu0 %v763, 8
    %v907 = vpop.permute.xlu0 %906
    %908 = vrot.lane.b32.xlu0 %v764, 8
    %v909 = vpop.permute.xlu0 %908
    %910 = vrot.lane.b32.xlu0 %v765, 8
    %v911 = vpop.permute.xlu0 %910
    %912 = vrot.lane.b32.xlu0 %v766, 8
    %v913 = vpop.permute.xlu0 %912
    %914 = vrot.lane.b32.xlu0 %v767, 8
    %v915 = vpop.permute.xlu0 %914
    %916 = vrot.lane.b32.xlu0 %v768, 8
    %v917 = vpop.permute.xlu0 %916
    %918 = vrot.lane.b32.xlu0 %v769, 8
    %v919 = vpop.permute.xlu0 %918
    %920 = vrot.lane.b32.xlu0 %v770, 8
    %v921 = vpop.permute.xlu0 %920
    %922 = vrot.lane.b32.xlu0 %v771, 8
    %v923 = vpop.permute.xlu0 %922
    %924 = vrot.lane.b32.xlu0 %v772, 8
    %v925 = vpop.permute.xlu0 %924
    %926 = vrot.lane.b32.xlu0 %v773, 8
    %v927 = vpop.permute.xlu0 %926
    %928 = vrot.lane.b32.xlu0 %v774, 8
    %v929 = vpop.permute.xlu0 %928
    %930 = vrot.lane.b32.xlu0 %v775, 8
    %v931 = vpop.permute.xlu0 %930
    %932 = vrot.lane.b32.xlu0 %v776, 8
    %v933 = vpop.permute.xlu0 %932
    %934 = vrot.lane.b32.xlu0 %v777, 8
    %v935 = vpop.permute.xlu0 %934
    %936 = vrot.lane.b32.xlu0 %v778, 8
    %v937 = vpop.permute.xlu0 %936
    %938 = vrot.lane.b32.xlu0 %v779, 8
    %v939 = vpop.permute.xlu0 %938
    %940 = vrot.lane.b32.xlu0 %v780, 8
    %v941 = vpop.permute.xlu0 %940
    %942 = vrot.lane.b32.xlu0 %v781, 8
    %v943 = vpop.permute.xlu0 %942
    %944 = vrot.lane.b32.xlu0 %v782, 8
    %v945 = vpop.permute.xlu0 %944
    %946 = vrot.lane.b32.xlu0 %v783, 8
    %v947 = vpop.permute.xlu0 %946
    %948 = vrot.lane.b32.xlu0 %v784, 8
    %v949 = vpop.permute.xlu0 %948
    %950 = vrot.lane.b32.xlu0 %v785, 8
    %v951 = vpop.permute.xlu0 %950
    %952 = vrot.lane.b32.xlu0 %v786, 8
    %v953 = vpop.permute.xlu0 %952
    %954 = vrot.lane.b32.xlu0 %v787, 8
    %v955 = vpop.permute.xlu0 %954
    %956 = vrot.lane.b32.xlu0 %v788, 8
    %v957 = vpop.permute.xlu0 %956
    %958 = vrot.lane.b32.xlu0 %v789, 8
    %v959 = vpop.permute.xlu0 %958
    %960 = vrot.lane.b32.xlu0 %v790, 8
    %v961 = vpop.permute.xlu0 %960
    %962 = vrot.lane.b32.xlu0 %v791, 8
    %v963 = vpop.permute.xlu0 %962
    %964 = vrot.lane.b32.xlu0 %v792, 8
    %v965 = vpop.permute.xlu0 %964
    %966 = vrot.lane.b32.xlu0 %v793, 8
    %v967 = vpop.permute.xlu0 %966
    %968 = vrot.lane.b32.xlu0 %v794, 8
    %v969 = vpop.permute.xlu0 %968
    %970 = vrot.lane.b32.xlu0 %v795, 8
    %v971 = vpop.permute.xlu0 %970
    %972 = vrot.lane.b32.xlu0 %v796, 8
    %v973 = vpop.permute.xlu0 %972
    %974 = vrot.lane.b32.xlu0 %v797, 8
    %v975 = vpop.permute.xlu0 %974
    %976 = vrot.lane.b32.xlu0 %v798, 8
    %v977 = vpop.permute.xlu0 %976
    %978 = vrot.lane.b32.xlu0 %v799, 8
    %v979 = vpop.permute.xlu0 %978
    %980 = vrot.lane.b32.xlu0 %v800, 8
    %v981 = vpop.permute.xlu0 %980
    %982 = vrot.lane.b32.xlu0 %v801, 8
    %v983 = vpop.permute.xlu0 %982
    %984 = vrot.lane.b32.xlu0 %v802, 8
    %v985 = vpop.permute.xlu0 %984
    %986 = vrot.lane.b32.xlu0 %v803, 8
    %v987 = vpop.permute.xlu0 %986
    %988 = vrot.lane.b32.xlu0 %v804, 8
    %v989 = vpop.permute.xlu0 %988
    %990 = vrot.lane.b32.xlu0 %v805, 8
    %v991 = vpop.permute.xlu0 %990
    %992 = vrot.lane.b32.xlu0 %v806, 8
    %v993 = vpop.permute.xlu0 %992
    %994 = vrot.lane.b32.xlu0 %v807, 8
    %v995 = vpop.permute.xlu0 %994
    %996 = vrot.lane.b32.xlu0 %v808, 8
    %v997 = vpop.permute.xlu0 %996
    %998 = vrot.lane.b32.xlu0 %v809, 8
    %v999 = vpop.permute.xlu0 %998
    %1000 = vrot.lane.b32.xlu0 %v810, 8
    %v1001 = vpop.permute.xlu0 %1000
    %1002 = vrot.lane.b32.xlu0 %v811, 8
    %v1003 = vpop.permute.xlu0 %1002
    %vm1068 = vcmask 97344
    %1069 = vst.msk [vmem:[#allocation3] sm:$0xff] %vm1068, %v877
    %1070 = vst.msk [vmem:[#allocation3 + $0x8] sm:$0xff] %vm1068, %v879
    %1071 = vst.msk [vmem:[#allocation3 + $0x10] sm:$0xff] %vm1068, %v881
    %1072 = vst.msk [vmem:[#allocation3 + $0x18] sm:$0xff] %vm1068, %v883
    %1073 = vst.msk [vmem:[#allocation3 + $0x20] sm:$0xff] %vm1068, %v885
    %1074 = vst.msk [vmem:[#allocation3 + $0x28] sm:$0xff] %vm1068, %v887
    %1075 = vst.msk [vmem:[#allocation3 + $0x30] sm:$0xff] %vm1068, %v889
    %1076 = vst.msk [vmem:[#allocation3 + $0x38] sm:$0xff] %vm1068, %v891
    %1077 = vst.msk [vmem:[#allocation3 + $0x40] sm:$0xff] %vm1068, %v893
    %1078 = vst.msk [vmem:[#allocation3 + $0x48] sm:$0xff] %vm1068, %v895
    %1079 = vst.msk [vmem:[#allocation3 + $0x50] sm:$0xff] %vm1068, %v897
    %1080 = vst.msk [vmem:[#allocation3 + $0x58] sm:$0xff] %vm1068, %v899
    %1081 = vst.msk [vmem:[#allocation3 + $0x60] sm:$0xff] %vm1068, %v901
    %1082 = vst.msk [vmem:[#allocation3 + $0x68] sm:$0xff] %vm1068, %v903
    %1083 = vst.msk [vmem:[#allocation3 + $0x70] sm:$0xff] %vm1068, %v905
    %1084 = vst.msk [vmem:[#allocation3 + $0x78] sm:$0xff] %vm1068, %v907
    %1085 = vst.msk [vmem:[#allocation3 + $0x80] sm:$0xff] %vm1068, %v909
    %1086 = vst.msk [vmem:[#allocation3 + $0x88] sm:$0xff] %vm1068, %v911
    %1087 = vst.msk [vmem:[#allocation3 + $0x90] sm:$0xff] %vm1068, %v913
    %1088 = vst.msk [vmem:[#allocation3 + $0x98] sm:$0xff] %vm1068, %v915
    %1089 = vst.msk [vmem:[#allocation3 + $0xa0] sm:$0xff] %vm1068, %v917
    %1090 = vst.msk [vmem:[#allocation3 + $0xa8] sm:$0xff] %vm1068, %v919
    %1091 = vst.msk [vmem:[#allocation3 + $0xb0] sm:$0xff] %vm1068, %v921
    %1092 = vst.msk [vmem:[#allocation3 + $0xb8] sm:$0xff] %vm1068, %v923
    %1093 = vst.msk [vmem:[#allocation3 + $0xc0] sm:$0xff] %vm1068, %v925
    %1094 = vst.msk [vmem:[#allocation3 + $0xc8] sm:$0xff] %vm1068, %v927
    %1095 = vst.msk [vmem:[#allocation3 + $0xd0] sm:$0xff] %vm1068, %v929
    %1096 = vst.msk [vmem:[#allocation3 + $0xd8] sm:$0xff] %vm1068, %v931
    %1097 = vst.msk [vmem:[#allocation3 + $0xe0] sm:$0xff] %vm1068, %v933
    %1098 = vst.msk [vmem:[#allocation3 + $0xe8] sm:$0xff] %vm1068, %v935
    %1099 = vst.msk [vmem:[#allocation3 + $0xf0] sm:$0xff] %vm1068, %v937
    %1100 = vst.msk [vmem:[#allocation3 + $0xf8] sm:$0xff] %vm1068, %v939
    %1101 = vst.msk [vmem:[#allocation3 + $0x100] sm:$0xff] %vm1068, %v941
    %1102 = vst.msk [vmem:[#allocation3 + $0x108] sm:$0xff] %vm1068, %v943
    %1103 = vst.msk [vmem:[#allocation3 + $0x110] sm:$0xff] %vm1068, %v945
    %1104 = vst.msk [vmem:[#allocation3 + $0x118] sm:$0xff] %vm1068, %v947
    %1105 = vst.msk [vmem:[#allocation3 + $0x120] sm:$0xff] %vm1068, %v949
    %1106 = vst.msk [vmem:[#allocation3 + $0x128] sm:$0xff] %vm1068, %v951
    %1107 = vst.msk [vmem:[#allocation3 + $0x130] sm:$0xff] %vm1068, %v953
    %1108 = vst.msk [vmem:[#allocation3 + $0x138] sm:$0xff] %vm1068, %v955
    %1109 = vst.msk [vmem:[#allocation3 + $0x140] sm:$0xff] %vm1068, %v957
    %1110 = vst.msk [vmem:[#allocation3 + $0x148] sm:$0xff] %vm1068, %v959
    %1111 = vst.msk [vmem:[#allocation3 + $0x150] sm:$0xff] %vm1068, %v961
    %1112 = vst.msk [vmem:[#allocation3 + $0x158] sm:$0xff] %vm1068, %v963
    %1113 = vst.msk [vmem:[#allocation3 + $0x160] sm:$0xff] %vm1068, %v965
    %1114 = vst.msk [vmem:[#allocation3 + $0x168] sm:$0xff] %vm1068, %v967
    %1115 = vst.msk [vmem:[#allocation3 + $0x170] sm:$0xff] %vm1068, %v969
    %1116 = vst.msk [vmem:[#allocation3 + $0x178] sm:$0xff] %vm1068, %v971
    %1117 = vst.msk [vmem:[#allocation3 + $0x180] sm:$0xff] %vm1068, %v973
    %1118 = vst.msk [vmem:[#allocation3 + $0x188] sm:$0xff] %vm1068, %v975
    %1119 = vst.msk [vmem:[#allocation3 + $0x190] sm:$0xff] %vm1068, %v977
    %1120 = vst.msk [vmem:[#allocation3 + $0x198] sm:$0xff] %vm1068, %v979
    %1121 = vst.msk [vmem:[#allocation3 + $0x1a0] sm:$0xff] %vm1068, %v981
    %1122 = vst.msk [vmem:[#allocation3 + $0x1a8] sm:$0xff] %vm1068, %v983
    %1123 = vst.msk [vmem:[#allocation3 + $0x1b0] sm:$0xff] %vm1068, %v985
    %1124 = vst.msk [vmem:[#allocation3 + $0x1b8] sm:$0xff] %vm1068, %v987
    %1125 = vst.msk [vmem:[#allocation3 + $0x1c0] sm:$0xff] %vm1068, %v989
    %1126 = vst.msk [vmem:[#allocation3 + $0x1c8] sm:$0xff] %vm1068, %v991
    %1127 = vst.msk [vmem:[#allocation3 + $0x1d0] sm:$0xff] %vm1068, %v993
    %1128 = vst.msk [vmem:[#allocation3 + $0x1d8] sm:$0xff] %vm1068, %v995
    %1129 = vst.msk [vmem:[#allocation3 + $0x1e0] sm:$0xff] %vm1068, %v997
    %1130 = vst.msk [vmem:[#allocation3 + $0x1e8] sm:$0xff] %vm1068, %v999
    %1131 = vst.msk [vmem:[#allocation3 + $0x1f0] sm:$0xff] %vm1068, %v1001
    %1132 = vst.msk [vmem:[#allocation3 + $0x1f8] sm:$0xff] %vm1068, %v1003
    %v1133 = vld [vmem:[%s170] sm:$0xff]
    %v1134 = vld [vmem:[%s170 + $0x8] sm:$0xff]
    %v1135 = vld [vmem:[%s170 + $0x18] sm:$0xff]
    %v1136 = vld [vmem:[%s170 + $0x20] sm:$0xff]
    %v1137 = vld [vmem:[%s170 + $0x30] sm:$0xff]
    %v1138 = vld [vmem:[%s170 + $0x38] sm:$0xff]
    %v1139 = vld [vmem:[%s170 + $0x48] sm:$0xff]
    %v1140 = vld [vmem:[%s170 + $0x50] sm:$0xff]
    %v1141 = vld [vmem:[%s170 + $0x60] sm:$0xff]
    %v1142 = vld [vmem:[%s170 + $0x68] sm:$0xff]
    %v1143 = vld [vmem:[%s170 + $0x78] sm:$0xff]
    %v1144 = vld [vmem:[%s170 + $0x80] sm:$0xff]
    %v1145 = vld [vmem:[%s170 + $0x90] sm:$0xff]
    %v1146 = vld [vmem:[%s170 + $0x98] sm:$0xff]
    %v1147 = vld [vmem:[%s170 + $0xa8] sm:$0xff]
    %v1148 = vld [vmem:[%s170 + $0xb0] sm:$0xff]
    %v1149 = vld [vmem:[%s170 + $0xc0] sm:$0xff]
    %v1150 = vld [vmem:[%s170 + $0xc8] sm:$0xff]
    %v1151 = vld [vmem:[%s170 + $0xd8] sm:$0xff]
    %v1152 = vld [vmem:[%s170 + $0xe0] sm:$0xff]
    %v1153 = vld [vmem:[%s170 + $0xf0] sm:$0xff]
    %v1154 = vld [vmem:[%s170 + $0xf8] sm:$0xff]
    %v1155 = vld [vmem:[%s170 + $0x108] sm:$0xff]
    %v1156 = vld [vmem:[%s170 + $0x110] sm:$0xff]
    %v1157 = vld [vmem:[%s170 + $0x120] sm:$0xff]
    %v1158 = vld [vmem:[%s170 + $0x128] sm:$0xff]
    %v1159 = vld [vmem:[%s170 + $0x138] sm:$0xff]
    %v1160 = vld [vmem:[%s170 + $0x140] sm:$0xff]
    %v1161 = vld [vmem:[%s170 + $0x150] sm:$0xff]
    %v1162 = vld [vmem:[%s170 + $0x158] sm:$0xff]
    %v1163 = vld [vmem:[%s170 + $0x168] sm:$0xff]
    %v1164 = vld [vmem:[%s170 + $0x170] sm:$0xff]
    %v1165 = vld [vmem:[%s170 + $0x1b0] sm:$0xff]
    %v1166 = vld [vmem:[%s170 + $0x1b8] sm:$0xff]
    %v1167 = vld [vmem:[%s170 + $0x1c8] sm:$0xff]
    %v1168 = vld [vmem:[%s170 + $0x1d0] sm:$0xff]
    %v1169 = vld [vmem:[%s170 + $0x1e0] sm:$0xff]
    %v1170 = vld [vmem:[%s170 + $0x1e8] sm:$0xff]
    %v1171 = vld [vmem:[%s170 + $0x1f8] sm:$0xff]
    %v1172 = vld [vmem:[%s170 + $0x200] sm:$0xff]
    %v1173 = vld [vmem:[%s170 + $0x210] sm:$0xff]
    %v1174 = vld [vmem:[%s170 + $0x218] sm:$0xff]
    %v1175 = vld [vmem:[%s170 + $0x228] sm:$0xff]
    %v1176 = vld [vmem:[%s170 + $0x230] sm:$0xff]
    %v1177 = vld [vmem:[%s170 + $0x240] sm:$0xff]
    %v1178 = vld [vmem:[%s170 + $0x248] sm:$0xff]
    %v1179 = vld [vmem:[%s170 + $0x258] sm:$0xff]
    %v1180 = vld [vmem:[%s170 + $0x260] sm:$0xff]
    %v1181 = vld [vmem:[%s170 + $0x270] sm:$0xff]
    %v1182 = vld [vmem:[%s170 + $0x278] sm:$0xff]
    %v1183 = vld [vmem:[%s170 + $0x288] sm:$0xff]
    %v1184 = vld [vmem:[%s170 + $0x290] sm:$0xff]
    %v1185 = vld [vmem:[%s170 + $0x2a0] sm:$0xff]
    %v1186 = vld [vmem:[%s170 + $0x2a8] sm:$0xff]
    %v1187 = vld [vmem:[%s170 + $0x2b8] sm:$0xff]
    %v1188 = vld [vmem:[%s170 + $0x2c0] sm:$0xff]
    %v1189 = vld [vmem:[%s170 + $0x2d0] sm:$0xff]
    %v1190 = vld [vmem:[%s170 + $0x2d8] sm:$0xff]
    %v1191 = vld [vmem:[%s170 + $0x2e8] sm:$0xff]
    %v1192 = vld [vmem:[%s170 + $0x2f0] sm:$0xff]
    %v1193 = vld [vmem:[%s170 + $0x300] sm:$0xff]
    %v1194 = vld [vmem:[%s170 + $0x308] sm:$0xff]
    %v1195 = vld [vmem:[%s170 + $0x318] sm:$0xff]
    %v1196 = vld [vmem:[%s170 + $0x320] sm:$0xff]
    %1261 = vrot.lane.b32.xlu0 %v1133, 12
    %v1262 = vpop.permute.xlu0 %1261
    %1263 = vrot.lane.b32.xlu0 %v1134, 12
    %v1264 = vpop.permute.xlu0 %1263
    %1265 = vrot.lane.b32.xlu0 %v1135, 12
    %v1266 = vpop.permute.xlu0 %1265
    %1267 = vrot.lane.b32.xlu0 %v1136, 12
    %v1268 = vpop.permute.xlu0 %1267
    %1269 = vrot.lane.b32.xlu0 %v1137, 12
    %v1270 = vpop.permute.xlu0 %1269
    %1271 = vrot.lane.b32.xlu0 %v1138, 12
    %v1272 = vpop.permute.xlu0 %1271
    %1273 = vrot.lane.b32.xlu0 %v1139, 12
    %v1274 = vpop.permute.xlu0 %1273
    %1275 = vrot.lane.b32.xlu0 %v1140, 12
    %v1276 = vpop.permute.xlu0 %1275
    %1277 = vrot.lane.b32.xlu0 %v1141, 12
    %v1278 = vpop.permute.xlu0 %1277
    %1279 = vrot.lane.b32.xlu0 %v1142, 12
    %v1280 = vpop.permute.xlu0 %1279
    %1281 = vrot.lane.b32.xlu0 %v1143, 12
    %v1282 = vpop.permute.xlu0 %1281
    %1283 = vrot.lane.b32.xlu0 %v1144, 12
    %v1284 = vpop.permute.xlu0 %1283
    %1285 = vrot.lane.b32.xlu0 %v1145, 12
    %v1286 = vpop.permute.xlu0 %1285
    %1287 = vrot.lane.b32.xlu0 %v1146, 12
    %v1288 = vpop.permute.xlu0 %1287
    %1289 = vrot.lane.b32.xlu0 %v1147, 12
    %v1290 = vpop.permute.xlu0 %1289
    %1291 = vrot.lane.b32.xlu0 %v1148, 12
    %v1292 = vpop.permute.xlu0 %1291
    %1293 = vrot.lane.b32.xlu0 %v1149, 12
    %v1294 = vpop.permute.xlu0 %1293
    %1295 = vrot.lane.b32.xlu0 %v1150, 12
    %v1296 = vpop.permute.xlu0 %1295
    %1297 = vrot.lane.b32.xlu0 %v1151, 12
    %v1298 = vpop.permute.xlu0 %1297
    %1299 = vrot.lane.b32.xlu0 %v1152, 12
    %v1300 = vpop.permute.xlu0 %1299
    %1301 = vrot.lane.b32.xlu0 %v1153, 12
    %v1302 = vpop.permute.xlu0 %1301
    %1303 = vrot.lane.b32.xlu0 %v1154, 12
    %v1304 = vpop.permute.xlu0 %1303
    %1305 = vrot.lane.b32.xlu0 %v1155, 12
    %v1306 = vpop.permute.xlu0 %1305
    %1307 = vrot.lane.b32.xlu0 %v1156, 12
    %v1308 = vpop.permute.xlu0 %1307
    %1309 = vrot.lane.b32.xlu0 %v1157, 12
    %v1310 = vpop.permute.xlu0 %1309
    %1311 = vrot.lane.b32.xlu0 %v1158, 12
    %v1312 = vpop.permute.xlu0 %1311
    %1313 = vrot.lane.b32.xlu0 %v1159, 12
    %v1314 = vpop.permute.xlu0 %1313
    %1315 = vrot.lane.b32.xlu0 %v1160, 12
    %v1316 = vpop.permute.xlu0 %1315
    %1317 = vrot.lane.b32.xlu0 %v1161, 12
    %v1318 = vpop.permute.xlu0 %1317
    %1319 = vrot.lane.b32.xlu0 %v1162, 12
    %v1320 = vpop.permute.xlu0 %1319
    %1321 = vrot.lane.b32.xlu0 %v1163, 12
    %v1322 = vpop.permute.xlu0 %1321
    %1323 = vrot.lane.b32.xlu0 %v1164, 12
    %v1324 = vpop.permute.xlu0 %1323
    %1325 = vrot.lane.b32.xlu0 %v1165, 12
    %v1326 = vpop.permute.xlu0 %1325
    %1327 = vrot.lane.b32.xlu0 %v1166, 12
    %v1328 = vpop.permute.xlu0 %1327
    %1329 = vrot.lane.b32.xlu0 %v1167, 12
    %v1330 = vpop.permute.xlu0 %1329
    %1331 = vrot.lane.b32.xlu0 %v1168, 12
    %v1332 = vpop.permute.xlu0 %1331
    %1333 = vrot.lane.b32.xlu0 %v1169, 12
    %v1334 = vpop.permute.xlu0 %1333
    %1335 = vrot.lane.b32.xlu0 %v1170, 12
    %v1336 = vpop.permute.xlu0 %1335
    %1337 = vrot.lane.b32.xlu0 %v1171, 12
    %v1338 = vpop.permute.xlu0 %1337
    %1339 = vrot.lane.b32.xlu0 %v1172, 12
    %v1340 = vpop.permute.xlu0 %1339
    %1341 = vrot.lane.b32.xlu0 %v1173, 12
    %v1342 = vpop.permute.xlu0 %1341
    %1343 = vrot.lane.b32.xlu0 %v1174, 12
    %v1344 = vpop.permute.xlu0 %1343
    %1345 = vrot.lane.b32.xlu0 %v1175, 12
    %v1346 = vpop.permute.xlu0 %1345
    %1347 = vrot.lane.b32.xlu0 %v1176, 12
    %v1348 = vpop.permute.xlu0 %1347
    %1349 = vrot.lane.b32.xlu0 %v1177, 12
    %v1350 = vpop.permute.xlu0 %1349
    %1351 = vrot.lane.b32.xlu0 %v1178, 12
    %v1352 = vpop.permute.xlu0 %1351
    %1353 = vrot.lane.b32.xlu0 %v1179, 12
    %v1354 = vpop.permute.xlu0 %1353
    %1355 = vrot.lane.b32.xlu0 %v1180, 12
    %v1356 = vpop.permute.xlu0 %1355
    %1357 = vrot.lane.b32.xlu0 %v1181, 12
    %v1358 = vpop.permute.xlu0 %1357
    %1359 = vrot.lane.b32.xlu0 %v1182, 12
    %v1360 = vpop.permute.xlu0 %1359
    %1361 = vrot.lane.b32.xlu0 %v1183, 12
    %v1362 = vpop.permute.xlu0 %1361
    %1363 = vrot.lane.b32.xlu0 %v1184, 12
    %v1364 = vpop.permute.xlu0 %1363
    %1365 = vrot.lane.b32.xlu0 %v1185, 12
    %v1366 = vpop.permute.xlu0 %1365
    %1367 = vrot.lane.b32.xlu0 %v1186, 12
    %v1368 = vpop.permute.xlu0 %1367
    %1369 = vrot.lane.b32.xlu0 %v1187, 12
    %v1370 = vpop.permute.xlu0 %1369
    %1371 = vrot.lane.b32.xlu0 %v1188, 12
    %v1372 = vpop.permute.xlu0 %1371
    %1373 = vrot.lane.b32.xlu0 %v1189, 12
    %v1374 = vpop.permute.xlu0 %1373
    %1375 = vrot.lane.b32.xlu0 %v1190, 12
    %v1376 = vpop.permute.xlu0 %1375
    %1377 = vrot.lane.b32.xlu0 %v1191, 12
    %v1378 = vpop.permute.xlu0 %1377
    %1379 = vrot.lane.b32.xlu0 %v1192, 12
    %v1380 = vpop.permute.xlu0 %1379
    %1381 = vrot.lane.b32.xlu0 %v1193, 12
    %v1382 = vpop.permute.xlu0 %1381
    %1383 = vrot.lane.b32.xlu0 %v1194, 12
    %v1384 = vpop.permute.xlu0 %1383
    %1385 = vrot.lane.b32.xlu0 %v1195, 12
    %v1386 = vpop.permute.xlu0 %1385
    %1387 = vrot.lane.b32.xlu0 %v1196, 12
    %v1388 = vpop.permute.xlu0 %1387
    %vm1453 = vcmask 130144
    %1454 = vst.msk [vmem:[#allocation3] sm:$0xff] %vm1453, %v1262
    %1455 = vst.msk [vmem:[#allocation3 + $0x8] sm:$0xff] %vm1453, %v1264
    %1456 = vst.msk [vmem:[#allocation3 + $0x10] sm:$0xff] %vm1453, %v1266
    %1457 = vst.msk [vmem:[#allocation3 + $0x18] sm:$0xff] %vm1453, %v1268
    %1458 = vst.msk [vmem:[#allocation3 + $0x20] sm:$0xff] %vm1453, %v1270
    %1459 = vst.msk [vmem:[#allocation3 + $0x28] sm:$0xff] %vm1453, %v1272
    %1460 = vst.msk [vmem:[#allocation3 + $0x30] sm:$0xff] %vm1453, %v1274
    %1461 = vst.msk [vmem:[#allocation3 + $0x38] sm:$0xff] %vm1453, %v1276
    %1462 = vst.msk [vmem:[#allocation3 + $0x40] sm:$0xff] %vm1453, %v1278
    %1463 = vst.msk [vmem:[#allocation3 + $0x48] sm:$0xff] %vm1453, %v1280
    %1464 = vst.msk [vmem:[#allocation3 + $0x50] sm:$0xff] %vm1453, %v1282
    %1465 = vst.msk [vmem:[#allocation3 + $0x58] sm:$0xff] %vm1453, %v1284
    %1466 = vst.msk [vmem:[#allocation3 + $0x60] sm:$0xff] %vm1453, %v1286
    %1467 = vst.msk [vmem:[#allocation3 + $0x68] sm:$0xff] %vm1453, %v1288
    %1468 = vst.msk [vmem:[#allocation3 + $0x70] sm:$0xff] %vm1453, %v1290
    %1469 = vst.msk [vmem:[#allocation3 + $0x78] sm:$0xff] %vm1453, %v1292
    %1470 = vst.msk [vmem:[#allocation3 + $0x80] sm:$0xff] %vm1453, %v1294
    %1471 = vst.msk [vmem:[#allocation3 + $0x88] sm:$0xff] %vm1453, %v1296
    %1472 = vst.msk [vmem:[#allocation3 + $0x90] sm:$0xff] %vm1453, %v1298
    %1473 = vst.msk [vmem:[#allocation3 + $0x98] sm:$0xff] %vm1453, %v1300
    %1474 = vst.msk [vmem:[#allocation3 + $0xa0] sm:$0xff] %vm1453, %v1302
    %1475 = vst.msk [vmem:[#allocation3 + $0xa8] sm:$0xff] %vm1453, %v1304
    %1476 = vst.msk [vmem:[#allocation3 + $0xb0] sm:$0xff] %vm1453, %v1306
    %1477 = vst.msk [vmem:[#allocation3 + $0xb8] sm:$0xff] %vm1453, %v1308
    %1478 = vst.msk [vmem:[#allocation3 + $0xc0] sm:$0xff] %vm1453, %v1310
    %1479 = vst.msk [vmem:[#allocation3 + $0xc8] sm:$0xff] %vm1453, %v1312
    %1480 = vst.msk [vmem:[#allocation3 + $0xd0] sm:$0xff] %vm1453, %v1314
    %1481 = vst.msk [vmem:[#allocation3 + $0xd8] sm:$0xff] %vm1453, %v1316
    %1482 = vst.msk [vmem:[#allocation3 + $0xe0] sm:$0xff] %vm1453, %v1318
    %1483 = vst.msk [vmem:[#allocation3 + $0xe8] sm:$0xff] %vm1453, %v1320
    %1484 = vst.msk [vmem:[#allocation3 + $0xf0] sm:$0xff] %vm1453, %v1322
    %1485 = vst.msk [vmem:[#allocation3 + $0xf8] sm:$0xff] %vm1453, %v1324
    %1486 = vst.msk [vmem:[#allocation3 + $0x100] sm:$0xff] %vm1453, %v1326
    %1487 = vst.msk [vmem:[#allocation3 + $0x108] sm:$0xff] %vm1453, %v1328
    %1488 = vst.msk [vmem:[#allocation3 + $0x110] sm:$0xff] %vm1453, %v1330
    %1489 = vst.msk [vmem:[#allocation3 + $0x118] sm:$0xff] %vm1453, %v1332
    %1490 = vst.msk [vmem:[#allocation3 + $0x120] sm:$0xff] %vm1453, %v1334
    %1491 = vst.msk [vmem:[#allocation3 + $0x128] sm:$0xff] %vm1453, %v1336
    %1492 = vst.msk [vmem:[#allocation3 + $0x130] sm:$0xff] %vm1453, %v1338
    %1493 = vst.msk [vmem:[#allocation3 + $0x138] sm:$0xff] %vm1453, %v1340
    %1494 = vst.msk [vmem:[#allocation3 + $0x140] sm:$0xff] %vm1453, %v1342
    %1495 = vst.msk [vmem:[#allocation3 + $0x148] sm:$0xff] %vm1453, %v1344
    %1496 = vst.msk [vmem:[#allocation3 + $0x150] sm:$0xff] %vm1453, %v1346
    %1497 = vst.msk [vmem:[#allocation3 + $0x158] sm:$0xff] %vm1453, %v1348
    %1498 = vst.msk [vmem:[#allocation3 + $0x160] sm:$0xff] %vm1453, %v1350
    %1499 = vst.msk [vmem:[#allocation3 + $0x168] sm:$0xff] %vm1453, %v1352
    %1500 = vst.msk [vmem:[#allocation3 + $0x170] sm:$0xff] %vm1453, %v1354
    %1501 = vst.msk [vmem:[#allocation3 + $0x178] sm:$0xff] %vm1453, %v1356
    %1502 = vst.msk [vmem:[#allocation3 + $0x180] sm:$0xff] %vm1453, %v1358
    %1503 = vst.msk [vmem:[#allocation3 + $0x188] sm:$0xff] %vm1453, %v1360
    %1504 = vst.msk [vmem:[#allocation3 + $0x190] sm:$0xff] %vm1453, %v1362
    %1505 = vst.msk [vmem:[#allocation3 + $0x198] sm:$0xff] %vm1453, %v1364
    %1506 = vst.msk [vmem:[#allocation3 + $0x1a0] sm:$0xff] %vm1453, %v1366
    %1507 = vst.msk [vmem:[#allocation3 + $0x1a8] sm:$0xff] %vm1453, %v1368
    %1508 = vst.msk [vmem:[#allocation3 + $0x1b0] sm:$0xff] %vm1453, %v1370
    %1509 = vst.msk [vmem:[#allocation3 + $0x1b8] sm:$0xff] %vm1453, %v1372
    %1510 = vst.msk [vmem:[#allocation3 + $0x1c0] sm:$0xff] %vm1453, %v1374
    %1511 = vst.msk [vmem:[#allocation3 + $0x1c8] sm:$0xff] %vm1453, %v1376
    %1512 = vst.msk [vmem:[#allocation3 + $0x1d0] sm:$0xff] %vm1453, %v1378
    %1513 = vst.msk [vmem:[#allocation3 + $0x1d8] sm:$0xff] %vm1453, %v1380
    %1514 = vst.msk [vmem:[#allocation3 + $0x1e0] sm:$0xff] %vm1453, %v1382
    %1515 = vst.msk [vmem:[#allocation3 + $0x1e8] sm:$0xff] %vm1453, %v1384
    %1516 = vst.msk [vmem:[#allocation3 + $0x1f0] sm:$0xff] %vm1453, %v1386
    %1517 = vst.msk [vmem:[#allocation3 + $0x1f8] sm:$0xff] %vm1453, %v1388
    %v1518 = vld [vmem:[%s170 + $0x1] sm:$0xff]
    %v1519 = vld [vmem:[%s170 + $0x9] sm:$0xff]
    %v1520 = vld [vmem:[%s170 + $0x19] sm:$0xff]
    %v1521 = vld [vmem:[%s170 + $0x21] sm:$0xff]
    %v1522 = vld [vmem:[%s170 + $0x31] sm:$0xff]
    %v1523 = vld [vmem:[%s170 + $0x39] sm:$0xff]
    %v1524 = vld [vmem:[%s170 + $0x49] sm:$0xff]
    %v1525 = vld [vmem:[%s170 + $0x51] sm:$0xff]
    %v1526 = vld [vmem:[%s170 + $0x61] sm:$0xff]
    %v1527 = vld [vmem:[%s170 + $0x69] sm:$0xff]
    %v1528 = vld [vmem:[%s170 + $0x79] sm:$0xff]
    %v1529 = vld [vmem:[%s170 + $0x81] sm:$0xff]
    %v1530 = vld [vmem:[%s170 + $0x91] sm:$0xff]
    %v1531 = vld [vmem:[%s170 + $0x99] sm:$0xff]
    %v1532 = vld [vmem:[%s170 + $0xa9] sm:$0xff]
    %v1533 = vld [vmem:[%s170 + $0xb1] sm:$0xff]
    %v1534 = vld [vmem:[%s170 + $0xc1] sm:$0xff]
    %v1535 = vld [vmem:[%s170 + $0xc9] sm:$0xff]
    %v1536 = vld [vmem:[%s170 + $0xd9] sm:$0xff]
    %v1537 = vld [vmem:[%s170 + $0xe1] sm:$0xff]
    %v1538 = vld [vmem:[%s170 + $0xf1] sm:$0xff]
    %v1539 = vld [vmem:[%s170 + $0xf9] sm:$0xff]
    %v1540 = vld [vmem:[%s170 + $0x109] sm:$0xff]
    %v1541 = vld [vmem:[%s170 + $0x111] sm:$0xff]
    %v1542 = vld [vmem:[%s170 + $0x121] sm:$0xff]
    %v1543 = vld [vmem:[%s170 + $0x129] sm:$0xff]
    %v1544 = vld [vmem:[%s170 + $0x139] sm:$0xff]
    %v1545 = vld [vmem:[%s170 + $0x141] sm:$0xff]
    %v1546 = vld [vmem:[%s170 + $0x151] sm:$0xff]
    %v1547 = vld [vmem:[%s170 + $0x159] sm:$0xff]
    %v1548 = vld [vmem:[%s170 + $0x169] sm:$0xff]
    %v1549 = vld [vmem:[%s170 + $0x171] sm:$0xff]
    %v1550 = vld [vmem:[%s170 + $0x1b1] sm:$0xff]
    %v1551 = vld [vmem:[%s170 + $0x1b9] sm:$0xff]
    %v1552 = vld [vmem:[%s170 + $0x1c9] sm:$0xff]
    %v1553 = vld [vmem:[%s170 + $0x1d1] sm:$0xff]
    %v1554 = vld [vmem:[%s170 + $0x1e1] sm:$0xff]
    %v1555 = vld [vmem:[%s170 + $0x1e9] sm:$0xff]
    %v1556 = vld [vmem:[%s170 + $0x1f9] sm:$0xff]
    %v1557 = vld [vmem:[%s170 + $0x201] sm:$0xff]
    %v1558 = vld [vmem:[%s170 + $0x211] sm:$0xff]
    %v1559 = vld [vmem:[%s170 + $0x219] sm:$0xff]
    %v1560 = vld [vmem:[%s170 + $0x229] sm:$0xff]
    %v1561 = vld [vmem:[%s170 + $0x231] sm:$0xff]
    %v1562 = vld [vmem:[%s170 + $0x241] sm:$0xff]
    %v1563 = vld [vmem:[%s170 + $0x249] sm:$0xff]
    %v1564 = vld [vmem:[%s170 + $0x259] sm:$0xff]
    %v1565 = vld [vmem:[%s170 + $0x261] sm:$0xff]
    %v1566 = vld [vmem:[%s170 + $0x271] sm:$0xff]
    %v1567 = vld [vmem:[%s170 + $0x279] sm:$0xff]
    %v1568 = vld [vmem:[%s170 + $0x289] sm:$0xff]
    %v1569 = vld [vmem:[%s170 + $0x291] sm:$0xff]
    %v1570 = vld [vmem:[%s170 + $0x2a1] sm:$0xff]
    %v1571 = vld [vmem:[%s170 + $0x2a9] sm:$0xff]
    %v1572 = vld [vmem:[%s170 + $0x2b9] sm:$0xff]
    %v1573 = vld [vmem:[%s170 + $0x2c1] sm:$0xff]
    %v1574 = vld [vmem:[%s170 + $0x2d1] sm:$0xff]
    %v1575 = vld [vmem:[%s170 + $0x2d9] sm:$0xff]
    %v1576 = vld [vmem:[%s170 + $0x2e9] sm:$0xff]
    %v1577 = vld [vmem:[%s170 + $0x2f1] sm:$0xff]
    %v1578 = vld [vmem:[%s170 + $0x301] sm:$0xff]
    %v1579 = vld [vmem:[%s170 + $0x309] sm:$0xff]
    %v1580 = vld [vmem:[%s170 + $0x319] sm:$0xff]
    %v1581 = vld [vmem:[%s170 + $0x321] sm:$0xff]
    %1646 = vrot.lane.b32.xlu0 %v1518, 16
    %v1647 = vpop.permute.xlu0 %1646
    %1648 = vrot.lane.b32.xlu0 %v1519, 16
    %v1649 = vpop.permute.xlu0 %1648
    %1650 = vrot.lane.b32.xlu0 %v1520, 16
    %v1651 = vpop.permute.xlu0 %1650
    %1652 = vrot.lane.b32.xlu0 %v1521, 16
    %v1653 = vpop.permute.xlu0 %1652
    %1654 = vrot.lane.b32.xlu0 %v1522, 16
    %v1655 = vpop.permute.xlu0 %1654
    %1656 = vrot.lane.b32.xlu0 %v1523, 16
    %v1657 = vpop.permute.xlu0 %1656
    %1658 = vrot.lane.b32.xlu0 %v1524, 16
    %v1659 = vpop.permute.xlu0 %1658
    %1660 = vrot.lane.b32.xlu0 %v1525, 16
    %v1661 = vpop.permute.xlu0 %1660
    %1662 = vrot.lane.b32.xlu0 %v1526, 16
    %v1663 = vpop.permute.xlu0 %1662
    %1664 = vrot.lane.b32.xlu0 %v1527, 16
    %v1665 = vpop.permute.xlu0 %1664
    %1666 = vrot.lane.b32.xlu0 %v1528, 16
    %v1667 = vpop.permute.xlu0 %1666
    %1668 = vrot.lane.b32.xlu0 %v1529, 16
    %v1669 = vpop.permute.xlu0 %1668
    %1670 = vrot.lane.b32.xlu0 %v1530, 16
    %v1671 = vpop.permute.xlu0 %1670
    %1672 = vrot.lane.b32.xlu0 %v1531, 16
    %v1673 = vpop.permute.xlu0 %1672
    %1674 = vrot.lane.b32.xlu0 %v1532, 16
    %v1675 = vpop.permute.xlu0 %1674
    %1676 = vrot.lane.b32.xlu0 %v1533, 16
    %v1677 = vpop.permute.xlu0 %1676
    %1678 = vrot.lane.b32.xlu0 %v1534, 16
    %v1679 = vpop.permute.xlu0 %1678
    %1680 = vrot.lane.b32.xlu0 %v1535, 16
    %v1681 = vpop.permute.xlu0 %1680
    %1682 = vrot.lane.b32.xlu0 %v1536, 16
    %v1683 = vpop.permute.xlu0 %1682
    %1684 = vrot.lane.b32.xlu0 %v1537, 16
    %v1685 = vpop.permute.xlu0 %1684
    %1686 = vrot.lane.b32.xlu0 %v1538, 16
    %v1687 = vpop.permute.xlu0 %1686
    %1688 = vrot.lane.b32.xlu0 %v1539, 16
    %v1689 = vpop.permute.xlu0 %1688
    %1690 = vrot.lane.b32.xlu0 %v1540, 16
    %v1691 = vpop.permute.xlu0 %1690
    %1692 = vrot.lane.b32.xlu0 %v1541, 16
    %v1693 = vpop.permute.xlu0 %1692
    %1694 = vrot.lane.b32.xlu0 %v1542, 16
    %v1695 = vpop.permute.xlu0 %1694
    %1696 = vrot.lane.b32.xlu0 %v1543, 16
    %v1697 = vpop.permute.xlu0 %1696
    %1698 = vrot.lane.b32.xlu0 %v1544, 16
    %v1699 = vpop.permute.xlu0 %1698
    %1700 = vrot.lane.b32.xlu0 %v1545, 16
    %v1701 = vpop.permute.xlu0 %1700
    %1702 = vrot.lane.b32.xlu0 %v1546, 16
    %v1703 = vpop.permute.xlu0 %1702
    %1704 = vrot.lane.b32.xlu0 %v1547, 16
    %v1705 = vpop.permute.xlu0 %1704
    %1706 = vrot.lane.b32.xlu0 %v1548, 16
    %v1707 = vpop.permute.xlu0 %1706
    %1708 = vrot.lane.b32.xlu0 %v1549, 16
    %v1709 = vpop.permute.xlu0 %1708
    %1710 = vrot.lane.b32.xlu0 %v1550, 16
    %v1711 = vpop.permute.xlu0 %1710
    %1712 = vrot.lane.b32.xlu0 %v1551, 16
    %v1713 = vpop.permute.xlu0 %1712
    %1714 = vrot.lane.b32.xlu0 %v1552, 16
    %v1715 = vpop.permute.xlu0 %1714
    %1716 = vrot.lane.b32.xlu0 %v1553, 16
    %v1717 = vpop.permute.xlu0 %1716
    %1718 = vrot.lane.b32.xlu0 %v1554, 16
    %v1719 = vpop.permute.xlu0 %1718
    %1720 = vrot.lane.b32.xlu0 %v1555, 16
    %v1721 = vpop.permute.xlu0 %1720
    %1722 = vrot.lane.b32.xlu0 %v1556, 16
    %v1723 = vpop.permute.xlu0 %1722
    %1724 = vrot.lane.b32.xlu0 %v1557, 16
    %v1725 = vpop.permute.xlu0 %1724
    %1726 = vrot.lane.b32.xlu0 %v1558, 16
    %v1727 = vpop.permute.xlu0 %1726
    %1728 = vrot.lane.b32.xlu0 %v1559, 16
    %v1729 = vpop.permute.xlu0 %1728
    %1730 = vrot.lane.b32.xlu0 %v1560, 16
    %v1731 = vpop.permute.xlu0 %1730
    %1732 = vrot.lane.b32.xlu0 %v1561, 16
    %v1733 = vpop.permute.xlu0 %1732
    %1734 = vrot.lane.b32.xlu0 %v1562, 16
    %v1735 = vpop.permute.xlu0 %1734
    %1736 = vrot.lane.b32.xlu0 %v1563, 16
    %v1737 = vpop.permute.xlu0 %1736
    %1738 = vrot.lane.b32.xlu0 %v1564, 16
    %v1739 = vpop.permute.xlu0 %1738
    %1740 = vrot.lane.b32.xlu0 %v1565, 16
    %v1741 = vpop.permute.xlu0 %1740
    %1742 = vrot.lane.b32.xlu0 %v1566, 16
    %v1743 = vpop.permute.xlu0 %1742
    %1744 = vrot.lane.b32.xlu0 %v1567, 16
    %v1745 = vpop.permute.xlu0 %1744
    %1746 = vrot.lane.b32.xlu0 %v1568, 16
    %v1747 = vpop.permute.xlu0 %1746
    %1748 = vrot.lane.b32.xlu0 %v1569, 16
    %v1749 = vpop.permute.xlu0 %1748
    %1750 = vrot.lane.b32.xlu0 %v1570, 16
    %v1751 = vpop.permute.xlu0 %1750
    %1752 = vrot.lane.b32.xlu0 %v1571, 16
    %v1753 = vpop.permute.xlu0 %1752
    %1754 = vrot.lane.b32.xlu0 %v1572, 16
    %v1755 = vpop.permute.xlu0 %1754
    %1756 = vrot.lane.b32.xlu0 %v1573, 16
    %v1757 = vpop.permute.xlu0 %1756
    %1758 = vrot.lane.b32.xlu0 %v1574, 16
    %v1759 = vpop.permute.xlu0 %1758
    %1760 = vrot.lane.b32.xlu0 %v1575, 16
    %v1761 = vpop.permute.xlu0 %1760
    %1762 = vrot.lane.b32.xlu0 %v1576, 16
    %v1763 = vpop.permute.xlu0 %1762
    %1764 = vrot.lane.b32.xlu0 %v1577, 16
    %v1765 = vpop.permute.xlu0 %1764
    %1766 = vrot.lane.b32.xlu0 %v1578, 16
    %v1767 = vpop.permute.xlu0 %1766
    %1768 = vrot.lane.b32.xlu0 %v1579, 16
    %v1769 = vpop.permute.xlu0 %1768
    %1770 = vrot.lane.b32.xlu0 %v1580, 16
    %v1771 = vpop.permute.xlu0 %1770
    %1772 = vrot.lane.b32.xlu0 %v1581, 16
    %v1773 = vpop.permute.xlu0 %1772
    %vm1838 = vcmask 162944
    %1839 = vst.msk [vmem:[#allocation3] sm:$0xff] %vm1838, %v1647
    %1840 = vst.msk [vmem:[#allocation3 + $0x8] sm:$0xff] %vm1838, %v1649
    %1841 = vst.msk [vmem:[#allocation3 + $0x10] sm:$0xff] %vm1838, %v1651
    %1842 = vst.msk [vmem:[#allocation3 + $0x18] sm:$0xff] %vm1838, %v1653
    %1843 = vst.msk [vmem:[#allocation3 + $0x20] sm:$0xff] %vm1838, %v1655
    %1844 = vst.msk [vmem:[#allocation3 + $0x28] sm:$0xff] %vm1838, %v1657
    %1845 = vst.msk [vmem:[#allocation3 + $0x30] sm:$0xff] %vm1838, %v1659
    %1846 = vst.msk [vmem:[#allocation3 + $0x38] sm:$0xff] %vm1838, %v1661
    %1847 = vst.msk [vmem:[#allocation3 + $0x40] sm:$0xff] %vm1838, %v1663
    %1848 = vst.msk [vmem:[#allocation3 + $0x48] sm:$0xff] %vm1838, %v1665
    %1849 = vst.msk [vmem:[#allocation3 + $0x50] sm:$0xff] %vm1838, %v1667
    %1850 = vst.msk [vmem:[#allocation3 + $0x58] sm:$0xff] %vm1838, %v1669
    %1851 = vst.msk [vmem:[#allocation3 + $0x60] sm:$0xff] %vm1838, %v1671
    %1852 = vst.msk [vmem:[#allocation3 + $0x68] sm:$0xff] %vm1838, %v1673
    %1853 = vst.msk [vmem:[#allocation3 + $0x70] sm:$0xff] %vm1838, %v1675
    %1854 = vst.msk [vmem:[#allocation3 + $0x78] sm:$0xff] %vm1838, %v1677
    %1855 = vst.msk [vmem:[#allocation3 + $0x80] sm:$0xff] %vm1838, %v1679
    %1856 = vst.msk [vmem:[#allocation3 + $0x88] sm:$0xff] %vm1838, %v1681
    %1857 = vst.msk [vmem:[#allocation3 + $0x90] sm:$0xff] %vm1838, %v1683
    %1858 = vst.msk [vmem:[#allocation3 + $0x98] sm:$0xff] %vm1838, %v1685
    %1859 = vst.msk [vmem:[#allocation3 + $0xa0] sm:$0xff] %vm1838, %v1687
    %1860 = vst.msk [vmem:[#allocation3 + $0xa8] sm:$0xff] %vm1838, %v1689
    %1861 = vst.msk [vmem:[#allocation3 + $0xb0] sm:$0xff] %vm1838, %v1691
    %1862 = vst.msk [vmem:[#allocation3 + $0xb8] sm:$0xff] %vm1838, %v1693
    %1863 = vst.msk [vmem:[#allocation3 + $0xc0] sm:$0xff] %vm1838, %v1695
    %1864 = vst.msk [vmem:[#allocation3 + $0xc8] sm:$0xff] %vm1838, %v1697
    %1865 = vst.msk [vmem:[#allocation3 + $0xd0] sm:$0xff] %vm1838, %v1699
    %1866 = vst.msk [vmem:[#allocation3 + $0xd8] sm:$0xff] %vm1838, %v1701
    %1867 = vst.msk [vmem:[#allocation3 + $0xe0] sm:$0xff] %vm1838, %v1703
    %1868 = vst.msk [vmem:[#allocation3 + $0xe8] sm:$0xff] %vm1838, %v1705
    %1869 = vst.msk [vmem:[#allocation3 + $0xf0] sm:$0xff] %vm1838, %v1707
    %1870 = vst.msk [vmem:[#allocation3 + $0xf8] sm:$0xff] %vm1838, %v1709
    %1871 = vst.msk [vmem:[#allocation3 + $0x100] sm:$0xff] %vm1838, %v1711
    %1872 = vst.msk [vmem:[#allocation3 + $0x108] sm:$0xff] %vm1838, %v1713
    %1873 = vst.msk [vmem:[#allocation3 + $0x110] sm:$0xff] %vm1838, %v1715
    %1874 = vst.msk [vmem:[#allocation3 + $0x118] sm:$0xff] %vm1838, %v1717
    %1875 = vst.msk [vmem:[#allocation3 + $0x120] sm:$0xff] %vm1838, %v1719
    %1876 = vst.msk [vmem:[#allocation3 + $0x128] sm:$0xff] %vm1838, %v1721
    %1877 = vst.msk [vmem:[#allocation3 + $0x130] sm:$0xff] %vm1838, %v1723
    %1878 = vst.msk [vmem:[#allocation3 + $0x138] sm:$0xff] %vm1838, %v1725
    %1879 = vst.msk [vmem:[#allocation3 + $0x140] sm:$0xff] %vm1838, %v1727
    %1880 = vst.msk [vmem:[#allocation3 + $0x148] sm:$0xff] %vm1838, %v1729
    %1881 = vst.msk [vmem:[#allocation3 + $0x150] sm:$0xff] %vm1838, %v1731
    %1882 = vst.msk [vmem:[#allocation3 + $0x158] sm:$0xff] %vm1838, %v1733
    %1883 = vst.msk [vmem:[#allocation3 + $0x160] sm:$0xff] %vm1838, %v1735
    %1884 = vst.msk [vmem:[#allocation3 + $0x168] sm:$0xff] %vm1838, %v1737
    %1885 = vst.msk [vmem:[#allocation3 + $0x170] sm:$0xff] %vm1838, %v1739
    %1886 = vst.msk [vmem:[#allocation3 + $0x178] sm:$0xff] %vm1838, %v1741
    %1887 = vst.msk [vmem:[#allocation3 + $0x180] sm:$0xff] %vm1838, %v1743
    %1888 = vst.msk [vmem:[#allocation3 + $0x188] sm:$0xff] %vm1838, %v1745
    %1889 = vst.msk [vmem:[#allocation3 + $0x190] sm:$0xff] %vm1838, %v1747
    %1890 = vst.msk [vmem:[#allocation3 + $0x198] sm:$0xff] %vm1838, %v1749
    %1891 = vst.msk [vmem:[#allocation3 + $0x1a0] sm:$0xff] %vm1838, %v1751
    %1892 = vst.msk [vmem:[#allocation3 + $0x1a8] sm:$0xff] %vm1838, %v1753
    %1893 = vst.msk [vmem:[#allocation3 + $0x1b0] sm:$0xff] %vm1838, %v1755
    %1894 = vst.msk [vmem:[#allocation3 + $0x1b8] sm:$0xff] %vm1838, %v1757
    %1895 = vst.msk [vmem:[#allocation3 + $0x1c0] sm:$0xff] %vm1838, %v1759
    %1896 = vst.msk [vmem:[#allocation3 + $0x1c8] sm:$0xff] %vm1838, %v1761
    %1897 = vst.msk [vmem:[#allocation3 + $0x1d0] sm:$0xff] %vm1838, %v1763
    %1898 = vst.msk [vmem:[#allocation3 + $0x1d8] sm:$0xff] %vm1838, %v1765
    %1899 = vst.msk [vmem:[#allocation3 + $0x1e0] sm:$0xff] %vm1838, %v1767
    %1900 = vst.msk [vmem:[#allocation3 + $0x1e8] sm:$0xff] %vm1838, %v1769
    %1901 = vst.msk [vmem:[#allocation3 + $0x1f0] sm:$0xff] %vm1838, %v1771
    %1902 = vst.msk [vmem:[#allocation3 + $0x1f8] sm:$0xff] %vm1838, %v1773
    %v1903 = vld [vmem:[%s170 + $0x2] sm:$0xff]
    %v1904 = vld [vmem:[%s170 + $0xa] sm:$0xff]
    %v1905 = vld [vmem:[%s170 + $0x1a] sm:$0xff]
    %v1906 = vld [vmem:[%s170 + $0x22] sm:$0xff]
    %v1907 = vld [vmem:[%s170 + $0x32] sm:$0xff]
    %v1908 = vld [vmem:[%s170 + $0x3a] sm:$0xff]
    %v1909 = vld [vmem:[%s170 + $0x4a] sm:$0xff]
    %v1910 = vld [vmem:[%s170 + $0x52] sm:$0xff]
    %v1911 = vld [vmem:[%s170 + $0x62] sm:$0xff]
    %v1912 = vld [vmem:[%s170 + $0x6a] sm:$0xff]
    %v1913 = vld [vmem:[%s170 + $0x7a] sm:$0xff]
    %v1914 = vld [vmem:[%s170 + $0x82] sm:$0xff]
    %v1915 = vld [vmem:[%s170 + $0x92] sm:$0xff]
    %v1916 = vld [vmem:[%s170 + $0x9a] sm:$0xff]
    %v1917 = vld [vmem:[%s170 + $0xaa] sm:$0xff]
    %v1918 = vld [vmem:[%s170 + $0xb2] sm:$0xff]
    %v1919 = vld [vmem:[%s170 + $0xc2] sm:$0xff]
    %v1920 = vld [vmem:[%s170 + $0xca] sm:$0xff]
    %v1921 = vld [vmem:[%s170 + $0xda] sm:$0xff]
    %v1922 = vld [vmem:[%s170 + $0xe2] sm:$0xff]
    %v1923 = vld [vmem:[%s170 + $0xf2] sm:$0xff]
    %v1924 = vld [vmem:[%s170 + $0xfa] sm:$0xff]
    %v1925 = vld [vmem:[%s170 + $0x10a] sm:$0xff]
    %v1926 = vld [vmem:[%s170 + $0x112] sm:$0xff]
    %v1927 = vld [vmem:[%s170 + $0x122] sm:$0xff]
    %v1928 = vld [vmem:[%s170 + $0x12a] sm:$0xff]
    %v1929 = vld [vmem:[%s170 + $0x13a] sm:$0xff]
    %v1930 = vld [vmem:[%s170 + $0x142] sm:$0xff]
    %v1931 = vld [vmem:[%s170 + $0x152] sm:$0xff]
    %v1932 = vld [vmem:[%s170 + $0x15a] sm:$0xff]
    %v1933 = vld [vmem:[%s170 + $0x16a] sm:$0xff]
    %v1934 = vld [vmem:[%s170 + $0x172] sm:$0xff]
    %v1935 = vld [vmem:[%s170 + $0x1b2] sm:$0xff]
    %v1936 = vld [vmem:[%s170 + $0x1ba] sm:$0xff]
    %v1937 = vld [vmem:[%s170 + $0x1ca] sm:$0xff]
    %v1938 = vld [vmem:[%s170 + $0x1d2] sm:$0xff]
    %v1939 = vld [vmem:[%s170 + $0x1e2] sm:$0xff]
    %v1940 = vld [vmem:[%s170 + $0x1ea] sm:$0xff]
    %v1941 = vld [vmem:[%s170 + $0x1fa] sm:$0xff]
    %v1942 = vld [vmem:[%s170 + $0x202] sm:$0xff]
    %v1943 = vld [vmem:[%s170 + $0x212] sm:$0xff]
    %v1944 = vld [vmem:[%s170 + $0x21a] sm:$0xff]
    %v1945 = vld [vmem:[%s170 + $0x22a] sm:$0xff]
    %v1946 = vld [vmem:[%s170 + $0x232] sm:$0xff]
    %v1947 = vld [vmem:[%s170 + $0x242] sm:$0xff]
    %v1948 = vld [vmem:[%s170 + $0x24a] sm:$0xff]
    %v1949 = vld [vmem:[%s170 + $0x25a] sm:$0xff]
    %v1950 = vld [vmem:[%s170 + $0x262] sm:$0xff]
    %v1951 = vld [vmem:[%s170 + $0x272] sm:$0xff]
    %v1952 = vld [vmem:[%s170 + $0x27a] sm:$0xff]
    %v1953 = vld [vmem:[%s170 + $0x28a] sm:$0xff]
    %v1954 = vld [vmem:[%s170 + $0x292] sm:$0xff]
    %v1955 = vld [vmem:[%s170 + $0x2a2] sm:$0xff]
    %v1956 = vld [vmem:[%s170 + $0x2aa] sm:$0xff]
    %v1957 = vld [vmem:[%s170 + $0x2ba] sm:$0xff]
    %v1958 = vld [vmem:[%s170 + $0x2c2] sm:$0xff]
    %v1959 = vld [vmem:[%s170 + $0x2d2] sm:$0xff]
    %v1960 = vld [vmem:[%s170 + $0x2da] sm:$0xff]
    %v1961 = vld [vmem:[%s170 + $0x2ea] sm:$0xff]
    %v1962 = vld [vmem:[%s170 + $0x2f2] sm:$0xff]
    %v1963 = vld [vmem:[%s170 + $0x302] sm:$0xff]
    %v1964 = vld [vmem:[%s170 + $0x30a] sm:$0xff]
    %v1965 = vld [vmem:[%s170 + $0x31a] sm:$0xff]
    %v1966 = vld [vmem:[%s170 + $0x322] sm:$0xff]
    %2031 = vrot.lane.b32.xlu0 %v1903, 20
    %v2032 = vpop.permute.xlu0 %2031
    %2033 = vrot.lane.b32.xlu0 %v1904, 20
    %v2034 = vpop.permute.xlu0 %2033
    %2035 = vrot.lane.b32.xlu0 %v1905, 20
    %v2036 = vpop.permute.xlu0 %2035
    %2037 = vrot.lane.b32.xlu0 %v1906, 20
    %v2038 = vpop.permute.xlu0 %2037
    %2039 = vrot.lane.b32.xlu0 %v1907, 20
    %v2040 = vpop.permute.xlu0 %2039
    %2041 = vrot.lane.b32.xlu0 %v1908, 20
    %v2042 = vpop.permute.xlu0 %2041
    %2043 = vrot.lane.b32.xlu0 %v1909, 20
    %v2044 = vpop.permute.xlu0 %2043
    %2045 = vrot.lane.b32.xlu0 %v1910, 20
    %v2046 = vpop.permute.xlu0 %2045
    %2047 = vrot.lane.b32.xlu0 %v1911, 20
    %v2048 = vpop.permute.xlu0 %2047
    %2049 = vrot.lane.b32.xlu0 %v1912, 20
    %v2050 = vpop.permute.xlu0 %2049
    %2051 = vrot.lane.b32.xlu0 %v1913, 20
    %v2052 = vpop.permute.xlu0 %2051
    %2053 = vrot.lane.b32.xlu0 %v1914, 20
    %v2054 = vpop.permute.xlu0 %2053
    %2055 = vrot.lane.b32.xlu0 %v1915, 20
    %v2056 = vpop.permute.xlu0 %2055
    %2057 = vrot.lane.b32.xlu0 %v1916, 20
    %v2058 = vpop.permute.xlu0 %2057
    %2059 = vrot.lane.b32.xlu0 %v1917, 20
    %v2060 = vpop.permute.xlu0 %2059
    %2061 = vrot.lane.b32.xlu0 %v1918, 20
    %v2062 = vpop.permute.xlu0 %2061
    %2063 = vrot.lane.b32.xlu0 %v1919, 20
    %v2064 = vpop.permute.xlu0 %2063
    %2065 = vrot.lane.b32.xlu0 %v1920, 20
    %v2066 = vpop.permute.xlu0 %2065
    %2067 = vrot.lane.b32.xlu0 %v1921, 20
    %v2068 = vpop.permute.xlu0 %2067
    %2069 = vrot.lane.b32.xlu0 %v1922, 20
    %v2070 = vpop.permute.xlu0 %2069
    %2071 = vrot.lane.b32.xlu0 %v1923, 20
    %v2072 = vpop.permute.xlu0 %2071
    %2073 = vrot.lane.b32.xlu0 %v1924, 20
    %v2074 = vpop.permute.xlu0 %2073
    %2075 = vrot.lane.b32.xlu0 %v1925, 20
    %v2076 = vpop.permute.xlu0 %2075
    %2077 = vrot.lane.b32.xlu0 %v1926, 20
    %v2078 = vpop.permute.xlu0 %2077
    %2079 = vrot.lane.b32.xlu0 %v1927, 20
    %v2080 = vpop.permute.xlu0 %2079
    %2081 = vrot.lane.b32.xlu0 %v1928, 20
    %v2082 = vpop.permute.xlu0 %2081
    %2083 = vrot.lane.b32.xlu0 %v1929, 20
    %v2084 = vpop.permute.xlu0 %2083
    %2085 = vrot.lane.b32.xlu0 %v1930, 20
    %v2086 = vpop.permute.xlu0 %2085
    %2087 = vrot.lane.b32.xlu0 %v1931, 20
    %v2088 = vpop.permute.xlu0 %2087
    %2089 = vrot.lane.b32.xlu0 %v1932, 20
    %v2090 = vpop.permute.xlu0 %2089
    %2091 = vrot.lane.b32.xlu0 %v1933, 20
    %v2092 = vpop.permute.xlu0 %2091
    %2093 = vrot.lane.b32.xlu0 %v1934, 20
    %v2094 = vpop.permute.xlu0 %2093
    %2095 = vrot.lane.b32.xlu0 %v1935, 20
    %v2096 = vpop.permute.xlu0 %2095
    %2097 = vrot.lane.b32.xlu0 %v1936, 20
    %v2098 = vpop.permute.xlu0 %2097
    %2099 = vrot.lane.b32.xlu0 %v1937, 20
    %v2100 = vpop.permute.xlu0 %2099
    %2101 = vrot.lane.b32.xlu0 %v1938, 20
    %v2102 = vpop.permute.xlu0 %2101
    %2103 = vrot.lane.b32.xlu0 %v1939, 20
    %v2104 = vpop.permute.xlu0 %2103
    %2105 = vrot.lane.b32.xlu0 %v1940, 20
    %v2106 = vpop.permute.xlu0 %2105
    %2107 = vrot.lane.b32.xlu0 %v1941, 20
    %v2108 = vpop.permute.xlu0 %2107
    %2109 = vrot.lane.b32.xlu0 %v1942, 20
    %v2110 = vpop.permute.xlu0 %2109
    %2111 = vrot.lane.b32.xlu0 %v1943, 20
    %v2112 = vpop.permute.xlu0 %2111
    %2113 = vrot.lane.b32.xlu0 %v1944, 20
    %v2114 = vpop.permute.xlu0 %2113
    %2115 = vrot.lane.b32.xlu0 %v1945, 20
    %v2116 = vpop.permute.xlu0 %2115
    %2117 = vrot.lane.b32.xlu0 %v1946, 20
    %v2118 = vpop.permute.xlu0 %2117
    %2119 = vrot.lane.b32.xlu0 %v1947, 20
    %v2120 = vpop.permute.xlu0 %2119
    %2121 = vrot.lane.b32.xlu0 %v1948, 20
    %v2122 = vpop.permute.xlu0 %2121
    %2123 = vrot.lane.b32.xlu0 %v1949, 20
    %v2124 = vpop.permute.xlu0 %2123
    %2125 = vrot.lane.b32.xlu0 %v1950, 20
    %v2126 = vpop.permute.xlu0 %2125
    %2127 = vrot.lane.b32.xlu0 %v1951, 20
    %v2128 = vpop.permute.xlu0 %2127
    %2129 = vrot.lane.b32.xlu0 %v1952, 20
    %v2130 = vpop.permute.xlu0 %2129
    %2131 = vrot.lane.b32.xlu0 %v1953, 20
    %v2132 = vpop.permute.xlu0 %2131
    %2133 = vrot.lane.b32.xlu0 %v1954, 20
    %v2134 = vpop.permute.xlu0 %2133
    %2135 = vrot.lane.b32.xlu0 %v1955, 20
    %v2136 = vpop.permute.xlu0 %2135
    %2137 = vrot.lane.b32.xlu0 %v1956, 20
    %v2138 = vpop.permute.xlu0 %2137
    %2139 = vrot.lane.b32.xlu0 %v1957, 20
    %v2140 = vpop.permute.xlu0 %2139
    %2141 = vrot.lane.b32.xlu0 %v1958, 20
    %v2142 = vpop.permute.xlu0 %2141
    %2143 = vrot.lane.b32.xlu0 %v1959, 20
    %v2144 = vpop.permute.xlu0 %2143
    %2145 = vrot.lane.b32.xlu0 %v1960, 20
    %v2146 = vpop.permute.xlu0 %2145
    %2147 = vrot.lane.b32.xlu0 %v1961, 20
    %v2148 = vpop.permute.xlu0 %2147
    %2149 = vrot.lane.b32.xlu0 %v1962, 20
    %v2150 = vpop.permute.xlu0 %2149
    %2151 = vrot.lane.b32.xlu0 %v1963, 20
    %v2152 = vpop.permute.xlu0 %2151
    %2153 = vrot.lane.b32.xlu0 %v1964, 20
    %v2154 = vpop.permute.xlu0 %2153
    %2155 = vrot.lane.b32.xlu0 %v1965, 20
    %v2156 = vpop.permute.xlu0 %2155
    %2157 = vrot.lane.b32.xlu0 %v1966, 20
    %v2158 = vpop.permute.xlu0 %2157
    %vm2223 = vcmask 195744
    %2224 = vst.msk [vmem:[#allocation3] sm:$0xff] %vm2223, %v2032
    %2225 = vst.msk [vmem:[#allocation3 + $0x8] sm:$0xff] %vm2223, %v2034
    %2226 = vst.msk [vmem:[#allocation3 + $0x10] sm:$0xff] %vm2223, %v2036
    %2227 = vst.msk [vmem:[#allocation3 + $0x18] sm:$0xff] %vm2223, %v2038
    %2228 = vst.msk [vmem:[#allocation3 + $0x20] sm:$0xff] %vm2223, %v2040
    %2229 = vst.msk [vmem:[#allocation3 + $0x28] sm:$0xff] %vm2223, %v2042
    %2230 = vst.msk [vmem:[#allocation3 + $0x30] sm:$0xff] %vm2223, %v2044
    %2231 = vst.msk [vmem:[#allocation3 + $0x38] sm:$0xff] %vm2223, %v2046
    %2232 = vst.msk [vmem:[#allocation3 + $0x40] sm:$0xff] %vm2223, %v2048
    %2233 = vst.msk [vmem:[#allocation3 + $0x48] sm:$0xff] %vm2223, %v2050
    %2234 = vst.msk [vmem:[#allocation3 + $0x50] sm:$0xff] %vm2223, %v2052
    %2235 = vst.msk [vmem:[#allocation3 + $0x58] sm:$0xff] %vm2223, %v2054
    %2236 = vst.msk [vmem:[#allocation3 + $0x60] sm:$0xff] %vm2223, %v2056
    %2237 = vst.msk [vmem:[#allocation3 + $0x68] sm:$0xff] %vm2223, %v2058
    %2238 = vst.msk [vmem:[#allocation3 + $0x70] sm:$0xff] %vm2223, %v2060
    %2239 = vst.msk [vmem:[#allocation3 + $0x78] sm:$0xff] %vm2223, %v2062
    %2240 = vst.msk [vmem:[#allocation3 + $0x80] sm:$0xff] %vm2223, %v2064
    %2241 = vst.msk [vmem:[#allocation3 + $0x88] sm:$0xff] %vm2223, %v2066
    %2242 = vst.msk [vmem:[#allocation3 + $0x90] sm:$0xff] %vm2223, %v2068
    %2243 = vst.msk [vmem:[#allocation3 + $0x98] sm:$0xff] %vm2223, %v2070
    %2244 = vst.msk [vmem:[#allocation3 + $0xa0] sm:$0xff] %vm2223, %v2072
    %2245 = vst.msk [vmem:[#allocation3 + $0xa8] sm:$0xff] %vm2223, %v2074
    %2246 = vst.msk [vmem:[#allocation3 + $0xb0] sm:$0xff] %vm2223, %v2076
    %2247 = vst.msk [vmem:[#allocation3 + $0xb8] sm:$0xff] %vm2223, %v2078
    %2248 = vst.msk [vmem:[#allocation3 + $0xc0] sm:$0xff] %vm2223, %v2080
    %2249 = vst.msk [vmem:[#allocation3 + $0xc8] sm:$0xff] %vm2223, %v2082
    %2250 = vst.msk [vmem:[#allocation3 + $0xd0] sm:$0xff] %vm2223, %v2084
    %2251 = vst.msk [vmem:[#allocation3 + $0xd8] sm:$0xff] %vm2223, %v2086
    %2252 = vst.msk [vmem:[#allocation3 + $0xe0] sm:$0xff] %vm2223, %v2088
    %2253 = vst.msk [vmem:[#allocation3 + $0xe8] sm:$0xff] %vm2223, %v2090
    %2254 = vst.msk [vmem:[#allocation3 + $0xf0] sm:$0xff] %vm2223, %v2092
    %2255 = vst.msk [vmem:[#allocation3 + $0xf8] sm:$0xff] %vm2223, %v2094
    %2256 = vst.msk [vmem:[#allocation3 + $0x100] sm:$0xff] %vm2223, %v2096
    %2257 = vst.msk [vmem:[#allocation3 + $0x108] sm:$0xff] %vm2223, %v2098
    %2258 = vst.msk [vmem:[#allocation3 + $0x110] sm:$0xff] %vm2223, %v2100
    %2259 = vst.msk [vmem:[#allocation3 + $0x118] sm:$0xff] %vm2223, %v2102
    %2260 = vst.msk [vmem:[#allocation3 + $0x120] sm:$0xff] %vm2223, %v2104
    %2261 = vst.msk [vmem:[#allocation3 + $0x128] sm:$0xff] %vm2223, %v2106
    %2262 = vst.msk [vmem:[#allocation3 + $0x130] sm:$0xff] %vm2223, %v2108
    %2263 = vst.msk [vmem:[#allocation3 + $0x138] sm:$0xff] %vm2223, %v2110
    %2264 = vst.msk [vmem:[#allocation3 + $0x140] sm:$0xff] %vm2223, %v2112
    %2265 = vst.msk [vmem:[#allocation3 + $0x148] sm:$0xff] %vm2223, %v2114
    %2266 = vst.msk [vmem:[#allocation3 + $0x150] sm:$0xff] %vm2223, %v2116
    %2267 = vst.msk [vmem:[#allocation3 + $0x158] sm:$0xff] %vm2223, %v2118
    %2268 = vst.msk [vmem:[#allocation3 + $0x160] sm:$0xff] %vm2223, %v2120
    %2269 = vst.msk [vmem:[#allocation3 + $0x168] sm:$0xff] %vm2223, %v2122
    %2270 = vst.msk [vmem:[#allocation3 + $0x170] sm:$0xff] %vm2223, %v2124
    %2271 = vst.msk [vmem:[#allocation3 + $0x178] sm:$0xff] %vm2223, %v2126
    %2272 = vst.msk [vmem:[#allocation3 + $0x180] sm:$0xff] %vm2223, %v2128
    %2273 = vst.msk [vmem:[#allocation3 + $0x188] sm:$0xff] %vm2223, %v2130
    %2274 = vst.msk [vmem:[#allocation3 + $0x190] sm:$0xff] %vm2223, %v2132
    %2275 = vst.msk [vmem:[#allocation3 + $0x198] sm:$0xff] %vm2223, %v2134
    %2276 = vst.msk [vmem:[#allocation3 + $0x1a0] sm:$0xff] %vm2223, %v2136
    %2277 = vst.msk [vmem:[#allocation3 + $0x1a8] sm:$0xff] %vm2223, %v2138
    %2278 = vst.msk [vmem:[#allocation3 + $0x1b0] sm:$0xff] %vm2223, %v2140
    %2279 = vst.msk [vmem:[#allocation3 + $0x1b8] sm:$0xff] %vm2223, %v2142
    %2280 = vst.msk [vmem:[#allocation3 + $0x1c0] sm:$0xff] %vm2223, %v2144
    %2281 = vst.msk [vmem:[#allocation3 + $0x1c8] sm:$0xff] %vm2223, %v2146
    %2282 = vst.msk [vmem:[#allocation3 + $0x1d0] sm:$0xff] %vm2223, %v2148
    %2283 = vst.msk [vmem:[#allocation3 + $0x1d8] sm:$0xff] %vm2223, %v2150
    %2284 = vst.msk [vmem:[#allocation3 + $0x1e0] sm:$0xff] %vm2223, %v2152
    %2285 = vst.msk [vmem:[#allocation3 + $0x1e8] sm:$0xff] %vm2223, %v2154
    %2286 = vst.msk [vmem:[#allocation3 + $0x1f0] sm:$0xff] %vm2223, %v2156
    %2287 = vst.msk [vmem:[#allocation3 + $0x1f8] sm:$0xff] %vm2223, %v2158
    %s2288 = scalar_lea.vmem [#allocation2], 48
    %v2289 = vld [vmem:[%s2288] sm:$0xff]
    %v2290 = vld [vmem:[%s2288 + $0x8] sm:$0xff]
    %v2291 = vld [vmem:[%s2288 + $0x18] sm:$0xff]
    %v2292 = vld [vmem:[%s2288 + $0x20] sm:$0xff]
    %v2293 = vld [vmem:[%s2288 + $0x30] sm:$0xff]
    %v2294 = vld [vmem:[%s2288 + $0x38] sm:$0xff]
    %v2295 = vld [vmem:[%s2288 + $0x48] sm:$0xff]
    %v2296 = vld [vmem:[%s2288 + $0x50] sm:$0xff]
    %v2297 = vld [vmem:[%s2288 + $0x60] sm:$0xff]
    %v2298 = vld [vmem:[%s2288 + $0x68] sm:$0xff]
    %v2299 = vld [vmem:[%s2288 + $0x78] sm:$0xff]
    %v2300 = vld [vmem:[%s2288 + $0x80] sm:$0xff]
    %v2301 = vld [vmem:[%s2288 + $0x90] sm:$0xff]
    %v2302 = vld [vmem:[%s2288 + $0x98] sm:$0xff]
    %v2303 = vld [vmem:[%s2288 + $0xa8] sm:$0xff]
    %v2304 = vld [vmem:[%s2288 + $0xb0] sm:$0xff]
    %v2305 = vld [vmem:[%s2288 + $0xc0] sm:$0xff]
    %v2306 = vld [vmem:[%s2288 + $0xc8] sm:$0xff]
    %v2307 = vld [vmem:[%s2288 + $0xd8] sm:$0xff]
    %v2308 = vld [vmem:[%s2288 + $0xe0] sm:$0xff]
    %v2309 = vld [vmem:[%s2288 + $0xf0] sm:$0xff]
    %v2310 = vld [vmem:[%s2288 + $0xf8] sm:$0xff]
    %v2311 = vld [vmem:[%s2288 + $0x108] sm:$0xff]
    %v2312 = vld [vmem:[%s2288 + $0x110] sm:$0xff]
    %v2313 = vld [vmem:[%s2288 + $0x120] sm:$0xff]
    %v2314 = vld [vmem:[%s2288 + $0x128] sm:$0xff]
    %v2315 = vld [vmem:[%s2288 + $0x138] sm:$0xff]
    %v2316 = vld [vmem:[%s2288 + $0x140] sm:$0xff]
    %v2317 = vld [vmem:[%s2288 + $0x150] sm:$0xff]
    %v2318 = vld [vmem:[%s2288 + $0x158] sm:$0xff]
    %v2319 = vld [vmem:[%s2288 + $0x168] sm:$0xff]
    %v2320 = vld [vmem:[%s2288 + $0x170] sm:$0xff]
    %v2321 = vld [vmem:[%s2288 + $0x1b0] sm:$0xff]
    %v2322 = vld [vmem:[%s2288 + $0x1b8] sm:$0xff]
    %v2323 = vld [vmem:[%s2288 + $0x1c8] sm:$0xff]
    %v2324 = vld [vmem:[%s2288 + $0x1d0] sm:$0xff]
    %v2325 = vld [vmem:[%s2288 + $0x1e0] sm:$0xff]
    %v2326 = vld [vmem:[%s2288 + $0x1e8] sm:$0xff]
    %v2327 = vld [vmem:[%s2288 + $0x1f8] sm:$0xff]
    %v2328 = vld [vmem:[%s2288 + $0x200] sm:$0xff]
    %v2329 = vld [vmem:[%s2288 + $0x210] sm:$0xff]
    %v2330 = vld [vmem:[%s2288 + $0x218] sm:$0xff]
    %v2331 = vld [vmem:[%s2288 + $0x228] sm:$0xff]
    %v2332 = vld [vmem:[%s2288 + $0x230] sm:$0xff]
    %v2333 = vld [vmem:[%s2288 + $0x240] sm:$0xff]
    %v2334 = vld [vmem:[%s2288 + $0x248] sm:$0xff]
    %v2335 = vld [vmem:[%s2288 + $0x258] sm:$0xff]
    %v2336 = vld [vmem:[%s2288 + $0x260] sm:$0xff]
    %v2337 = vld [vmem:[%s2288 + $0x270] sm:$0xff]
    %v2338 = vld [vmem:[%s2288 + $0x278] sm:$0xff]
    %v2339 = vld [vmem:[%s2288 + $0x288] sm:$0xff]
    %v2340 = vld [vmem:[%s2288 + $0x290] sm:$0xff]
    %v2341 = vld [vmem:[%s2288 + $0x2a0] sm:$0xff]
    %v2342 = vld [vmem:[%s2288 + $0x2a8] sm:$0xff]
    %v2343 = vld [vmem:[%s2288 + $0x2b8] sm:$0xff]
    %v2344 = vld [vmem:[%s2288 + $0x2c0] sm:$0xff]
    %v2345 = vld [vmem:[%s2288 + $0x2d0] sm:$0xff]
    %v2346 = vld [vmem:[%s2288 + $0x2d8] sm:$0xff]
    %v2347 = vld [vmem:[%s2288 + $0x2e8] sm:$0xff]
    %v2348 = vld [vmem:[%s2288 + $0x2f0] sm:$0xff]
    %v2349 = vld [vmem:[%s2288 + $0x300] sm:$0xff]
    %v2350 = vld [vmem:[%s2288 + $0x308] sm:$0xff]
    %v2351 = vld [vmem:[%s2288 + $0x318] sm:$0xff]
    %v2352 = vld [vmem:[%s2288 + $0x320] sm:$0xff]
    %2417 = vrot.lane.b32.xlu0 %v2289, 24
    %v2418 = vpop.permute.xlu0 %2417
    %2419 = vrot.lane.b32.xlu0 %v2290, 24
    %v2420 = vpop.permute.xlu0 %2419
    %2421 = vrot.lane.b32.xlu0 %v2291, 24
    %v2422 = vpop.permute.xlu0 %2421
    %2423 = vrot.lane.b32.xlu0 %v2292, 24
    %v2424 = vpop.permute.xlu0 %2423
    %2425 = vrot.lane.b32.xlu0 %v2293, 24
    %v2426 = vpop.permute.xlu0 %2425
    %2427 = vrot.lane.b32.xlu0 %v2294, 24
    %v2428 = vpop.permute.xlu0 %2427
    %2429 = vrot.lane.b32.xlu0 %v2295, 24
    %v2430 = vpop.permute.xlu0 %2429
    %2431 = vrot.lane.b32.xlu0 %v2296, 24
    %v2432 = vpop.permute.xlu0 %2431
    %2433 = vrot.lane.b32.xlu0 %v2297, 24
    %v2434 = vpop.permute.xlu0 %2433
    %2435 = vrot.lane.b32.xlu0 %v2298, 24
    %v2436 = vpop.permute.xlu0 %2435
    %2437 = vrot.lane.b32.xlu0 %v2299, 24
    %v2438 = vpop.permute.xlu0 %2437
    %2439 = vrot.lane.b32.xlu0 %v2300, 24
    %v2440 = vpop.permute.xlu0 %2439
    %2441 = vrot.lane.b32.xlu0 %v2301, 24
    %v2442 = vpop.permute.xlu0 %2441
    %2443 = vrot.lane.b32.xlu0 %v2302, 24
    %v2444 = vpop.permute.xlu0 %2443
    %2445 = vrot.lane.b32.xlu0 %v2303, 24
    %v2446 = vpop.permute.xlu0 %2445
    %2447 = vrot.lane.b32.xlu0 %v2304, 24
    %v2448 = vpop.permute.xlu0 %2447
    %2449 = vrot.lane.b32.xlu0 %v2305, 24
    %v2450 = vpop.permute.xlu0 %2449
    %2451 = vrot.lane.b32.xlu0 %v2306, 24
    %v2452 = vpop.permute.xlu0 %2451
    %2453 = vrot.lane.b32.xlu0 %v2307, 24
    %v2454 = vpop.permute.xlu0 %2453
    %2455 = vrot.lane.b32.xlu0 %v2308, 24
    %v2456 = vpop.permute.xlu0 %2455
    %2457 = vrot.lane.b32.xlu0 %v2309, 24
    %v2458 = vpop.permute.xlu0 %2457
    %2459 = vrot.lane.b32.xlu0 %v2310, 24
    %v2460 = vpop.permute.xlu0 %2459
    %2461 = vrot.lane.b32.xlu0 %v2311, 24
    %v2462 = vpop.permute.xlu0 %2461
    %2463 = vrot.lane.b32.xlu0 %v2312, 24
    %v2464 = vpop.permute.xlu0 %2463
    %2465 = vrot.lane.b32.xlu0 %v2313, 24
    %v2466 = vpop.permute.xlu0 %2465
    %2467 = vrot.lane.b32.xlu0 %v2314, 24
    %v2468 = vpop.permute.xlu0 %2467
    %2469 = vrot.lane.b32.xlu0 %v2315, 24
    %v2470 = vpop.permute.xlu0 %2469
    %2471 = vrot.lane.b32.xlu0 %v2316, 24
    %v2472 = vpop.permute.xlu0 %2471
    %2473 = vrot.lane.b32.xlu0 %v2317, 24
    %v2474 = vpop.permute.xlu0 %2473
    %2475 = vrot.lane.b32.xlu0 %v2318, 24
    %v2476 = vpop.permute.xlu0 %2475
    %2477 = vrot.lane.b32.xlu0 %v2319, 24
    %v2478 = vpop.permute.xlu0 %2477
    %2479 = vrot.lane.b32.xlu0 %v2320, 24
    %v2480 = vpop.permute.xlu0 %2479
    %2481 = vrot.lane.b32.xlu0 %v2321, 24
    %v2482 = vpop.permute.xlu0 %2481
    %2483 = vrot.lane.b32.xlu0 %v2322, 24
    %v2484 = vpop.permute.xlu0 %2483
    %2485 = vrot.lane.b32.xlu0 %v2323, 24
    %v2486 = vpop.permute.xlu0 %2485
    %2487 = vrot.lane.b32.xlu0 %v2324, 24
    %v2488 = vpop.permute.xlu0 %2487
    %2489 = vrot.lane.b32.xlu0 %v2325, 24
    %v2490 = vpop.permute.xlu0 %2489
    %2491 = vrot.lane.b32.xlu0 %v2326, 24
    %v2492 = vpop.permute.xlu0 %2491
    %2493 = vrot.lane.b32.xlu0 %v2327, 24
    %v2494 = vpop.permute.xlu0 %2493
    %2495 = vrot.lane.b32.xlu0 %v2328, 24
    %v2496 = vpop.permute.xlu0 %2495
    %2497 = vrot.lane.b32.xlu0 %v2329, 24
    %v2498 = vpop.permute.xlu0 %2497
    %2499 = vrot.lane.b32.xlu0 %v2330, 24
    %v2500 = vpop.permute.xlu0 %2499
    %2501 = vrot.lane.b32.xlu0 %v2331, 24
    %v2502 = vpop.permute.xlu0 %2501
    %2503 = vrot.lane.b32.xlu0 %v2332, 24
    %v2504 = vpop.permute.xlu0 %2503
    %2505 = vrot.lane.b32.xlu0 %v2333, 24
    %v2506 = vpop.permute.xlu0 %2505
    %2507 = vrot.lane.b32.xlu0 %v2334, 24
    %v2508 = vpop.permute.xlu0 %2507
    %2509 = vrot.lane.b32.xlu0 %v2335, 24
    %v2510 = vpop.permute.xlu0 %2509
    %2511 = vrot.lane.b32.xlu0 %v2336, 24
    %v2512 = vpop.permute.xlu0 %2511
    %2513 = vrot.lane.b32.xlu0 %v2337, 24
    %v2514 = vpop.permute.xlu0 %2513
    %2515 = vrot.lane.b32.xlu0 %v2338, 24
    %v2516 = vpop.permute.xlu0 %2515
    %2517 = vrot.lane.b32.xlu0 %v2339, 24
    %v2518 = vpop.permute.xlu0 %2517
    %2519 = vrot.lane.b32.xlu0 %v2340, 24
    %v2520 = vpop.permute.xlu0 %2519
    %2521 = vrot.lane.b32.xlu0 %v2341, 24
    %v2522 = vpop.permute.xlu0 %2521
    %2523 = vrot.lane.b32.xlu0 %v2342, 24
    %v2524 = vpop.permute.xlu0 %2523
    %2525 = vrot.lane.b32.xlu0 %v2343, 24
    %v2526 = vpop.permute.xlu0 %2525
    %2527 = vrot.lane.b32.xlu0 %v2344, 24
    %v2528 = vpop.permute.xlu0 %2527
    %2529 = vrot.lane.b32.xlu0 %v2345, 24
    %v2530 = vpop.permute.xlu0 %2529
    %2531 = vrot.lane.b32.xlu0 %v2346, 24
    %v2532 = vpop.permute.xlu0 %2531
    %2533 = vrot.lane.b32.xlu0 %v2347, 24
    %v2534 = vpop.permute.xlu0 %2533
    %2535 = vrot.lane.b32.xlu0 %v2348, 24
    %v2536 = vpop.permute.xlu0 %2535
    %2537 = vrot.lane.b32.xlu0 %v2349, 24
    %v2538 = vpop.permute.xlu0 %2537
    %2539 = vrot.lane.b32.xlu0 %v2350, 24
    %v2540 = vpop.permute.xlu0 %2539
    %2541 = vrot.lane.b32.xlu0 %v2351, 24
    %v2542 = vpop.permute.xlu0 %2541
    %2543 = vrot.lane.b32.xlu0 %v2352, 24
    %v2544 = vpop.permute.xlu0 %2543
    %vm2609 = vcmask 228544
    %2610 = vst.msk [vmem:[#allocation3] sm:$0xff] %vm2609, %v2418
    %2611 = vst.msk [vmem:[#allocation3 + $0x8] sm:$0xff] %vm2609, %v2420
    %2612 = vst.msk [vmem:[#allocation3 + $0x10] sm:$0xff] %vm2609, %v2422
    %2613 = vst.msk [vmem:[#allocation3 + $0x18] sm:$0xff] %vm2609, %v2424
    %2614 = vst.msk [vmem:[#allocation3 + $0x20] sm:$0xff] %vm2609, %v2426
    %2615 = vst.msk [vmem:[#allocation3 + $0x28] sm:$0xff] %vm2609, %v2428
    %2616 = vst.msk [vmem:[#allocation3 + $0x30] sm:$0xff] %vm2609, %v2430
    %2617 = vst.msk [vmem:[#allocation3 + $0x38] sm:$0xff] %vm2609, %v2432
    %2618 = vst.msk [vmem:[#allocation3 + $0x40] sm:$0xff] %vm2609, %v2434
    %2619 = vst.msk [vmem:[#allocation3 + $0x48] sm:$0xff] %vm2609, %v2436
    %2620 = vst.msk [vmem:[#allocation3 + $0x50] sm:$0xff] %vm2609, %v2438
    %2621 = vst.msk [vmem:[#allocation3 + $0x58] sm:$0xff] %vm2609, %v2440
    %2622 = vst.msk [vmem:[#allocation3 + $0x60] sm:$0xff] %vm2609, %v2442
    %2623 = vst.msk [vmem:[#allocation3 + $0x68] sm:$0xff] %vm2609, %v2444
    %2624 = vst.msk [vmem:[#allocation3 + $0x70] sm:$0xff] %vm2609, %v2446
    %2625 = vst.msk [vmem:[#allocation3 + $0x78] sm:$0xff] %vm2609, %v2448
    %2626 = vst.msk [vmem:[#allocation3 + $0x80] sm:$0xff] %vm2609, %v2450
    %2627 = vst.msk [vmem:[#allocation3 + $0x88] sm:$0xff] %vm2609, %v2452
    %2628 = vst.msk [vmem:[#allocation3 + $0x90] sm:$0xff] %vm2609, %v2454
    %2629 = vst.msk [vmem:[#allocation3 + $0x98] sm:$0xff] %vm2609, %v2456
    %2630 = vst.msk [vmem:[#allocation3 + $0xa0] sm:$0xff] %vm2609, %v2458
    %2631 = vst.msk [vmem:[#allocation3 + $0xa8] sm:$0xff] %vm2609, %v2460
    %2632 = vst.msk [vmem:[#allocation3 + $0xb0] sm:$0xff] %vm2609, %v2462
    %2633 = vst.msk [vmem:[#allocation3 + $0xb8] sm:$0xff] %vm2609, %v2464
    %2634 = vst.msk [vmem:[#allocation3 + $0xc0] sm:$0xff] %vm2609, %v2466
    %2635 = vst.msk [vmem:[#allocation3 + $0xc8] sm:$0xff] %vm2609, %v2468
    %2636 = vst.msk [vmem:[#allocation3 + $0xd0] sm:$0xff] %vm2609, %v2470
    %2637 = vst.msk [vmem:[#allocation3 + $0xd8] sm:$0xff] %vm2609, %v2472
    %2638 = vst.msk [vmem:[#allocation3 + $0xe0] sm:$0xff] %vm2609, %v2474
    %2639 = vst.msk [vmem:[#allocation3 + $0xe8] sm:$0xff] %vm2609, %v2476
    %2640 = vst.msk [vmem:[#allocation3 + $0xf0] sm:$0xff] %vm2609, %v2478
    %2641 = vst.msk [vmem:[#allocation3 + $0xf8] sm:$0xff] %vm2609, %v2480
    %2642 = vst.msk [vmem:[#allocation3 + $0x100] sm:$0xff] %vm2609, %v2482
    %2643 = vst.msk [vmem:[#allocation3 + $0x108] sm:$0xff] %vm2609, %v2484
    %2644 = vst.msk [vmem:[#allocation3 + $0x110] sm:$0xff] %vm2609, %v2486
    %2645 = vst.msk [vmem:[#allocation3 + $0x118] sm:$0xff] %vm2609, %v2488
    %2646 = vst.msk [vmem:[#allocation3 + $0x120] sm:$0xff] %vm2609, %v2490
    %2647 = vst.msk [vmem:[#allocation3 + $0x128] sm:$0xff] %vm2609, %v2492
    %2648 = vst.msk [vmem:[#allocation3 + $0x130] sm:$0xff] %vm2609, %v2494
    %2649 = vst.msk [vmem:[#allocation3 + $0x138] sm:$0xff] %vm2609, %v2496
    %2650 = vst.msk [vmem:[#allocation3 + $0x140] sm:$0xff] %vm2609, %v2498
    %2651 = vst.msk [vmem:[#allocation3 + $0x148] sm:$0xff] %vm2609, %v2500
    %2652 = vst.msk [vmem:[#allocation3 + $0x150] sm:$0xff] %vm2609, %v2502
    %2653 = vst.msk [vmem:[#allocation3 + $0x158] sm:$0xff] %vm2609, %v2504
    %2654 = vst.msk [vmem:[#allocation3 + $0x160] sm:$0xff] %vm2609, %v2506
    %2655 = vst.msk [vmem:[#allocation3 + $0x168] sm:$0xff] %vm2609, %v2508
    %2656 = vst.msk [vmem:[#allocation3 + $0x170] sm:$0xff] %vm2609, %v2510
    %2657 = vst.msk [vmem:[#allocation3 + $0x178] sm:$0xff] %vm2609, %v2512
    %2658 = vst.msk [vmem:[#allocation3 + $0x180] sm:$0xff] %vm2609, %v2514
    %2659 = vst.msk [vmem:[#allocation3 + $0x188] sm:$0xff] %vm2609, %v2516
    %2660 = vst.msk [vmem:[#allocation3 + $0x190] sm:$0xff] %vm2609, %v2518
    %2661 = vst.msk [vmem:[#allocation3 + $0x198] sm:$0xff] %vm2609, %v2520
    %2662 = vst.msk [vmem:[#allocation3 + $0x1a0] sm:$0xff] %vm2609, %v2522
    %2663 = vst.msk [vmem:[#allocation3 + $0x1a8] sm:$0xff] %vm2609, %v2524
    %2664 = vst.msk [vmem:[#allocation3 + $0x1b0] sm:$0xff] %vm2609, %v2526
    %2665 = vst.msk [vmem:[#allocation3 + $0x1b8] sm:$0xff] %vm2609, %v2528
    %2666 = vst.msk [vmem:[#allocation3 + $0x1c0] sm:$0xff] %vm2609, %v2530
    %2667 = vst.msk [vmem:[#allocation3 + $0x1c8] sm:$0xff] %vm2609, %v2532
    %2668 = vst.msk [vmem:[#allocation3 + $0x1d0] sm:$0xff] %vm2609, %v2534
    %2669 = vst.msk [vmem:[#allocation3 + $0x1d8] sm:$0xff] %vm2609, %v2536
    %2670 = vst.msk [vmem:[#allocation3 + $0x1e0] sm:$0xff] %vm2609, %v2538
    %2671 = vst.msk [vmem:[#allocation3 + $0x1e8] sm:$0xff] %vm2609, %v2540
    %2672 = vst.msk [vmem:[#allocation3 + $0x1f0] sm:$0xff] %vm2609, %v2542
    %2673 = vst.msk [vmem:[#allocation3 + $0x1f8] sm:$0xff] %vm2609, %v2544
    %v2674 = vld [vmem:[%s2288 + $0x1] sm:$0xff]
    %v2675 = vld [vmem:[%s2288 + $0x9] sm:$0xff]
    %v2676 = vld [vmem:[%s2288 + $0x19] sm:$0xff]
    %v2677 = vld [vmem:[%s2288 + $0x21] sm:$0xff]
    %v2678 = vld [vmem:[%s2288 + $0x31] sm:$0xff]
    %v2679 = vld [vmem:[%s2288 + $0x39] sm:$0xff]
    %v2680 = vld [vmem:[%s2288 + $0x49] sm:$0xff]
    %v2681 = vld [vmem:[%s2288 + $0x51] sm:$0xff]
    %v2682 = vld [vmem:[%s2288 + $0x61] sm:$0xff]
    %v2683 = vld [vmem:[%s2288 + $0x69] sm:$0xff]
    %v2684 = vld [vmem:[%s2288 + $0x79] sm:$0xff]
    %v2685 = vld [vmem:[%s2288 + $0x81] sm:$0xff]
    %v2686 = vld [vmem:[%s2288 + $0x91] sm:$0xff]
    %v2687 = vld [vmem:[%s2288 + $0x99] sm:$0xff]
    %v2688 = vld [vmem:[%s2288 + $0xa9] sm:$0xff]
    %v2689 = vld [vmem:[%s2288 + $0xb1] sm:$0xff]
    %v2690 = vld [vmem:[%s2288 + $0xc1] sm:$0xff]
    %v2691 = vld [vmem:[%s2288 + $0xc9] sm:$0xff]
    %v2692 = vld [vmem:[%s2288 + $0xd9] sm:$0xff]
    %v2693 = vld [vmem:[%s2288 + $0xe1] sm:$0xff]
    %v2694 = vld [vmem:[%s2288 + $0xf1] sm:$0xff]
    %v2695 = vld [vmem:[%s2288 + $0xf9] sm:$0xff]
    %v2696 = vld [vmem:[%s2288 + $0x109] sm:$0xff]
    %v2697 = vld [vmem:[%s2288 + $0x111] sm:$0xff]
    %v2698 = vld [vmem:[%s2288 + $0x121] sm:$0xff]
    %v2699 = vld [vmem:[%s2288 + $0x129] sm:$0xff]
    %v2700 = vld [vmem:[%s2288 + $0x139] sm:$0xff]
    %v2701 = vld [vmem:[%s2288 + $0x141] sm:$0xff]
    %v2702 = vld [vmem:[%s2288 + $0x151] sm:$0xff]
    %v2703 = vld [vmem:[%s2288 + $0x159] sm:$0xff]
    %v2704 = vld [vmem:[%s2288 + $0x169] sm:$0xff]
    %v2705 = vld [vmem:[%s2288 + $0x171] sm:$0xff]
    %v2706 = vld [vmem:[%s2288 + $0x1b1] sm:$0xff]
    %v2707 = vld [vmem:[%s2288 + $0x1b9] sm:$0xff]
    %v2708 = vld [vmem:[%s2288 + $0x1c9] sm:$0xff]
    %v2709 = vld [vmem:[%s2288 + $0x1d1] sm:$0xff]
    %v2710 = vld [vmem:[%s2288 + $0x1e1] sm:$0xff]
    %v2711 = vld [vmem:[%s2288 + $0x1e9] sm:$0xff]
    %v2712 = vld [vmem:[%s2288 + $0x1f9] sm:$0xff]
    %v2713 = vld [vmem:[%s2288 + $0x201] sm:$0xff]
    %v2714 = vld [vmem:[%s2288 + $0x211] sm:$0xff]
    %v2715 = vld [vmem:[%s2288 + $0x219] sm:$0xff]
    %v2716 = vld [vmem:[%s2288 + $0x229] sm:$0xff]
    %v2717 = vld [vmem:[%s2288 + $0x231] sm:$0xff]
    %v2718 = vld [vmem:[%s2288 + $0x241] sm:$0xff]
    %v2719 = vld [vmem:[%s2288 + $0x249] sm:$0xff]
    %v2720 = vld [vmem:[%s2288 + $0x259] sm:$0xff]
    %v2721 = vld [vmem:[%s2288 + $0x261] sm:$0xff]
    %v2722 = vld [vmem:[%s2288 + $0x271] sm:$0xff]
    %v2723 = vld [vmem:[%s2288 + $0x279] sm:$0xff]
    %v2724 = vld [vmem:[%s2288 + $0x289] sm:$0xff]
    %v2725 = vld [vmem:[%s2288 + $0x291] sm:$0xff]
    %v2726 = vld [vmem:[%s2288 + $0x2a1] sm:$0xff]
    %v2727 = vld [vmem:[%s2288 + $0x2a9] sm:$0xff]
    %v2728 = vld [vmem:[%s2288 + $0x2b9] sm:$0xff]
    %v2729 = vld [vmem:[%s2288 + $0x2c1] sm:$0xff]
    %v2730 = vld [vmem:[%s2288 + $0x2d1] sm:$0xff]
    %v2731 = vld [vmem:[%s2288 + $0x2d9] sm:$0xff]
    %v2732 = vld [vmem:[%s2288 + $0x2e9] sm:$0xff]
    %v2733 = vld [vmem:[%s2288 + $0x2f1] sm:$0xff]
    %v2734 = vld [vmem:[%s2288 + $0x301] sm:$0xff]
    %v2735 = vld [vmem:[%s2288 + $0x309] sm:$0xff]
    %v2736 = vld [vmem:[%s2288 + $0x319] sm:$0xff]
    %v2737 = vld [vmem:[%s2288 + $0x321] sm:$0xff]
    %2802 = vrot.lane.b32.xlu0 %v2674, 28
    %v2803 = vpop.permute.xlu0 %2802
    %2804 = vrot.lane.b32.xlu0 %v2675, 28
    %v2805 = vpop.permute.xlu0 %2804
    %2806 = vrot.lane.b32.xlu0 %v2676, 28
    %v2807 = vpop.permute.xlu0 %2806
    %2808 = vrot.lane.b32.xlu0 %v2677, 28
    %v2809 = vpop.permute.xlu0 %2808
    %2810 = vrot.lane.b32.xlu0 %v2678, 28
    %v2811 = vpop.permute.xlu0 %2810
    %2812 = vrot.lane.b32.xlu0 %v2679, 28
    %v2813 = vpop.permute.xlu0 %2812
    %2814 = vrot.lane.b32.xlu0 %v2680, 28
    %v2815 = vpop.permute.xlu0 %2814
    %2816 = vrot.lane.b32.xlu0 %v2681, 28
    %v2817 = vpop.permute.xlu0 %2816
    %2818 = vrot.lane.b32.xlu0 %v2682, 28
    %v2819 = vpop.permute.xlu0 %2818
    %2820 = vrot.lane.b32.xlu0 %v2683, 28
    %v2821 = vpop.permute.xlu0 %2820
    %2822 = vrot.lane.b32.xlu0 %v2684, 28
    %v2823 = vpop.permute.xlu0 %2822
    %2824 = vrot.lane.b32.xlu0 %v2685, 28
    %v2825 = vpop.permute.xlu0 %2824
    %2826 = vrot.lane.b32.xlu0 %v2686, 28
    %v2827 = vpop.permute.xlu0 %2826
    %2828 = vrot.lane.b32.xlu0 %v2687, 28
    %v2829 = vpop.permute.xlu0 %2828
    %2830 = vrot.lane.b32.xlu0 %v2688, 28
    %v2831 = vpop.permute.xlu0 %2830
    %2832 = vrot.lane.b32.xlu0 %v2689, 28
    %v2833 = vpop.permute.xlu0 %2832
    %2834 = vrot.lane.b32.xlu0 %v2690, 28
    %v2835 = vpop.permute.xlu0 %2834
    %2836 = vrot.lane.b32.xlu0 %v2691, 28
    %v2837 = vpop.permute.xlu0 %2836
    %2838 = vrot.lane.b32.xlu0 %v2692, 28
    %v2839 = vpop.permute.xlu0 %2838
    %2840 = vrot.lane.b32.xlu0 %v2693, 28
    %v2841 = vpop.permute.xlu0 %2840
    %2842 = vrot.lane.b32.xlu0 %v2694, 28
    %v2843 = vpop.permute.xlu0 %2842
    %2844 = vrot.lane.b32.xlu0 %v2695, 28
    %v2845 = vpop.permute.xlu0 %2844
    %2846 = vrot.lane.b32.xlu0 %v2696, 28
    %v2847 = vpop.permute.xlu0 %2846
    %2848 = vrot.lane.b32.xlu0 %v2697, 28
    %v2849 = vpop.permute.xlu0 %2848
    %2850 = vrot.lane.b32.xlu0 %v2698, 28
    %v2851 = vpop.permute.xlu0 %2850
    %2852 = vrot.lane.b32.xlu0 %v2699, 28
    %v2853 = vpop.permute.xlu0 %2852
    %2854 = vrot.lane.b32.xlu0 %v2700, 28
    %v2855 = vpop.permute.xlu0 %2854
    %2856 = vrot.lane.b32.xlu0 %v2701, 28
    %v2857 = vpop.permute.xlu0 %2856
    %2858 = vrot.lane.b32.xlu0 %v2702, 28
    %v2859 = vpop.permute.xlu0 %2858
    %2860 = vrot.lane.b32.xlu0 %v2703, 28
    %v2861 = vpop.permute.xlu0 %2860
    %2862 = vrot.lane.b32.xlu0 %v2704, 28
    %v2863 = vpop.permute.xlu0 %2862
    %2864 = vrot.lane.b32.xlu0 %v2705, 28
    %v2865 = vpop.permute.xlu0 %2864
    %2866 = vrot.lane.b32.xlu0 %v2706, 28
    %v2867 = vpop.permute.xlu0 %2866
    %2868 = vrot.lane.b32.xlu0 %v2707, 28
    %v2869 = vpop.permute.xlu0 %2868
    %2870 = vrot.lane.b32.xlu0 %v2708, 28
    %v2871 = vpop.permute.xlu0 %2870
    %2872 = vrot.lane.b32.xlu0 %v2709, 28
    %v2873 = vpop.permute.xlu0 %2872
    %2874 = vrot.lane.b32.xlu0 %v2710, 28
    %v2875 = vpop.permute.xlu0 %2874
    %2876 = vrot.lane.b32.xlu0 %v2711, 28
    %v2877 = vpop.permute.xlu0 %2876
    %2878 = vrot.lane.b32.xlu0 %v2712, 28
    %v2879 = vpop.permute.xlu0 %2878
    %2880 = vrot.lane.b32.xlu0 %v2713, 28
    %v2881 = vpop.permute.xlu0 %2880
    %2882 = vrot.lane.b32.xlu0 %v2714, 28
    %v2883 = vpop.permute.xlu0 %2882
    %2884 = vrot.lane.b32.xlu0 %v2715, 28
    %v2885 = vpop.permute.xlu0 %2884
    %2886 = vrot.lane.b32.xlu0 %v2716, 28
    %v2887 = vpop.permute.xlu0 %2886
    %2888 = vrot.lane.b32.xlu0 %v2717, 28
    %v2889 = vpop.permute.xlu0 %2888
    %2890 = vrot.lane.b32.xlu0 %v2718, 28
    %v2891 = vpop.permute.xlu0 %2890
    %2892 = vrot.lane.b32.xlu0 %v2719, 28
    %v2893 = vpop.permute.xlu0 %2892
    %2894 = vrot.lane.b32.xlu0 %v2720, 28
    %v2895 = vpop.permute.xlu0 %2894
    %2896 = vrot.lane.b32.xlu0 %v2721, 28
    %v2897 = vpop.permute.xlu0 %2896
    %2898 = vrot.lane.b32.xlu0 %v2722, 28
    %v2899 = vpop.permute.xlu0 %2898
    %2900 = vrot.lane.b32.xlu0 %v2723, 28
    %v2901 = vpop.permute.xlu0 %2900
    %2902 = vrot.lane.b32.xlu0 %v2724, 28
    %v2903 = vpop.permute.xlu0 %2902
    %2904 = vrot.lane.b32.xlu0 %v2725, 28
    %v2905 = vpop.permute.xlu0 %2904
    %2906 = vrot.lane.b32.xlu0 %v2726, 28
    %v2907 = vpop.permute.xlu0 %2906
    %2908 = vrot.lane.b32.xlu0 %v2727, 28
    %v2909 = vpop.permute.xlu0 %2908
    %2910 = vrot.lane.b32.xlu0 %v2728, 28
    %v2911 = vpop.permute.xlu0 %2910
    %2912 = vrot.lane.b32.xlu0 %v2729, 28
    %v2913 = vpop.permute.xlu0 %2912
    %2914 = vrot.lane.b32.xlu0 %v2730, 28
    %v2915 = vpop.permute.xlu0 %2914
    %2916 = vrot.lane.b32.xlu0 %v2731, 28
    %v2917 = vpop.permute.xlu0 %2916
    %2918 = vrot.lane.b32.xlu0 %v2732, 28
    %v2919 = vpop.permute.xlu0 %2918
    %2920 = vrot.lane.b32.xlu0 %v2733, 28
    %v2921 = vpop.permute.xlu0 %2920
    %2922 = vrot.lane.b32.xlu0 %v2734, 28
    %v2923 = vpop.permute.xlu0 %2922
    %2924 = vrot.lane.b32.xlu0 %v2735, 28
    %v2925 = vpop.permute.xlu0 %2924
    %2926 = vrot.lane.b32.xlu0 %v2736, 28
    %v2927 = vpop.permute.xlu0 %2926
    %2928 = vrot.lane.b32.xlu0 %v2737, 28
    %v2929 = vpop.permute.xlu0 %2928
    %vm2994 = vcmask 261344
    %2995 = vst.msk [vmem:[#allocation3] sm:$0xff] %vm2994, %v2803
    %2996 = vst.msk [vmem:[#allocation3 + $0x8] sm:$0xff] %vm2994, %v2805
    %2997 = vst.msk [vmem:[#allocation3 + $0x10] sm:$0xff] %vm2994, %v2807
    %2998 = vst.msk [vmem:[#allocation3 + $0x18] sm:$0xff] %vm2994, %v2809
    %2999 = vst.msk [vmem:[#allocation3 + $0x20] sm:$0xff] %vm2994, %v2811
    %3000 = vst.msk [vmem:[#allocation3 + $0x28] sm:$0xff] %vm2994, %v2813
    %3001 = vst.msk [vmem:[#allocation3 + $0x30] sm:$0xff] %vm2994, %v2815
    %3002 = vst.msk [vmem:[#allocation3 + $0x38] sm:$0xff] %vm2994, %v2817
    %3003 = vst.msk [vmem:[#allocation3 + $0x40] sm:$0xff] %vm2994, %v2819
    %3004 = vst.msk [vmem:[#allocation3 + $0x48] sm:$0xff] %vm2994, %v2821
    %3005 = vst.msk [vmem:[#allocation3 + $0x50] sm:$0xff] %vm2994, %v2823
    %3006 = vst.msk [vmem:[#allocation3 + $0x58] sm:$0xff] %vm2994, %v2825
    %3007 = vst.msk [vmem:[#allocation3 + $0x60] sm:$0xff] %vm2994, %v2827
    %3008 = vst.msk [vmem:[#allocation3 + $0x68] sm:$0xff] %vm2994, %v2829
    %3009 = vst.msk [vmem:[#allocation3 + $0x70] sm:$0xff] %vm2994, %v2831
    %3010 = vst.msk [vmem:[#allocation3 + $0x78] sm:$0xff] %vm2994, %v2833
    %3011 = vst.msk [vmem:[#allocation3 + $0x80] sm:$0xff] %vm2994, %v2835
    %3012 = vst.msk [vmem:[#allocation3 + $0x88] sm:$0xff] %vm2994, %v2837
    %3013 = vst.msk [vmem:[#allocation3 + $0x90] sm:$0xff] %vm2994, %v2839
    %3014 = vst.msk [vmem:[#allocation3 + $0x98] sm:$0xff] %vm2994, %v2841
    %3015 = vst.msk [vmem:[#allocation3 + $0xa0] sm:$0xff] %vm2994, %v2843
    %3016 = vst.msk [vmem:[#allocation3 + $0xa8] sm:$0xff] %vm2994, %v2845
    %3017 = vst.msk [vmem:[#allocation3 + $0xb0] sm:$0xff] %vm2994, %v2847
    %3018 = vst.msk [vmem:[#allocation3 + $0xb8] sm:$0xff] %vm2994, %v2849
    %3019 = vst.msk [vmem:[#allocation3 + $0xc0] sm:$0xff] %vm2994, %v2851
    %3020 = vst.msk [vmem:[#allocation3 + $0xc8] sm:$0xff] %vm2994, %v2853
    %3021 = vst.msk [vmem:[#allocation3 + $0xd0] sm:$0xff] %vm2994, %v2855
    %3022 = vst.msk [vmem:[#allocation3 + $0xd8] sm:$0xff] %vm2994, %v2857
    %3023 = vst.msk [vmem:[#allocation3 + $0xe0] sm:$0xff] %vm2994, %v2859
    %3024 = vst.msk [vmem:[#allocation3 + $0xe8] sm:$0xff] %vm2994, %v2861
    %3025 = vst.msk [vmem:[#allocation3 + $0xf0] sm:$0xff] %vm2994, %v2863
    %3026 = vst.msk [vmem:[#allocation3 + $0xf8] sm:$0xff] %vm2994, %v2865
    %3027 = vst.msk [vmem:[#allocation3 + $0x100] sm:$0xff] %vm2994, %v2867
    %3028 = vst.msk [vmem:[#allocation3 + $0x108] sm:$0xff] %vm2994, %v2869
    %3029 = vst.msk [vmem:[#allocation3 + $0x110] sm:$0xff] %vm2994, %v2871
    %3030 = vst.msk [vmem:[#allocation3 + $0x118] sm:$0xff] %vm2994, %v2873
    %3031 = vst.msk [vmem:[#allocation3 + $0x120] sm:$0xff] %vm2994, %v2875
    %3032 = vst.msk [vmem:[#allocation3 + $0x128] sm:$0xff] %vm2994, %v2877
    %3033 = vst.msk [vmem:[#allocation3 + $0x130] sm:$0xff] %vm2994, %v2879
    %3034 = vst.msk [vmem:[#allocation3 + $0x138] sm:$0xff] %vm2994, %v2881
    %3035 = vst.msk [vmem:[#allocation3 + $0x140] sm:$0xff] %vm2994, %v2883
    %3036 = vst.msk [vmem:[#allocation3 + $0x148] sm:$0xff] %vm2994, %v2885
    %3037 = vst.msk [vmem:[#allocation3 + $0x150] sm:$0xff] %vm2994, %v2887
    %3038 = vst.msk [vmem:[#allocation3 + $0x158] sm:$0xff] %vm2994, %v2889
    %3039 = vst.msk [vmem:[#allocation3 + $0x160] sm:$0xff] %vm2994, %v2891
    %3040 = vst.msk [vmem:[#allocation3 + $0x168] sm:$0xff] %vm2994, %v2893
    %3041 = vst.msk [vmem:[#allocation3 + $0x170] sm:$0xff] %vm2994, %v2895
    %3042 = vst.msk [vmem:[#allocation3 + $0x178] sm:$0xff] %vm2994, %v2897
    %3043 = vst.msk [vmem:[#allocation3 + $0x180] sm:$0xff] %vm2994, %v2899
    %3044 = vst.msk [vmem:[#allocation3 + $0x188] sm:$0xff] %vm2994, %v2901
    %3045 = vst.msk [vmem:[#allocation3 + $0x190] sm:$0xff] %vm2994, %v2903
    %3046 = vst.msk [vmem:[#allocation3 + $0x198] sm:$0xff] %vm2994, %v2905
    %3047 = vst.msk [vmem:[#allocation3 + $0x1a0] sm:$0xff] %vm2994, %v2907
    %3048 = vst.msk [vmem:[#allocation3 + $0x1a8] sm:$0xff] %vm2994, %v2909
    %3049 = vst.msk [vmem:[#allocation3 + $0x1b0] sm:$0xff] %vm2994, %v2911
    %3050 = vst.msk [vmem:[#allocation3 + $0x1b8] sm:$0xff] %vm2994, %v2913
    %3051 = vst.msk [vmem:[#allocation3 + $0x1c0] sm:$0xff] %vm2994, %v2915
    %3052 = vst.msk [vmem:[#allocation3 + $0x1c8] sm:$0xff] %vm2994, %v2917
    %3053 = vst.msk [vmem:[#allocation3 + $0x1d0] sm:$0xff] %vm2994, %v2919
    %3054 = vst.msk [vmem:[#allocation3 + $0x1d8] sm:$0xff] %vm2994, %v2921
    %3055 = vst.msk [vmem:[#allocation3 + $0x1e0] sm:$0xff] %vm2994, %v2923
    %3056 = vst.msk [vmem:[#allocation3 + $0x1e8] sm:$0xff] %vm2994, %v2925
    %3057 = vst.msk [vmem:[#allocation3 + $0x1f0] sm:$0xff] %vm2994, %v2927
    %3058 = vst.msk [vmem:[#allocation3 + $0x1f8] sm:$0xff] %vm2994, %v2929
    %v3059 = vld [vmem:[%s2288 + $0x2] sm:$0xff]
    %v3060 = vld [vmem:[%s2288 + $0xa] sm:$0xff]
    %v3061 = vld [vmem:[%s2288 + $0x1a] sm:$0xff]
    %v3062 = vld [vmem:[%s2288 + $0x22] sm:$0xff]
    %v3063 = vld [vmem:[%s2288 + $0x32] sm:$0xff]
    %v3064 = vld [vmem:[%s2288 + $0x3a] sm:$0xff]
    %v3065 = vld [vmem:[%s2288 + $0x4a] sm:$0xff]
    %v3066 = vld [vmem:[%s2288 + $0x52] sm:$0xff]
    %v3067 = vld [vmem:[%s2288 + $0x62] sm:$0xff]
    %v3068 = vld [vmem:[%s2288 + $0x6a] sm:$0xff]
    %v3069 = vld [vmem:[%s2288 + $0x7a] sm:$0xff]
    %v3070 = vld [vmem:[%s2288 + $0x82] sm:$0xff]
    %v3071 = vld [vmem:[%s2288 + $0x92] sm:$0xff]
    %v3072 = vld [vmem:[%s2288 + $0x9a] sm:$0xff]
    %v3073 = vld [vmem:[%s2288 + $0xaa] sm:$0xff]
    %v3074 = vld [vmem:[%s2288 + $0xb2] sm:$0xff]
    %v3075 = vld [vmem:[%s2288 + $0xc2] sm:$0xff]
    %v3076 = vld [vmem:[%s2288 + $0xca] sm:$0xff]
    %v3077 = vld [vmem:[%s2288 + $0xda] sm:$0xff]
    %v3078 = vld [vmem:[%s2288 + $0xe2] sm:$0xff]
    %v3079 = vld [vmem:[%s2288 + $0xf2] sm:$0xff]
    %v3080 = vld [vmem:[%s2288 + $0xfa] sm:$0xff]
    %v3081 = vld [vmem:[%s2288 + $0x10a] sm:$0xff]
    %v3082 = vld [vmem:[%s2288 + $0x112] sm:$0xff]
    %v3083 = vld [vmem:[%s2288 + $0x122] sm:$0xff]
    %v3084 = vld [vmem:[%s2288 + $0x12a] sm:$0xff]
    %v3085 = vld [vmem:[%s2288 + $0x13a] sm:$0xff]
    %v3086 = vld [vmem:[%s2288 + $0x142] sm:$0xff]
    %v3087 = vld [vmem:[%s2288 + $0x152] sm:$0xff]
    %v3088 = vld [vmem:[%s2288 + $0x15a] sm:$0xff]
    %v3089 = vld [vmem:[%s2288 + $0x16a] sm:$0xff]
    %v3090 = vld [vmem:[%s2288 + $0x172] sm:$0xff]
    %v3091 = vld [vmem:[%s2288 + $0x1b2] sm:$0xff]
    %v3092 = vld [vmem:[%s2288 + $0x1ba] sm:$0xff]
    %v3093 = vld [vmem:[%s2288 + $0x1ca] sm:$0xff]
    %v3094 = vld [vmem:[%s2288 + $0x1d2] sm:$0xff]
    %v3095 = vld [vmem:[%s2288 + $0x1e2] sm:$0xff]
    %v3096 = vld [vmem:[%s2288 + $0x1ea] sm:$0xff]
    %v3097 = vld [vmem:[%s2288 + $0x1fa] sm:$0xff]
    %v3098 = vld [vmem:[%s2288 + $0x202] sm:$0xff]
    %v3099 = vld [vmem:[%s2288 + $0x212] sm:$0xff]
    %v3100 = vld [vmem:[%s2288 + $0x21a] sm:$0xff]
    %v3101 = vld [vmem:[%s2288 + $0x22a] sm:$0xff]
    %v3102 = vld [vmem:[%s2288 + $0x232] sm:$0xff]
    %v3103 = vld [vmem:[%s2288 + $0x242] sm:$0xff]
    %v3104 = vld [vmem:[%s2288 + $0x24a] sm:$0xff]
    %v3105 = vld [vmem:[%s2288 + $0x25a] sm:$0xff]
    %v3106 = vld [vmem:[%s2288 + $0x262] sm:$0xff]
    %v3107 = vld [vmem:[%s2288 + $0x272] sm:$0xff]
    %v3108 = vld [vmem:[%s2288 + $0x27a] sm:$0xff]
    %v3109 = vld [vmem:[%s2288 + $0x28a] sm:$0xff]
    %v3110 = vld [vmem:[%s2288 + $0x292] sm:$0xff]
    %v3111 = vld [vmem:[%s2288 + $0x2a2] sm:$0xff]
    %v3112 = vld [vmem:[%s2288 + $0x2aa] sm:$0xff]
    %v3113 = vld [vmem:[%s2288 + $0x2ba] sm:$0xff]
    %v3114 = vld [vmem:[%s2288 + $0x2c2] sm:$0xff]
    %v3115 = vld [vmem:[%s2288 + $0x2d2] sm:$0xff]
    %v3116 = vld [vmem:[%s2288 + $0x2da] sm:$0xff]
    %v3117 = vld [vmem:[%s2288 + $0x2ea] sm:$0xff]
    %v3118 = vld [vmem:[%s2288 + $0x2f2] sm:$0xff]
    %v3119 = vld [vmem:[%s2288 + $0x302] sm:$0xff]
    %v3120 = vld [vmem:[%s2288 + $0x30a] sm:$0xff]
    %v3121 = vld [vmem:[%s2288 + $0x31a] sm:$0xff]
    %v3122 = vld [vmem:[%s2288 + $0x322] sm:$0xff]
    %3187 = vrot.lane.b32.xlu0 %v3059, 32
    %v3188 = vpop.permute.xlu0 %3187
    %3189 = vrot.lane.b32.xlu0 %v3060, 32
    %v3190 = vpop.permute.xlu0 %3189
    %3191 = vrot.lane.b32.xlu0 %v3061, 32
    %v3192 = vpop.permute.xlu0 %3191
    %3193 = vrot.lane.b32.xlu0 %v3062, 32
    %v3194 = vpop.permute.xlu0 %3193
    %3195 = vrot.lane.b32.xlu0 %v3063, 32
    %v3196 = vpop.permute.xlu0 %3195
    %3197 = vrot.lane.b32.xlu0 %v3064, 32
    %v3198 = vpop.permute.xlu0 %3197
    %3199 = vrot.lane.b32.xlu0 %v3065, 32
    %v3200 = vpop.permute.xlu0 %3199
    %3201 = vrot.lane.b32.xlu0 %v3066, 32
    %v3202 = vpop.permute.xlu0 %3201
    %3203 = vrot.lane.b32.xlu0 %v3067, 32
    %v3204 = vpop.permute.xlu0 %3203
    %3205 = vrot.lane.b32.xlu0 %v3068, 32
    %v3206 = vpop.permute.xlu0 %3205
    %3207 = vrot.lane.b32.xlu0 %v3069, 32
    %v3208 = vpop.permute.xlu0 %3207
    %3209 = vrot.lane.b32.xlu0 %v3070, 32
    %v3210 = vpop.permute.xlu0 %3209
    %3211 = vrot.lane.b32.xlu0 %v3071, 32
    %v3212 = vpop.permute.xlu0 %3211
    %3213 = vrot.lane.b32.xlu0 %v3072, 32
    %v3214 = vpop.permute.xlu0 %3213
    %3215 = vrot.lane.b32.xlu0 %v3073, 32
    %v3216 = vpop.permute.xlu0 %3215
    %3217 = vrot.lane.b32.xlu0 %v3074, 32
    %v3218 = vpop.permute.xlu0 %3217
    %3219 = vrot.lane.b32.xlu0 %v3075, 32
    %v3220 = vpop.permute.xlu0 %3219
    %3221 = vrot.lane.b32.xlu0 %v3076, 32
    %v3222 = vpop.permute.xlu0 %3221
    %3223 = vrot.lane.b32.xlu0 %v3077, 32
    %v3224 = vpop.permute.xlu0 %3223
    %3225 = vrot.lane.b32.xlu0 %v3078, 32
    %v3226 = vpop.permute.xlu0 %3225
    %3227 = vrot.lane.b32.xlu0 %v3079, 32
    %v3228 = vpop.permute.xlu0 %3227
    %3229 = vrot.lane.b32.xlu0 %v3080, 32
    %v3230 = vpop.permute.xlu0 %3229
    %3231 = vrot.lane.b32.xlu0 %v3081, 32
    %v3232 = vpop.permute.xlu0 %3231
    %3233 = vrot.lane.b32.xlu0 %v3082, 32
    %v3234 = vpop.permute.xlu0 %3233
    %3235 = vrot.lane.b32.xlu0 %v3083, 32
    %v3236 = vpop.permute.xlu0 %3235
    %3237 = vrot.lane.b32.xlu0 %v3084, 32
    %v3238 = vpop.permute.xlu0 %3237
    %3239 = vrot.lane.b32.xlu0 %v3085, 32
    %v3240 = vpop.permute.xlu0 %3239
    %3241 = vrot.lane.b32.xlu0 %v3086, 32
    %v3242 = vpop.permute.xlu0 %3241
    %3243 = vrot.lane.b32.xlu0 %v3087, 32
    %v3244 = vpop.permute.xlu0 %3243
    %3245 = vrot.lane.b32.xlu0 %v3088, 32
    %v3246 = vpop.permute.xlu0 %3245
    %3247 = vrot.lane.b32.xlu0 %v3089, 32
    %v3248 = vpop.permute.xlu0 %3247
    %3249 = vrot.lane.b32.xlu0 %v3090, 32
    %v3250 = vpop.permute.xlu0 %3249
    %3251 = vrot.lane.b32.xlu0 %v3091, 32
    %v3252 = vpop.permute.xlu0 %3251
    %3253 = vrot.lane.b32.xlu0 %v3092, 32
    %v3254 = vpop.permute.xlu0 %3253
    %3255 = vrot.lane.b32.xlu0 %v3093, 32
    %v3256 = vpop.permute.xlu0 %3255
    %3257 = vrot.lane.b32.xlu0 %v3094, 32
    %v3258 = vpop.permute.xlu0 %3257
    %3259 = vrot.lane.b32.xlu0 %v3095, 32
    %v3260 = vpop.permute.xlu0 %3259
    %3261 = vrot.lane.b32.xlu0 %v3096, 32
    %v3262 = vpop.permute.xlu0 %3261
    %3263 = vrot.lane.b32.xlu0 %v3097, 32
    %v3264 = vpop.permute.xlu0 %3263
    %3265 = vrot.lane.b32.xlu0 %v3098, 32
    %v3266 = vpop.permute.xlu0 %3265
    %3267 = vrot.lane.b32.xlu0 %v3099, 32
    %v3268 = vpop.permute.xlu0 %3267
    %3269 = vrot.lane.b32.xlu0 %v3100, 32
    %v3270 = vpop.permute.xlu0 %3269
    %3271 = vrot.lane.b32.xlu0 %v3101, 32
    %v3272 = vpop.permute.xlu0 %3271
    %3273 = vrot.lane.b32.xlu0 %v3102, 32
    %v3274 = vpop.permute.xlu0 %3273
    %3275 = vrot.lane.b32.xlu0 %v3103, 32
    %v3276 = vpop.permute.xlu0 %3275
    %3277 = vrot.lane.b32.xlu0 %v3104, 32
    %v3278 = vpop.permute.xlu0 %3277
    %3279 = vrot.lane.b32.xlu0 %v3105, 32
    %v3280 = vpop.permute.xlu0 %3279
    %3281 = vrot.lane.b32.xlu0 %v3106, 32
    %v3282 = vpop.permute.xlu0 %3281
    %3283 = vrot.lane.b32.xlu0 %v3107, 32
    %v3284 = vpop.permute.xlu0 %3283
    %3285 = vrot.lane.b32.xlu0 %v3108, 32
    %v3286 = vpop.permute.xlu0 %3285
    %3287 = vrot.lane.b32.xlu0 %v3109, 32
    %v3288 = vpop.permute.xlu0 %3287
    %3289 = vrot.lane.b32.xlu0 %v3110, 32
    %v3290 = vpop.permute.xlu0 %3289
    %3291 = vrot.lane.b32.xlu0 %v3111, 32
    %v3292 = vpop.permute.xlu0 %3291
    %3293 = vrot.lane.b32.xlu0 %v3112, 32
    %v3294 = vpop.permute.xlu0 %3293
    %3295 = vrot.lane.b32.xlu0 %v3113, 32
    %v3296 = vpop.permute.xlu0 %3295
    %3297 = vrot.lane.b32.xlu0 %v3114, 32
    %v3298 = vpop.permute.xlu0 %3297
    %3299 = vrot.lane.b32.xlu0 %v3115, 32
    %v3300 = vpop.permute.xlu0 %3299
    %3301 = vrot.lane.b32.xlu0 %v3116, 32
    %v3302 = vpop.permute.xlu0 %3301
    %3303 = vrot.lane.b32.xlu0 %v3117, 32
    %v3304 = vpop.permute.xlu0 %3303
    %3305 = vrot.lane.b32.xlu0 %v3118, 32
    %v3306 = vpop.permute.xlu0 %3305
    %3307 = vrot.lane.b32.xlu0 %v3119, 32
    %v3308 = vpop.permute.xlu0 %3307
    %3309 = vrot.lane.b32.xlu0 %v3120, 32
    %v3310 = vpop.permute.xlu0 %3309
    %3311 = vrot.lane.b32.xlu0 %v3121, 32
    %v3312 = vpop.permute.xlu0 %3311
    %3313 = vrot.lane.b32.xlu0 %v3122, 32
    %v3314 = vpop.permute.xlu0 %3313
    %vm3379 = vcmask 294144
    %3380 = vst.msk [vmem:[#allocation3] sm:$0xff] %vm3379, %v3188
    %3381 = vst.msk [vmem:[#allocation3 + $0x8] sm:$0xff] %vm3379, %v3190
    %3382 = vst.msk [vmem:[#allocation3 + $0x10] sm:$0xff] %vm3379, %v3192
    %3383 = vst.msk [vmem:[#allocation3 + $0x18] sm:$0xff] %vm3379, %v3194
    %3384 = vst.msk [vmem:[#allocation3 + $0x20] sm:$0xff] %vm3379, %v3196
    %3385 = vst.msk [vmem:[#allocation3 + $0x28] sm:$0xff] %vm3379, %v3198
    %3386 = vst.msk [vmem:[#allocation3 + $0x30] sm:$0xff] %vm3379, %v3200
    %3387 = vst.msk [vmem:[#allocation3 + $0x38] sm:$0xff] %vm3379, %v3202
    %3388 = vst.msk [vmem:[#allocation3 + $0x40] sm:$0xff] %vm3379, %v3204
    %3389 = vst.msk [vmem:[#allocation3 + $0x48] sm:$0xff] %vm3379, %v3206
    %3390 = vst.msk [vmem:[#allocation3 + $0x50] sm:$0xff] %vm3379, %v3208
    %3391 = vst.msk [vmem:[#allocation3 + $0x58] sm:$0xff] %vm3379, %v3210
    %3392 = vst.msk [vmem:[#allocation3 + $0x60] sm:$0xff] %vm3379, %v3212
    %3393 = vst.msk [vmem:[#allocation3 + $0x68] sm:$0xff] %vm3379, %v3214
    %3394 = vst.msk [vmem:[#allocation3 + $0x70] sm:$0xff] %vm3379, %v3216
    %3395 = vst.msk [vmem:[#allocation3 + $0x78] sm:$0xff] %vm3379, %v3218
    %3396 = vst.msk [vmem:[#allocation3 + $0x80] sm:$0xff] %vm3379, %v3220
    %3397 = vst.msk [vmem:[#allocation3 + $0x88] sm:$0xff] %vm3379, %v3222
    %3398 = vst.msk [vmem:[#allocation3 + $0x90] sm:$0xff] %vm3379, %v3224
    %3399 = vst.msk [vmem:[#allocation3 + $0x98] sm:$0xff] %vm3379, %v3226
    %3400 = vst.msk [vmem:[#allocation3 + $0xa0] sm:$0xff] %vm3379, %v3228
    %3401 = vst.msk [vmem:[#allocation3 + $0xa8] sm:$0xff] %vm3379, %v3230
    %3402 = vst.msk [vmem:[#allocation3 + $0xb0] sm:$0xff] %vm3379, %v3232
    %3403 = vst.msk [vmem:[#allocation3 + $0xb8] sm:$0xff] %vm3379, %v3234
    %3404 = vst.msk [vmem:[#allocation3 + $0xc0] sm:$0xff] %vm3379, %v3236
    %3405 = vst.msk [vmem:[#allocation3 + $0xc8] sm:$0xff] %vm3379, %v3238
    %3406 = vst.msk [vmem:[#allocation3 + $0xd0] sm:$0xff] %vm3379, %v3240
    %3407 = vst.msk [vmem:[#allocation3 + $0xd8] sm:$0xff] %vm3379, %v3242
    %3408 = vst.msk [vmem:[#allocation3 + $0xe0] sm:$0xff] %vm3379, %v3244
    %3409 = vst.msk [vmem:[#allocation3 + $0xe8] sm:$0xff] %vm3379, %v3246
    %3410 = vst.msk [vmem:[#allocation3 + $0xf0] sm:$0xff] %vm3379, %v3248
    %3411 = vst.msk [vmem:[#allocation3 + $0xf8] sm:$0xff] %vm3379, %v3250
    %3412 = vst.msk [vmem:[#allocation3 + $0x100] sm:$0xff] %vm3379, %v3252
    %3413 = vst.msk [vmem:[#allocation3 + $0x108] sm:$0xff] %vm3379, %v3254
    %3414 = vst.msk [vmem:[#allocation3 + $0x110] sm:$0xff] %vm3379, %v3256
    %3415 = vst.msk [vmem:[#allocation3 + $0x118] sm:$0xff] %vm3379, %v3258
    %3416 = vst.msk [vmem:[#allocation3 + $0x120] sm:$0xff] %vm3379, %v3260
    %3417 = vst.msk [vmem:[#allocation3 + $0x128] sm:$0xff] %vm3379, %v3262
    %3418 = vst.msk [vmem:[#allocation3 + $0x130] sm:$0xff] %vm3379, %v3264
    %3419 = vst.msk [vmem:[#allocation3 + $0x138] sm:$0xff] %vm3379, %v3266
    %3420 = vst.msk [vmem:[#allocation3 + $0x140] sm:$0xff] %vm3379, %v3268
    %3421 = vst.msk [vmem:[#allocation3 + $0x148] sm:$0xff] %vm3379, %v3270
    %3422 = vst.msk [vmem:[#allocation3 + $0x150] sm:$0xff] %vm3379, %v3272
    %3423 = vst.msk [vmem:[#allocation3 + $0x158] sm:$0xff] %vm3379, %v3274
    %3424 = vst.msk [vmem:[#allocation3 + $0x160] sm:$0xff] %vm3379, %v3276
    %3425 = vst.msk [vmem:[#allocation3 + $0x168] sm:$0xff] %vm3379, %v3278
    %3426 = vst.msk [vmem:[#allocation3 + $0x170] sm:$0xff] %vm3379, %v3280
    %3427 = vst.msk [vmem:[#allocation3 + $0x178] sm:$0xff] %vm3379, %v3282
    %3428 = vst.msk [vmem:[#allocation3 + $0x180] sm:$0xff] %vm3379, %v3284
    %3429 = vst.msk [vmem:[#allocation3 + $0x188] sm:$0xff] %vm3379, %v3286
    %3430 = vst.msk [vmem:[#allocation3 + $0x190] sm:$0xff] %vm3379, %v3288
    %3431 = vst.msk [vmem:[#allocation3 + $0x198] sm:$0xff] %vm3379, %v3290
    %3432 = vst.msk [vmem:[#allocation3 + $0x1a0] sm:$0xff] %vm3379, %v3292
    %3433 = vst.msk [vmem:[#allocation3 + $0x1a8] sm:$0xff] %vm3379, %v3294
    %3434 = vst.msk [vmem:[#allocation3 + $0x1b0] sm:$0xff] %vm3379, %v3296
    %3435 = vst.msk [vmem:[#allocation3 + $0x1b8] sm:$0xff] %vm3379, %v3298
    %3436 = vst.msk [vmem:[#allocation3 + $0x1c0] sm:$0xff] %vm3379, %v3300
    %3437 = vst.msk [vmem:[#allocation3 + $0x1c8] sm:$0xff] %vm3379, %v3302
    %3438 = vst.msk [vmem:[#allocation3 + $0x1d0] sm:$0xff] %vm3379, %v3304
    %3439 = vst.msk [vmem:[#allocation3 + $0x1d8] sm:$0xff] %vm3379, %v3306
    %3440 = vst.msk [vmem:[#allocation3 + $0x1e0] sm:$0xff] %vm3379, %v3308
    %3441 = vst.msk [vmem:[#allocation3 + $0x1e8] sm:$0xff] %vm3379, %v3310
    %3442 = vst.msk [vmem:[#allocation3 + $0x1f0] sm:$0xff] %vm3379, %v3312
    %3443 = vst.msk [vmem:[#allocation3 + $0x1f8] sm:$0xff] %vm3379, %v3314
    %v3444 = vld [vmem:[#allocation3] sm:$0xff]
    %v3445 = vld [vmem:[#allocation3 + $0x8] sm:$0xff]
    %v3446 = vld [vmem:[#allocation3 + $0x10] sm:$0xff]
    %v3447 = vld [vmem:[#allocation3 + $0x18] sm:$0xff]
    %v3448 = vld [vmem:[#allocation3 + $0x20] sm:$0xff]
    %v3449 = vld [vmem:[#allocation3 + $0x28] sm:$0xff]
    %v3450 = vld [vmem:[#allocation3 + $0x30] sm:$0xff]
    %v3451 = vld [vmem:[#allocation3 + $0x38] sm:$0xff]
    %v3452 = vld [vmem:[#allocation3 + $0x40] sm:$0xff]
    %v3453 = vld [vmem:[#allocation3 + $0x48] sm:$0xff]
    %v3454 = vld [vmem:[#allocation3 + $0x50] sm:$0xff]
    %v3455 = vld [vmem:[#allocation3 + $0x58] sm:$0xff]
    %v3456 = vld [vmem:[#allocation3 + $0x60] sm:$0xff]
    %v3457 = vld [vmem:[#allocation3 + $0x68] sm:$0xff]
    %v3458 = vld [vmem:[#allocation3 + $0x70] sm:$0xff]
    %v3459 = vld [vmem:[#allocation3 + $0x78] sm:$0xff]
    %v3460 = vld [vmem:[#allocation3 + $0x80] sm:$0xff]
    %v3461 = vld [vmem:[#allocation3 + $0x88] sm:$0xff]
    %v3462 = vld [vmem:[#allocation3 + $0x90] sm:$0xff]
    %v3463 = vld [vmem:[#allocation3 + $0x98] sm:$0xff]
    %v3464 = vld [vmem:[#allocation3 + $0xa0] sm:$0xff]
    %v3465 = vld [vmem:[#allocation3 + $0xa8] sm:$0xff]
    %v3466 = vld [vmem:[#allocation3 + $0xb0] sm:$0xff]
    %v3467 = vld [vmem:[#allocation3 + $0xb8] sm:$0xff]
    %v3468 = vld [vmem:[#allocation3 + $0xc0] sm:$0xff]
    %v3469 = vld [vmem:[#allocation3 + $0xc8] sm:$0xff]
    %v3470 = vld [vmem:[#allocation3 + $0xd0] sm:$0xff]
    %v3471 = vld [vmem:[#allocation3 + $0xd8] sm:$0xff]
    %v3472 = vld [vmem:[#allocation3 + $0xe0] sm:$0xff]
    %v3473 = vld [vmem:[#allocation3 + $0xe8] sm:$0xff]
    %v3474 = vld [vmem:[#allocation3 + $0xf0] sm:$0xff]
    %v3475 = vld [vmem:[#allocation3 + $0xf8] sm:$0xff]
    %v3476 = vld [vmem:[#allocation3 + $0x100] sm:$0xff]
    %v3477 = vld [vmem:[#allocation3 + $0x108] sm:$0xff]
    %v3478 = vld [vmem:[#allocation3 + $0x110] sm:$0xff]
    %v3479 = vld [vmem:[#allocation3 + $0x118] sm:$0xff]
    %v3480 = vld [vmem:[#allocation3 + $0x120] sm:$0xff]
    %v3481 = vld [vmem:[#allocation3 + $0x128] sm:$0xff]
    %v3482 = vld [vmem:[#allocation3 + $0x130] sm:$0xff]
    %v3483 = vld [vmem:[#allocation3 + $0x138] sm:$0xff]
    %v3484 = vld [vmem:[#allocation3 + $0x140] sm:$0xff]
    %v3485 = vld [vmem:[#allocation3 + $0x148] sm:$0xff]
    %v3486 = vld [vmem:[#allocation3 + $0x150] sm:$0xff]
    %v3487 = vld [vmem:[#allocation3 + $0x158] sm:$0xff]
    %v3488 = vld [vmem:[#allocation3 + $0x160] sm:$0xff]
    %v3489 = vld [vmem:[#allocation3 + $0x168] sm:$0xff]
    %v3490 = vld [vmem:[#allocation3 + $0x170] sm:$0xff]
    %v3491 = vld [vmem:[#allocation3 + $0x178] sm:$0xff]
    %v3492 = vld [vmem:[#allocation3 + $0x180] sm:$0xff]
    %v3493 = vld [vmem:[#allocation3 + $0x188] sm:$0xff]
    %v3494 = vld [vmem:[#allocation3 + $0x190] sm:$0xff]
    %v3495 = vld [vmem:[#allocation3 + $0x198] sm:$0xff]
    %v3496 = vld [vmem:[#allocation3 + $0x1a0] sm:$0xff]
    %v3497 = vld [vmem:[#allocation3 + $0x1a8] sm:$0xff]
    %v3498 = vld [vmem:[#allocation3 + $0x1b0] sm:$0xff]
    %v3499 = vld [vmem:[#allocation3 + $0x1b8] sm:$0xff]
    %v3500 = vld [vmem:[#allocation3 + $0x1c0] sm:$0xff]
    %v3501 = vld [vmem:[#allocation3 + $0x1c8] sm:$0xff]
    %v3502 = vld [vmem:[#allocation3 + $0x1d0] sm:$0xff]
    %v3503 = vld [vmem:[#allocation3 + $0x1d8] sm:$0xff]
    %v3504 = vld [vmem:[#allocation3 + $0x1e0] sm:$0xff]
    %v3505 = vld [vmem:[#allocation3 + $0x1e8] sm:$0xff]
    %v3506 = vld [vmem:[#allocation3 + $0x1f0] sm:$0xff]
    %v3507 = vld [vmem:[#allocation3 + $0x1f8] sm:$0xff]
    %v3508 = vld [vmem:[%s1] sm:$0xff]
    %v3509 = vld [vmem:[%s1 + $0x8] sm:$0xff]
    %v3510 = vld [vmem:[%s1 + $0x10] sm:$0xff]
    %v3511 = vld [vmem:[%s1 + $0x18] sm:$0xff]
    %v3512 = vld [vmem:[%s1 + $0x20] sm:$0xf]
    %v3513 = vld [vmem:[%s2] sm:$0x1]
    %v3515 = vperm.slane %v3513, 0
    %vm3517 = vcmask 293888
    %v3519 = vsel %vm3517, %v3444, 0
    %v3522 = vsel %vm3517, %v3445, 0
    %v3525 = vsel %vm3517, %v3446, 0
    %v3528 = vsel %vm3517, %v3447, 0
    %v3531 = vsel %vm3517, %v3448, 0
    %v3534 = vsel %vm3517, %v3449, 0
    %v3537 = vsel %vm3517, %v3450, 0
    %v3540 = vsel %vm3517, %v3451, 0
    %v3543 = vsel %vm3517, %v3452, 0
    %v3546 = vsel %vm3517, %v3453, 0
    %v3549 = vsel %vm3517, %v3454, 0
    %v3552 = vsel %vm3517, %v3455, 0
    %v3555 = vsel %vm3517, %v3456, 0
    %v3558 = vsel %vm3517, %v3457, 0
    %v3561 = vsel %vm3517, %v3458, 0
    %v3564 = vsel %vm3517, %v3459, 0
    %v3567 = vsel %vm3517, %v3460, 0
    %v3570 = vsel %vm3517, %v3461, 0
    %v3573 = vsel %vm3517, %v3462, 0
    %v3576 = vsel %vm3517, %v3463, 0
    %v3579 = vsel %vm3517, %v3464, 0
    %v3582 = vsel %vm3517, %v3465, 0
    %v3585 = vsel %vm3517, %v3466, 0
    %v3588 = vsel %vm3517, %v3467, 0
    %v3591 = vsel %vm3517, %v3468, 0
    %v3594 = vsel %vm3517, %v3469, 0
    %v3597 = vsel %vm3517, %v3470, 0
    %v3600 = vsel %vm3517, %v3471, 0
    %v3603 = vsel %vm3517, %v3472, 0
    %v3606 = vsel %vm3517, %v3473, 0
    %v3609 = vsel %vm3517, %v3474, 0
    %v3612 = vsel %vm3517, %v3475, 0
    %v3615 = vsel %vm3517, %v3476, 0
    %v3618 = vsel %vm3517, %v3477, 0
    %v3621 = vsel %vm3517, %v3478, 0
    %v3624 = vsel %vm3517, %v3479, 0
    %v3627 = vsel %vm3517, %v3480, 0
    %v3630 = vsel %vm3517, %v3481, 0
    %v3633 = vsel %vm3517, %v3482, 0
    %v3636 = vsel %vm3517, %v3483, 0
    %v3639 = vsel %vm3517, %v3484, 0
    %v3642 = vsel %vm3517, %v3485, 0
    %v3645 = vsel %vm3517, %v3486, 0
    %v3648 = vsel %vm3517, %v3487, 0
    %v3651 = vsel %vm3517, %v3488, 0
    %v3654 = vsel %vm3517, %v3489, 0
    %v3657 = vsel %vm3517, %v3490, 0
    %v3660 = vsel %vm3517, %v3491, 0
    %v3663 = vsel %vm3517, %v3492, 0
    %v3666 = vsel %vm3517, %v3493, 0
    %v3669 = vsel %vm3517, %v3494, 0
    %v3672 = vsel %vm3517, %v3495, 0
    %v3675 = vsel %vm3517, %v3496, 0
    %v3678 = vsel %vm3517, %v3497, 0
    %v3681 = vsel %vm3517, %v3498, 0
    %v3684 = vsel %vm3517, %v3499, 0
    %v3687 = vsel %vm3517, %v3500, 0
    %v3690 = vsel %vm3517, %v3501, 0
    %v3693 = vsel %vm3517, %v3502, 0
    %v3696 = vsel %vm3517, %v3503, 0
    %v3699 = vsel %vm3517, %v3504, 0
    %v3702 = vsel %vm3517, %v3505, 0
    %v3705 = vsel %vm3517, %v3506, 0
    %v3708 = vsel %vm3517, %v3507, 0
    %vm3710 = vcmask 1043456
    %v3712 = vsel %vm3710, %v3512, 0
    %3714 = vmatpush.msra.mxu0 0.0
    %3715 = vmatpush.msra.mxu0 0.0
    %3716 = vmatpush.msra.mxu0 0.0
    %3717 = vmatpush.msra.mxu0 0.0
    %3718 = vmatpush.msra.mxu0 0.0
    %3719 = vmatpush.msra.mxu0 0.0
    %3720 = vmatpush.msra.mxu0 0.0
    %3721 = vmatpush.msra.mxu0 0.0
    %3722 = vmatpush.msra.mxu0 0.0
    %3723 = vmatpush.msra.mxu0 0.0
    %3724 = vmatpush.msra.mxu0 0.0
    %3725 = vmatpush.msra.mxu0 %v3712
    %3726 = vmatpush.msra.mxu0 %v3511
    %3727 = vmatpush.msra.mxu0 %v3510
    %3728 = vmatpush.msra.mxu0 %v3509
    %3729 = vmatpush.msra.mxu0 %v3508
    %3730 = vmatmul.f32.gmra.mxu0 %v3519
    %v3731 = vpop.f32.mrf.mxu0
    %v3732 = vadd.f32 %v3515, %v3731
    %3733 = vmatmul.f32.gmra.mxu0 %v3522
    %v3734 = vpop.f32.mrf.mxu0
    %v3735 = vadd.f32 %v3515, %v3734
    %3736 = vmatmul.f32.gmra.mxu0 %v3525
    %v3737 = vpop.f32.mrf.mxu0
    %v3738 = vadd.f32 %v3515, %v3737
    %3739 = vmatmul.f32.gmra.mxu0 %v3528
    %v3740 = vpop.f32.mrf.mxu0
    %v3741 = vadd.f32 %v3515, %v3740
    %3742 = vmatmul.f32.gmra.mxu0 %v3531
    %v3743 = vpop.f32.mrf.mxu0
    %v3744 = vadd.f32 %v3515, %v3743
    %3745 = vmatmul.f32.gmra.mxu0 %v3534
    %v3746 = vpop.f32.mrf.mxu0
    %v3747 = vadd.f32 %v3515, %v3746
    %3748 = vmatmul.f32.gmra.mxu0 %v3537
    %v3749 = vpop.f32.mrf.mxu0
    %v3750 = vadd.f32 %v3515, %v3749
    %3751 = vmatmul.f32.gmra.mxu0 %v3540
    %v3752 = vpop.f32.mrf.mxu0
    %v3753 = vadd.f32 %v3515, %v3752
    %3754 = vmatmul.f32.gmra.mxu0 %v3543
    %v3755 = vpop.f32.mrf.mxu0
    %v3756 = vadd.f32 %v3515, %v3755
    %3757 = vmatmul.f32.gmra.mxu0 %v3546
    %v3758 = vpop.f32.mrf.mxu0
    %v3759 = vadd.f32 %v3515, %v3758
    %3760 = vmatmul.f32.gmra.mxu0 %v3549
    %v3761 = vpop.f32.mrf.mxu0
    %v3762 = vadd.f32 %v3515, %v3761
    %3763 = vmatmul.f32.gmra.mxu0 %v3552
    %v3764 = vpop.f32.mrf.mxu0
    %v3765 = vadd.f32 %v3515, %v3764
    %3766 = vmatmul.f32.gmra.mxu0 %v3555
    %v3767 = vpop.f32.mrf.mxu0
    %v3768 = vadd.f32 %v3515, %v3767
    %3769 = vmatmul.f32.gmra.mxu0 %v3558
    %v3770 = vpop.f32.mrf.mxu0
    %v3771 = vadd.f32 %v3515, %v3770
    %3772 = vmatmul.f32.gmra.mxu0 %v3561
    %v3773 = vpop.f32.mrf.mxu0
    %v3774 = vadd.f32 %v3515, %v3773
    %3775 = vmatmul.f32.gmra.mxu0 %v3564
    %v3776 = vpop.f32.mrf.mxu0
    %v3777 = vadd.f32 %v3515, %v3776
    %3778 = vmatmul.f32.gmra.mxu0 %v3567
    %v3779 = vpop.f32.mrf.mxu0
    %v3780 = vadd.f32 %v3515, %v3779
    %3781 = vmatmul.f32.gmra.mxu0 %v3570
    %v3782 = vpop.f32.mrf.mxu0
    %v3783 = vadd.f32 %v3515, %v3782
    %3784 = vmatmul.f32.gmra.mxu0 %v3573
    %v3785 = vpop.f32.mrf.mxu0
    %v3786 = vadd.f32 %v3515, %v3785
    %3787 = vmatmul.f32.gmra.mxu0 %v3576
    %v3788 = vpop.f32.mrf.mxu0
    %v3789 = vadd.f32 %v3515, %v3788
    %3790 = vmatmul.f32.gmra.mxu0 %v3579
    %v3791 = vpop.f32.mrf.mxu0
    %v3792 = vadd.f32 %v3515, %v3791
    %3793 = vmatmul.f32.gmra.mxu0 %v3582
    %v3794 = vpop.f32.mrf.mxu0
    %v3795 = vadd.f32 %v3515, %v3794
    %3796 = vmatmul.f32.gmra.mxu0 %v3585
    %v3797 = vpop.f32.mrf.mxu0
    %v3798 = vadd.f32 %v3515, %v3797
    %3799 = vmatmul.f32.gmra.mxu0 %v3588
    %v3800 = vpop.f32.mrf.mxu0
    %v3801 = vadd.f32 %v3515, %v3800
    %3802 = vmatmul.f32.gmra.mxu0 %v3591
    %v3803 = vpop.f32.mrf.mxu0
    %v3804 = vadd.f32 %v3515, %v3803
    %3805 = vmatmul.f32.gmra.mxu0 %v3594
    %v3806 = vpop.f32.mrf.mxu0
    %v3807 = vadd.f32 %v3515, %v3806
    %3808 = vmatmul.f32.gmra.mxu0 %v3597
    %v3809 = vpop.f32.mrf.mxu0
    %v3810 = vadd.f32 %v3515, %v3809
    %3811 = vmatmul.f32.gmra.mxu0 %v3600
    %v3812 = vpop.f32.mrf.mxu0
    %v3813 = vadd.f32 %v3515, %v3812
    %3814 = vmatmul.f32.gmra.mxu0 %v3603
    %v3815 = vpop.f32.mrf.mxu0
    %v3816 = vadd.f32 %v3515, %v3815
    %3817 = vmatmul.f32.gmra.mxu0 %v3606
    %v3818 = vpop.f32.mrf.mxu0
    %v3819 = vadd.f32 %v3515, %v3818
    %3820 = vmatmul.f32.gmra.mxu0 %v3609
    %v3821 = vpop.f32.mrf.mxu0
    %v3822 = vadd.f32 %v3515, %v3821
    %3823 = vmatmul.f32.gmra.mxu0 %v3612
    %v3824 = vpop.f32.mrf.mxu0
    %v3825 = vadd.f32 %v3515, %v3824
    %3826 = vmatmul.f32.gmra.mxu0 %v3615
    %v3827 = vpop.f32.mrf.mxu0
    %v3828 = vadd.f32 %v3515, %v3827
    %3829 = vmatmul.f32.gmra.mxu0 %v3618
    %v3830 = vpop.f32.mrf.mxu0
    %v3831 = vadd.f32 %v3515, %v3830
    %3832 = vmatmul.f32.gmra.mxu0 %v3621
    %v3833 = vpop.f32.mrf.mxu0
    %v3834 = vadd.f32 %v3515, %v3833
    %3835 = vmatmul.f32.gmra.mxu0 %v3624
    %v3836 = vpop.f32.mrf.mxu0
    %v3837 = vadd.f32 %v3515, %v3836
    %3838 = vmatmul.f32.gmra.mxu0 %v3627
    %v3839 = vpop.f32.mrf.mxu0
    %v3840 = vadd.f32 %v3515, %v3839
    %3841 = vmatmul.f32.gmra.mxu0 %v3630
    %v3842 = vpop.f32.mrf.mxu0
    %v3843 = vadd.f32 %v3515, %v3842
    %3844 = vmatmul.f32.gmra.mxu0 %v3633
    %v3845 = vpop.f32.mrf.mxu0
    %v3846 = vadd.f32 %v3515, %v3845
    %3847 = vmatmul.f32.gmra.mxu0 %v3636
    %v3848 = vpop.f32.mrf.mxu0
    %v3849 = vadd.f32 %v3515, %v3848
    %3850 = vmatmul.f32.gmra.mxu0 %v3639
    %v3851 = vpop.f32.mrf.mxu0
    %v3852 = vadd.f32 %v3515, %v3851
    %3853 = vmatmul.f32.gmra.mxu0 %v3642
    %v3854 = vpop.f32.mrf.mxu0
    %v3855 = vadd.f32 %v3515, %v3854
    %3856 = vmatmul.f32.gmra.mxu0 %v3645
    %v3857 = vpop.f32.mrf.mxu0
    %v3858 = vadd.f32 %v3515, %v3857
    %3859 = vmatmul.f32.gmra.mxu0 %v3648
    %v3860 = vpop.f32.mrf.mxu0
    %v3861 = vadd.f32 %v3515, %v3860
    %3862 = vmatmul.f32.gmra.mxu0 %v3651
    %v3863 = vpop.f32.mrf.mxu0
    %v3864 = vadd.f32 %v3515, %v3863
    %3865 = vmatmul.f32.gmra.mxu0 %v3654
    %v3866 = vpop.f32.mrf.mxu0
    %v3867 = vadd.f32 %v3515, %v3866
    %3868 = vmatmul.f32.gmra.mxu0 %v3657
    %v3869 = vpop.f32.mrf.mxu0
    %v3870 = vadd.f32 %v3515, %v3869
    %3871 = vmatmul.f32.gmra.mxu0 %v3660
    %v3872 = vpop.f32.mrf.mxu0
    %v3873 = vadd.f32 %v3515, %v3872
    %3874 = vmatmul.f32.gmra.mxu0 %v3663
    %v3875 = vpop.f32.mrf.mxu0
    %v3876 = vadd.f32 %v3515, %v3875
    %3877 = vmatmul.f32.gmra.mxu0 %v3666
    %v3878 = vpop.f32.mrf.mxu0
    %v3879 = vadd.f32 %v3515, %v3878
    %3880 = vmatmul.f32.gmra.mxu0 %v3669
    %v3881 = vpop.f32.mrf.mxu0
    %v3882 = vadd.f32 %v3515, %v3881
    %3883 = vmatmul.f32.gmra.mxu0 %v3672
    %v3884 = vpop.f32.mrf.mxu0
    %v3885 = vadd.f32 %v3515, %v3884
    %3886 = vmatmul.f32.gmra.mxu0 %v3675
    %v3887 = vpop.f32.mrf.mxu0
    %v3888 = vadd.f32 %v3515, %v3887
    %3889 = vmatmul.f32.gmra.mxu0 %v3678
    %v3890 = vpop.f32.mrf.mxu0
    %v3891 = vadd.f32 %v3515, %v3890
    %3892 = vmatmul.f32.gmra.mxu0 %v3681
    %v3893 = vpop.f32.mrf.mxu0
    %v3894 = vadd.f32 %v3515, %v3893
    %3895 = vmatmul.f32.gmra.mxu0 %v3684
    %v3896 = vpop.f32.mrf.mxu0
    %v3897 = vadd.f32 %v3515, %v3896
    %3898 = vmatmul.f32.gmra.mxu0 %v3687
    %v3899 = vpop.f32.mrf.mxu0
    %v3900 = vadd.f32 %v3515, %v3899
    %3901 = vmatmul.f32.gmra.mxu0 %v3690
    %v3902 = vpop.f32.mrf.mxu0
    %v3903 = vadd.f32 %v3515, %v3902
    %3904 = vmatmul.f32.gmra.mxu0 %v3693
    %v3905 = vpop.f32.mrf.mxu0
    %v3906 = vadd.f32 %v3515, %v3905
    %3907 = vmatmul.f32.gmra.mxu0 %v3696
    %v3908 = vpop.f32.mrf.mxu0
    %v3909 = vadd.f32 %v3515, %v3908
    %3910 = vmatmul.f32.gmra.mxu0 %v3699
    %v3911 = vpop.f32.mrf.mxu0
    %v3912 = vadd.f32 %v3515, %v3911
    %3913 = vmatmul.f32.gmra.mxu0 %v3702
    %v3914 = vpop.f32.mrf.mxu0
    %v3915 = vadd.f32 %v3515, %v3914
    %3916 = vmatmul.f32.gmra.mxu0 %v3705
    %v3917 = vpop.f32.mrf.mxu0
    %v3918 = vadd.f32 %v3515, %v3917
    %3919 = vmatmul.f32.gmra.mxu0 %v3708
    %v3920 = vpop.f32.mrf.mxu0
    %v3921 = vadd.f32 %v3515, %v3920
    %3922 = vdwg.mxu0
    %vm3923 = vcmask 64512
    %v3924 = vsel %vm3923, %v3732, 0.0
    %v3925 = vsel %vm3923, %v3735, 0.0
    %v3926 = vadd.f32 %v3924, %v3925
    %v3927 = vsel %vm3923, %v3738, 0.0
    %v3928 = vadd.f32 %v3926, %v3927
    %v3929 = vsel %vm3923, %v3741, 0.0
    %v3930 = vadd.f32 %v3928, %v3929
    %v3931 = vsel %vm3923, %v3744, 0.0
    %v3932 = vadd.f32 %v3930, %v3931
    %v3933 = vsel %vm3923, %v3747, 0.0
    %v3934 = vadd.f32 %v3932, %v3933
    %v3935 = vsel %vm3923, %v3750, 0.0
    %v3936 = vadd.f32 %v3934, %v3935
    %v3937 = vsel %vm3923, %v3753, 0.0
    %v3938 = vadd.f32 %v3936, %v3937
    %v3939 = vsel %vm3923, %v3756, 0.0
    %v3940 = vadd.f32 %v3938, %v3939
    %v3941 = vsel %vm3923, %v3759, 0.0
    %v3942 = vadd.f32 %v3940, %v3941
    %v3943 = vsel %vm3923, %v3762, 0.0
    %v3944 = vadd.f32 %v3942, %v3943
    %v3945 = vsel %vm3923, %v3765, 0.0
    %v3946 = vadd.f32 %v3944, %v3945
    %v3947 = vsel %vm3923, %v3768, 0.0
    %v3948 = vadd.f32 %v3946, %v3947
    %v3949 = vsel %vm3923, %v3771, 0.0
    %v3950 = vadd.f32 %v3948, %v3949
    %v3951 = vsel %vm3923, %v3774, 0.0
    %v3952 = vadd.f32 %v3950, %v3951
    %v3953 = vsel %vm3923, %v3777, 0.0
    %v3954 = vadd.f32 %v3952, %v3953
    %v3955 = vsel %vm3923, %v3780, 0.0
    %v3956 = vadd.f32 %v3954, %v3955
    %v3957 = vsel %vm3923, %v3783, 0.0
    %v3958 = vadd.f32 %v3956, %v3957
    %v3959 = vsel %vm3923, %v3786, 0.0
    %v3960 = vadd.f32 %v3958, %v3959
    %v3961 = vsel %vm3923, %v3789, 0.0
    %v3962 = vadd.f32 %v3960, %v3961
    %v3963 = vsel %vm3923, %v3792, 0.0
    %v3964 = vadd.f32 %v3962, %v3963
    %v3965 = vsel %vm3923, %v3795, 0.0
    %v3966 = vadd.f32 %v3964, %v3965
    %v3967 = vsel %vm3923, %v3798, 0.0
    %v3968 = vadd.f32 %v3966, %v3967
    %v3969 = vsel %vm3923, %v3801, 0.0
    %v3970 = vadd.f32 %v3968, %v3969
    %v3971 = vsel %vm3923, %v3804, 0.0
    %v3972 = vadd.f32 %v3970, %v3971
    %v3973 = vsel %vm3923, %v3807, 0.0
    %v3974 = vadd.f32 %v3972, %v3973
    %v3975 = vsel %vm3923, %v3810, 0.0
    %v3976 = vadd.f32 %v3974, %v3975
    %v3977 = vsel %vm3923, %v3813, 0.0
    %v3978 = vadd.f32 %v3976, %v3977
    %v3979 = vsel %vm3923, %v3816, 0.0
    %v3980 = vadd.f32 %v3978, %v3979
    %v3981 = vsel %vm3923, %v3819, 0.0
    %v3982 = vadd.f32 %v3980, %v3981
    %v3983 = vsel %vm3923, %v3822, 0.0
    %v3984 = vadd.f32 %v3982, %v3983
    %v3985 = vsel %vm3923, %v3825, 0.0
    %v3986 = vadd.f32 %v3984, %v3985
    %v3987 = vsel %vm3923, %v3828, 0.0
    %v3988 = vadd.f32 %v3986, %v3987
    %v3989 = vsel %vm3923, %v3831, 0.0
    %v3990 = vadd.f32 %v3988, %v3989
    %v3991 = vsel %vm3923, %v3834, 0.0
    %v3992 = vadd.f32 %v3990, %v3991
    %v3993 = vsel %vm3923, %v3837, 0.0
    %v3994 = vadd.f32 %v3992, %v3993
    %v3995 = vsel %vm3923, %v3840, 0.0
    %v3996 = vadd.f32 %v3994, %v3995
    %v3997 = vsel %vm3923, %v3843, 0.0
    %v3998 = vadd.f32 %v3996, %v3997
    %v3999 = vsel %vm3923, %v3846, 0.0
    %v4000 = vadd.f32 %v3998, %v3999
    %v4001 = vsel %vm3923, %v3849, 0.0
    %v4002 = vadd.f32 %v4000, %v4001
    %v4003 = vsel %vm3923, %v3852, 0.0
    %v4004 = vadd.f32 %v4002, %v4003
    %v4005 = vsel %vm3923, %v3855, 0.0
    %v4006 = vadd.f32 %v4004, %v4005
    %v4007 = vsel %vm3923, %v3858, 0.0
    %v4008 = vadd.f32 %v4006, %v4007
    %v4009 = vsel %vm3923, %v3861, 0.0
    %v4010 = vadd.f32 %v4008, %v4009
    %v4011 = vsel %vm3923, %v3864, 0.0
    %v4012 = vadd.f32 %v4010, %v4011
    %v4013 = vsel %vm3923, %v3867, 0.0
    %v4014 = vadd.f32 %v4012, %v4013
    %v4015 = vsel %vm3923, %v3870, 0.0
    %v4016 = vadd.f32 %v4014, %v4015
    %v4017 = vsel %vm3923, %v3873, 0.0
    %v4018 = vadd.f32 %v4016, %v4017
    %v4019 = vsel %vm3923, %v3876, 0.0
    %v4020 = vadd.f32 %v4018, %v4019
    %v4021 = vsel %vm3923, %v3879, 0.0
    %v4022 = vadd.f32 %v4020, %v4021
    %v4023 = vsel %vm3923, %v3882, 0.0
    %v4024 = vadd.f32 %v4022, %v4023
    %v4025 = vsel %vm3923, %v3885, 0.0
    %v4026 = vadd.f32 %v4024, %v4025
    %v4027 = vsel %vm3923, %v3888, 0.0
    %v4028 = vadd.f32 %v4026, %v4027
    %v4029 = vsel %vm3923, %v3891, 0.0
    %v4030 = vadd.f32 %v4028, %v4029
    %v4031 = vsel %vm3923, %v3894, 0.0
    %v4032 = vadd.f32 %v4030, %v4031
    %v4033 = vsel %vm3923, %v3897, 0.0
    %v4034 = vadd.f32 %v4032, %v4033
    %v4035 = vsel %vm3923, %v3900, 0.0
    %v4036 = vadd.f32 %v4034, %v4035
    %v4037 = vsel %vm3923, %v3903, 0.0
    %v4038 = vadd.f32 %v4036, %v4037
    %v4039 = vsel %vm3923, %v3906, 0.0
    %v4040 = vadd.f32 %v4038, %v4039
    %v4041 = vsel %vm3923, %v3909, 0.0
    %v4042 = vadd.f32 %v4040, %v4041
    %v4043 = vsel %vm3923, %v3912, 0.0
    %v4044 = vadd.f32 %v4042, %v4043
    %v4045 = vsel %vm3923, %v3915, 0.0
    %v4046 = vadd.f32 %v4044, %v4045
    %v4047 = vsel %vm3923, %v3918, 0.0
    %v4048 = vadd.f32 %v4046, %v4047
    %v4049 = vsel %vm3923, %v3921, 0.0
    %v4050 = vadd.f32 %v4048, %v4049
    %v4051 = vrot.slane %v4050, 4
    %v4052 = vadd.f32 %v4050, %v4051
    %v4053 = vrot.slane %v4052, 2
    %v4054 = vadd.f32 %v4052, %v4053
    %v4055 = vrot.slane %v4054, 1
    %v4056 = vadd.f32 %v4054, %v4055
    %vm4057 = vcmask 57344
    %4058 = vst.msk [vmem:[#allocation4] sm:$0x1] %vm4057, %v4056
    %v4059 = vmul.f32 %v3732, %v3732
    %v4060 = vmul.f32 %v3735, %v3735
    %v4061 = vmul.f32 %v3738, %v3738
    %v4062 = vmul.f32 %v3741, %v3741
    %v4063 = vmul.f32 %v3744, %v3744
    %v4064 = vmul.f32 %v3747, %v3747
    %v4065 = vmul.f32 %v3750, %v3750
    %v4066 = vmul.f32 %v3753, %v3753
    %v4067 = vmul.f32 %v3756, %v3756
    %v4068 = vmul.f32 %v3759, %v3759
    %v4069 = vmul.f32 %v3762, %v3762
    %v4070 = vmul.f32 %v3765, %v3765
    %v4071 = vmul.f32 %v3768, %v3768
    %v4072 = vmul.f32 %v3771, %v3771
    %v4073 = vmul.f32 %v3774, %v3774
    %v4074 = vmul.f32 %v3777, %v3777
    %v4075 = vmul.f32 %v3780, %v3780
    %v4076 = vmul.f32 %v3783, %v3783
    %v4077 = vmul.f32 %v3786, %v3786
    %v4078 = vmul.f32 %v3789, %v3789
    %v4079 = vmul.f32 %v3792, %v3792
    %v4080 = vmul.f32 %v3795, %v3795
    %v4081 = vmul.f32 %v3798, %v3798
    %v4082 = vmul.f32 %v3801, %v3801
    %v4083 = vmul.f32 %v3804, %v3804
    %v4084 = vmul.f32 %v3807, %v3807
    %v4085 = vmul.f32 %v3810, %v3810
    %v4086 = vmul.f32 %v3813, %v3813
    %v4087 = vmul.f32 %v3816, %v3816
    %v4088 = vmul.f32 %v3819, %v3819
    %v4089 = vmul.f32 %v3822, %v3822
    %v4090 = vmul.f32 %v3825, %v3825
    %v4091 = vmul.f32 %v3828, %v3828
    %v4092 = vmul.f32 %v3831, %v3831
    %v4093 = vmul.f32 %v3834, %v3834
    %v4094 = vmul.f32 %v3837, %v3837
    %v4095 = vmul.f32 %v3840, %v3840
    %v4096 = vmul.f32 %v3843, %v3843
    %v4097 = vmul.f32 %v3846, %v3846
    %v4098 = vmul.f32 %v3849, %v3849
    %v4099 = vmul.f32 %v3852, %v3852
    %v4100 = vmul.f32 %v3855, %v3855
    %v4101 = vmul.f32 %v3858, %v3858
    %v4102 = vmul.f32 %v3861, %v3861
    %v4103 = vmul.f32 %v3864, %v3864
    %v4104 = vmul.f32 %v3867, %v3867
    %v4105 = vmul.f32 %v3870, %v3870
    %v4106 = vmul.f32 %v3873, %v3873
    %v4107 = vmul.f32 %v3876, %v3876
    %v4108 = vmul.f32 %v3879, %v3879
    %v4109 = vmul.f32 %v3882, %v3882
    %v4110 = vmul.f32 %v3885, %v3885
    %v4111 = vmul.f32 %v3888, %v3888
    %v4112 = vmul.f32 %v3891, %v3891
    %v4113 = vmul.f32 %v3894, %v3894
    %v4114 = vmul.f32 %v3897, %v3897
    %v4115 = vmul.f32 %v3900, %v3900
    %v4116 = vmul.f32 %v3903, %v3903
    %v4117 = vmul.f32 %v3906, %v3906
    %v4118 = vmul.f32 %v3909, %v3909
    %v4119 = vmul.f32 %v3912, %v3912
    %v4120 = vmul.f32 %v3915, %v3915
    %v4121 = vmul.f32 %v3918, %v3918
    %v4122 = vmul.f32 %v3921, %v3921
    %v4123 = vsel %vm3923, %v4059, 0.0
    %v4124 = vsel %vm3923, %v4060, 0.0
    %v4125 = vadd.f32 %v4123, %v4124
    %v4126 = vsel %vm3923, %v4061, 0.0
    %v4127 = vadd.f32 %v4125, %v4126
    %v4128 = vsel %vm3923, %v4062, 0.0
    %v4129 = vadd.f32 %v4127, %v4128
    %v4130 = vsel %vm3923, %v4063, 0.0
    %v4131 = vadd.f32 %v4129, %v4130
    %v4132 = vsel %vm3923, %v4064, 0.0
    %v4133 = vadd.f32 %v4131, %v4132
    %v4134 = vsel %vm3923, %v4065, 0.0
    %v4135 = vadd.f32 %v4133, %v4134
    %v4136 = vsel %vm3923, %v4066, 0.0
    %v4137 = vadd.f32 %v4135, %v4136
    %v4138 = vsel %vm3923, %v4067, 0.0
    %v4139 = vadd.f32 %v4137, %v4138
    %v4140 = vsel %vm3923, %v4068, 0.0
    %v4141 = vadd.f32 %v4139, %v4140
    %v4142 = vsel %vm3923, %v4069, 0.0
    %v4143 = vadd.f32 %v4141, %v4142
    %v4144 = vsel %vm3923, %v4070, 0.0
    %v4145 = vadd.f32 %v4143, %v4144
    %v4146 = vsel %vm3923, %v4071, 0.0
    %v4147 = vadd.f32 %v4145, %v4146
    %v4148 = vsel %vm3923, %v4072, 0.0
    %v4149 = vadd.f32 %v4147, %v4148
    %v4150 = vsel %vm3923, %v4073, 0.0
    %v4151 = vadd.f32 %v4149, %v4150
    %v4152 = vsel %vm3923, %v4074, 0.0
    %v4153 = vadd.f32 %v4151, %v4152
    %v4154 = vsel %vm3923, %v4075, 0.0
    %v4155 = vadd.f32 %v4153, %v4154
    %v4156 = vsel %vm3923, %v4076, 0.0
    %v4157 = vadd.f32 %v4155, %v4156
    %v4158 = vsel %vm3923, %v4077, 0.0
    %v4159 = vadd.f32 %v4157, %v4158
    %v4160 = vsel %vm3923, %v4078, 0.0
    %v4161 = vadd.f32 %v4159, %v4160
    %v4162 = vsel %vm3923, %v4079, 0.0
    %v4163 = vadd.f32 %v4161, %v4162
    %v4164 = vsel %vm3923, %v4080, 0.0
    %v4165 = vadd.f32 %v4163, %v4164
    %v4166 = vsel %vm3923, %v4081, 0.0
    %v4167 = vadd.f32 %v4165, %v4166
    %v4168 = vsel %vm3923, %v4082, 0.0
    %v4169 = vadd.f32 %v4167, %v4168
    %v4170 = vsel %vm3923, %v4083, 0.0
    %v4171 = vadd.f32 %v4169, %v4170
    %v4172 = vsel %vm3923, %v4084, 0.0
    %v4173 = vadd.f32 %v4171, %v4172
    %v4174 = vsel %vm3923, %v4085, 0.0
    %v4175 = vadd.f32 %v4173, %v4174
    %v4176 = vsel %vm3923, %v4086, 0.0
    %v4177 = vadd.f32 %v4175, %v4176
    %v4178 = vsel %vm3923, %v4087, 0.0
    %v4179 = vadd.f32 %v4177, %v4178
    %v4180 = vsel %vm3923, %v4088, 0.0
    %v4181 = vadd.f32 %v4179, %v4180
    %v4182 = vsel %vm3923, %v4089, 0.0
    %v4183 = vadd.f32 %v4181, %v4182
    %v4184 = vsel %vm3923, %v4090, 0.0
    %v4185 = vadd.f32 %v4183, %v4184
    %v4186 = vsel %vm3923, %v4091, 0.0
    %v4187 = vadd.f32 %v4185, %v4186
    %v4188 = vsel %vm3923, %v4092, 0.0
    %v4189 = vadd.f32 %v4187, %v4188
    %v4190 = vsel %vm3923, %v4093, 0.0
    %v4191 = vadd.f32 %v4189, %v4190
    %v4192 = vsel %vm3923, %v4094, 0.0
    %v4193 = vadd.f32 %v4191, %v4192
    %v4194 = vsel %vm3923, %v4095, 0.0
    %v4195 = vadd.f32 %v4193, %v4194
    %v4196 = vsel %vm3923, %v4096, 0.0
    %v4197 = vadd.f32 %v4195, %v4196
    %v4198 = vsel %vm3923, %v4097, 0.0
    %v4199 = vadd.f32 %v4197, %v4198
    %v4200 = vsel %vm3923, %v4098, 0.0
    %v4201 = vadd.f32 %v4199, %v4200
    %v4202 = vsel %vm3923, %v4099, 0.0
    %v4203 = vadd.f32 %v4201, %v4202
    %v4204 = vsel %vm3923, %v4100, 0.0
    %v4205 = vadd.f32 %v4203, %v4204
    %v4206 = vsel %vm3923, %v4101, 0.0
    %v4207 = vadd.f32 %v4205, %v4206
    %v4208 = vsel %vm3923, %v4102, 0.0
    %v4209 = vadd.f32 %v4207, %v4208
    %v4210 = vsel %vm3923, %v4103, 0.0
    %v4211 = vadd.f32 %v4209, %v4210
    %v4212 = vsel %vm3923, %v4104, 0.0
    %v4213 = vadd.f32 %v4211, %v4212
    %v4214 = vsel %vm3923, %v4105, 0.0
    %v4215 = vadd.f32 %v4213, %v4214
    %v4216 = vsel %vm3923, %v4106, 0.0
    %v4217 = vadd.f32 %v4215, %v4216
    %v4218 = vsel %vm3923, %v4107, 0.0
    %v4219 = vadd.f32 %v4217, %v4218
    %v4220 = vsel %vm3923, %v4108, 0.0
    %v4221 = vadd.f32 %v4219, %v4220
    %v4222 = vsel %vm3923, %v4109, 0.0
    %v4223 = vadd.f32 %v4221, %v4222
    %v4224 = vsel %vm3923, %v4110, 0.0
    %v4225 = vadd.f32 %v4223, %v4224
    %v4226 = vsel %vm3923, %v4111, 0.0
    %v4227 = vadd.f32 %v4225, %v4226
    %v4228 = vsel %vm3923, %v4112, 0.0
    %v4229 = vadd.f32 %v4227, %v4228
    %v4230 = vsel %vm3923, %v4113, 0.0
    %v4231 = vadd.f32 %v4229, %v4230
    %v4232 = vsel %vm3923, %v4114, 0.0
    %v4233 = vadd.f32 %v4231, %v4232
    %v4234 = vsel %vm3923, %v4115, 0.0
    %v4235 = vadd.f32 %v4233, %v4234
    %v4236 = vsel %vm3923, %v4116, 0.0
    %v4237 = vadd.f32 %v4235, %v4236
    %v4238 = vsel %vm3923, %v4117, 0.0
    %v4239 = vadd.f32 %v4237, %v4238
    %v4240 = vsel %vm3923, %v4118, 0.0
    %v4241 = vadd.f32 %v4239, %v4240
    %v4242 = vsel %vm3923, %v4119, 0.0
    %v4243 = vadd.f32 %v4241, %v4242
    %v4244 = vsel %vm3923, %v4120, 0.0
    %v4245 = vadd.f32 %v4243, %v4244
    %v4246 = vsel %vm3923, %v4121, 0.0
    %v4247 = vadd.f32 %v4245, %v4246
    %v4248 = vsel %vm3923, %v4122, 0.0
    %v4249 = vadd.f32 %v4247, %v4248
    %v4250 = vrot.slane %v4249, 4
    %v4251 = vadd.f32 %v4249, %v4250
    %v4252 = vrot.slane %v4251, 2
    %v4253 = vadd.f32 %v4251, %v4252
    %v4254 = vrot.slane %v4253, 1
    %v4255 = vadd.f32 %v4253, %v4254
    %4256 = vst.msk [vmem:[#allocation6] sm:$0x1] %vm4057, %v4255
    // Predicated region
    $region14: #{tpu_custom_call.1} parent=1 // pred_check
      _
    $region15: #{tpu_custom_call.1} parent=1 // pred_check_branch
      %4258 = sbr.rel (0) target = $region17
    $region16: #{tpu_custom_call.1} parent=1 // pred_region
      %4260 = vsyncadd [#allocation5], 0
      %s4262 = sshll.u32 [#allocation4], 4
      %s4263 = int_to_ptr.vmem [resolvable:$true] %s4262
      %s4264 = sshll.u32 %s3, 4
      %s4265 = int_to_ptr.hbm [resolvable:$true] %s4264
      %4267 = dma.vmem_to_hbm [thread:$0]  %s4263, 16, %s4265, [#allocation5]
    $region17: #{tpu_custom_call.1} parent=1 // pred_fallthru
      _
    // Predicated region
    $region18: #{tpu_custom_call.1} parent=1 // pred_check
      _
    $region19: #{tpu_custom_call.1} parent=1 // pred_check_branch
      %4269 = sbr.rel (0) target = $region21
    $region20: #{tpu_custom_call.1} parent=1 // pred_region
      %4271 = vsyncadd [#allocation7], 0
      %s4273 = sshll.u32 [#allocation6], 4
      %s4274 = int_to_ptr.vmem [resolvable:$true] %s4273
      %s4275 = sshll.u32 %s4, 4
      %s4276 = int_to_ptr.hbm [resolvable:$true] %s4275
      %4278 = dma.vmem_to_hbm [thread:$0]  %s4274, 16, %s4276, [#allocation7]
    $region21: #{tpu_custom_call.1} parent=1 // pred_fallthru
      _
    // Predicated region
    $region22: #{tpu_custom_call.1} parent=1 // pred_check
      _
    $region23: #{tpu_custom_call.1} parent=1 // pred_check_branch
      %4280 = sbr.rel (0) target = $region25
    $region24: #{tpu_custom_call.1} parent=1 // pred_region
      %4282 = dma.done [#allocation5], 16
    $region25: #{tpu_custom_call.1} parent=1 // pred_fallthru
      _
    // Predicated region
    $region26: #{tpu_custom_call.1} parent=1 // pred_check
      _
    $region27: #{tpu_custom_call.1} parent=1 // pred_check_branch
      %4284 = sbr.rel (0) target = $region29
    $region28: #{tpu_custom_call.1} parent=1 // pred_region
      %4286 = dma.done [#allocation7], 16
    $region29: #{tpu_custom_call.1} parent=1 // pred_fallthru
      _
    %4287 = vsyncpa [#allocation5], 1
    %4288 = vsyncpa [#allocation7], 1

</llo_original>
